<compile_context>
chip_gen: v7x
topology: tpu7x:2x2x1
jax: 0.10.0
libtpu: 0.0.40
codegen_flags: <defaults>
</compile_context>

<pallas_src>
import functools
import numpy as np
import jax
import jax.numpy as jnp
from jax import lax
from jax.experimental import pallas as pl
from jax.experimental.pallas import tpu as pltpu


def _round_up(x, m):
    return ((x + m - 1) // m) * m


# ----------------------------------------------------------------------------- kernel
def make_decoder_kernel(attn_valid):
    def decoder_kernel(featcap_ref, lstm_in_ref, attn_w_ref, attn_b_ref,
                       wih_ref, b_ref, whh_f_ref, whh_b_ref,
                       fc_w_ref, fc_b_ref, out_ref, lstm_scratch):
        B, T, E2 = featcap_ref.shape
        E = lstm_in_ref.shape[2]
        Hp = whh_f_ref.shape[0]            # padded hidden size (multiple of 128)
        A = attn_w_ref.shape[1]            # padded attention dim (128)
        Vp = fc_w_ref.shape[1]             # padded vocab dim (multiple of 128)

        # ---- attention: Linear(2E -> 50, padded to A) + masked softmax -----------
        fc2 = featcap_ref[...].reshape(B * T, E2)                          # (BT, 2E)
        logits = (jnp.dot(fc2, attn_w_ref[...],
                          preferred_element_type=jnp.float32) + attn_b_ref[...])
        logits = logits - jnp.max(logits, axis=-1, keepdims=True)
        lane = lax.broadcasted_iota(jnp.int32, (B * T, A), 1)
        ex = jnp.exp(logits) * (lane < attn_valid).astype(jnp.float32)     # zero pads
        denom = jnp.sum(ex, axis=-1, keepdims=True)
        attn_soft = ex * pl.reciprocal(denom, approx=True)
        attn_wts = attn_soft.reshape(B, T, A)[:, :, :T]                    # (B, T, T)

        # ---- hoisted LSTM input projection: one big matmul, biases folded in -----
        x2 = lstm_in_ref[...].reshape(B * T, E)
        xproj = (jnp.dot(x2, wih_ref[...], preferred_element_type=jnp.float32)
                 + b_ref[...]).reshape(B, T, 8 * Hp)                       # (B,T,8Hp)

        whh_f = whh_f_ref[...]
        whh_b = whh_b_ref[...]

        def lstm_cell(gates, c):
            # every gate slice is a full 128-lane tile (Hp multiple of 128)
            i = jax.nn.sigmoid(gates[:, 0 * Hp:1 * Hp])
            f = jax.nn.sigmoid(gates[:, 1 * Hp:2 * Hp])
            g = jnp.tanh(gates[:, 2 * Hp:3 * Hp])
            o = jax.nn.sigmoid(gates[:, 3 * Hp:4 * Hp])
            c_new = f * c + i * g
            h_new = o * jnp.tanh(c_new)
            return h_new, c_new

        h_f = jnp.zeros((B, Hp), jnp.float32)
        c_f = jnp.zeros((B, Hp), jnp.float32)
        h_b = jnp.zeros((B, Hp), jnp.float32)
        c_b = jnp.zeros((B, Hp), jnp.float32)

        # fused fwd/bwd recurrence, statically unrolled (T small); per-step hidden
        # states go straight into the VMEM scratch (lane-aligned 128-wide stores).
        for t in range(T):
            tb = T - 1 - t
            gates_f = xproj[:, t, 0:4 * Hp] + jnp.dot(
                h_f, whh_f, preferred_element_type=jnp.float32)
            gates_b = xproj[:, tb, 4 * Hp:8 * Hp] + jnp.dot(
                h_b, whh_b, preferred_element_type=jnp.float32)
            h_f, c_f = lstm_cell(gates_f, c_f)
            h_b, c_b = lstm_cell(gates_b, c_b)
            lstm_scratch[:, t, 0:Hp] = h_f
            lstm_scratch[:, tb, Hp:2 * Hp] = h_b

        lstm_out = lstm_scratch[...]                                       # (B,T,2Hp)

        # ---- context = bmm(attn, lstm_out); fc over flattened (B*T) rows ---------
        context = jnp.einsum('bts,bsh->bth', attn_wts, lstm_out,
                             preferred_element_type=jnp.float32)           # (B,T,2Hp)
        feat = jnp.concatenate([context, lstm_out], axis=-1).reshape(B * T, 4 * Hp)
        out = (jnp.dot(feat, fc_w_ref[...],
                       preferred_element_type=jnp.float32) + fc_b_ref[...])
        out_ref[...] = out.reshape(B, T, Vp).astype(out_ref.dtype)

    return decoder_kernel


# ----------------------------------------------------------------------------- padding helpers
def _pad_gate_cols(w, H, Hp):
    """(n, 4H) -> (n, 4Hp): pad each [i,f,g,o] gate block from H to Hp columns."""
    n = w.shape[0]
    w4 = w.reshape(n, 4, H)
    w4 = jnp.pad(w4, ((0, 0), (0, 0), (0, Hp - H)))
    return w4.reshape(n, 4 * Hp)


# ----------------------------------------------------------------------------- wrapper
def decoder_forward(params, features, captions, attn_dim=50):
    emb_table = params['embed']                                  # (V, E)
    B, T = captions.shape
    E = emb_table.shape[1]
    H = params['whh_f'].shape[0]
    V = params['fc_w'].shape[1]

    Hp = _round_up(H, 128)
    Ap = _round_up(attn_dim, 128)
    Vp = _round_up(V, 128)

    # glue (plain JAX): embedding lookup + concatenation / tiling plumbing
    embeded = jnp.take(emb_table, captions[:, :-1], axis=0)                     # (B,T-1,E)
    prev_captions = jnp.concatenate(
        [jnp.zeros((B, 1, E), emb_table.dtype), embeded], axis=1)               # (B,T,E)
    # exact reproduction of torch `features.repeat(seq, 1).view(batch, seq, -1)`
    features_seq = jnp.tile(features, (T, 1)).reshape(B, T, features.shape[-1])
    feature_captions = jnp.concatenate([prev_captions, features_seq], axis=2)   # (B,T,2E)
    lstm_in = jnp.concatenate([features[:, None, :], embeded], axis=1)          # (B,T,E)

    # lane-dense (128-padded) weights; padded rows/cols are exact zeros so padded
    # hidden units stay identically zero through the recurrence.
    attn_w = jnp.pad(params['attn_w'], ((0, 0), (0, Ap - attn_dim)))            # (2E,Ap)
    attn_b = jnp.pad(params['attn_b'], ((0, 0), (0, Ap - attn_dim)))            # (1,Ap)
    wih_f = _pad_gate_cols(params['wih_f'], H, Hp)                              # (E,4Hp)
    wih_b = _pad_gate_cols(params['wih_b'], H, Hp)
    wih_cat = jnp.concatenate([wih_f, wih_b], axis=1)                           # (E,8Hp)
    b_cat = jnp.concatenate([_pad_gate_cols(params['b_f'], H, Hp),
                             _pad_gate_cols(params['b_b'], H, Hp)], axis=1)     # (1,8Hp)
    whh_f = jnp.pad(_pad_gate_cols(params['whh_f'], H, Hp), ((0, Hp - H), (0, 0)))
    whh_b = jnp.pad(_pad_gate_cols(params['whh_b'], H, Hp), ((0, Hp - H), (0, 0)))
    fc_w = jnp.pad(params['fc_w'].reshape(4, H, V),
                   ((0, 0), (0, Hp - H), (0, Vp - V))).reshape(4 * Hp, Vp)      # (4Hp,Vp)
    fc_b = jnp.pad(params['fc_b'], ((0, 0), (0, Vp - V)))                       # (1,Vp)

    kernel = make_decoder_kernel(attn_dim)
    inputs = [feature_captions, lstm_in, attn_w, attn_b, wih_cat, b_cat,
              whh_f, whh_b, fc_w, fc_b]
    vmem = lambda: pl.BlockSpec(memory_space=pltpu.MemorySpace.VMEM)

    out = pl.pallas_call(
        kernel,
        out_shape=jax.ShapeDtypeStruct((B, T, Vp), jnp.float32),
        in_specs=[vmem() for _ in inputs],
        out_specs=vmem(),
        scratch_shapes=[pltpu.VMEM((B, T, 2 * Hp), jnp.float32)],
        compiler_params=pltpu.CompilerParams(vmem_limit_bytes=32 << 20),
    )(*inputs)
    return out[:, :, :V]


# ----------------------------------------------------------------------------- params
def init_params(key, embed_size, hidden_size, vocab_size):
    E, H, V = embed_size, hidden_size, vocab_size
    ks = jax.random.split(key, 12)

    def u(k, shape, scale):
        return jax.random.uniform(k, shape, jnp.float32, -scale, scale)

    k_lstm = 1.0 / np.sqrt(H)
    k_attn = 1.0 / np.sqrt(2 * E)
    k_fc = 1.0 / np.sqrt(4 * H)
    return dict(
        embed=jax.random.normal(ks[0], (V, E), jnp.float32) * 0.1,
        attn_w=u(ks[1], (2 * E, 50), k_attn),      # stored transposed: (in, out)
        attn_b=u(ks[2], (1, 50), k_attn),
        wih_f=u(ks[3], (E, 4 * H), k_lstm),        # gate order [i, f, g, o]
        whh_f=u(ks[4], (H, 4 * H), k_lstm),
        b_f=u(ks[5], (1, 4 * H), k_lstm) + u(ks[6], (1, 4 * H), k_lstm),  # b_ih + b_hh
        wih_b=u(ks[7], (E, 4 * H), k_lstm),
        whh_b=u(ks[8], (H, 4 * H), k_lstm),
        b_b=u(ks[9], (1, 4 * H), k_lstm),
        fc_w=u(ks[10], (4 * H, V), k_fc),
        fc_b=u(ks[11], (1, V), k_fc),
    )


# ----------------------------------------------------------------------------- reference
def reference_forward(params, features, captions):
    emb = params['embed']
    B, T = captions.shape
    E = emb.shape[1]
    H = params['whh_f'].shape[0]

    embeded = emb[captions[:, :-1]]
    prev = jnp.concatenate([jnp.zeros((B, 1, E), jnp.float32), embeded], axis=1)
    feat_seq = jnp.tile(features, (T, 1)).reshape(B, T, E)
    fc_in = jnp.concatenate([prev, feat_seq], axis=2)
    attn = jax.nn.softmax(fc_in @ params['attn_w'] + params['attn_b'], axis=2)[:, :, :T]
    x = jnp.concatenate([features[:, None, :], embeded], axis=1)

    def run_dir(wih, whh, b, reverse):
        h = jnp.zeros((B, H), jnp.float32)
        c = jnp.zeros((B, H), jnp.float32)
        outs = [None] * T
        order = range(T - 1, -1, -1) if reverse else range(T)
        for t in order:
            g = x[:, t, :] @ wih + h @ whh + b
            i = jax.nn.sigmoid(g[:, :H]); f = jax.nn.sigmoid(g[:, H:2 * H])
            gg = jnp.tanh(g[:, 2 * H:3 * H]); o = jax.nn.sigmoid(g[:, 3 * H:])
            c = f * c + i * gg
            h = o * jnp.tanh(c)
            outs[t] = h
        return jnp.stack(outs, axis=1)

    lstm_out = jnp.concatenate(
        [run_dir(params['wih_f'], params['whh_f'], params['b_f'], False),
         run_dir(params['wih_b'], params['whh_b'], params['b_b'], True)], axis=-1)
    context = jnp.einsum('bts,bsh->bth', attn, lstm_out)
    feat = jnp.concatenate([context, lstm_out], axis=-1)
    return feat @ params['fc_w'] + params['fc_b']


# ----------------------------------------------------------------------------- main
if __name__ == "__main__":
    B, T = 2, 8            # batch, caption length (seq in the torch forward)
    E, H, V = 32, 32, 64   # embed_size, hidden_size, vocab_size

    key = jax.random.PRNGKey(0)
    kp, kf, kc = jax.random.split(key, 3)
    params = init_params(kp, E, H, V)
    features = jax.random.normal(kf, (B, E), jnp.float32)
    captions = jax.random.randint(kc, (B, T), 0, V, dtype=jnp.int32)

    out = decoder_forward(params, features, captions)
    out = jax.block_until_ready(out)

    ref = reference_forward(params, features, captions)
    assert out.shape == (B, T, V)
    np.testing.assert_allclose(np.asarray(out), np.asarray(ref), rtol=2e-2, atol=2e-2)
    print("KERNEL_OK")
</pallas_src>

<mosaic_0001>
module attributes {stable_mosaic.version = 11 : i64} {
  func.func @decoder_kernel(%arg0: memref<2x8x64xf32, #tpu.memory_space<vmem>>, %arg1: memref<2x8x32xf32, #tpu.memory_space<vmem>>, %arg2: memref<64x128xf32, #tpu.memory_space<vmem>>, %arg3: memref<1x128xf32, #tpu.memory_space<vmem>>, %arg4: memref<32x1024xf32, #tpu.memory_space<vmem>>, %arg5: memref<1x1024xf32, #tpu.memory_space<vmem>>, %arg6: memref<128x512xf32, #tpu.memory_space<vmem>>, %arg7: memref<128x512xf32, #tpu.memory_space<vmem>>, %arg8: memref<512x128xf32, #tpu.memory_space<vmem>>, %arg9: memref<1x128xf32, #tpu.memory_space<vmem>>, %arg10: memref<2x8x128xf32, #tpu.memory_space<vmem>>, %arg11: memref<2x8x256xf32, #tpu.memory_space<vmem>>) attributes {dimension_semantics = [], scalar_prefetch = 0 : i64, scratch_operands = 1 : i64, tpu.core_type = #tpu.core_type<tc>} {
    %c0 = arith.constant 0 : index
    %c0_0 = arith.constant 0 : index
    %c0_1 = arith.constant 0 : index
    %0 = vector.load %arg0[%c0, %c0_0, %c0_1] : memref<2x8x64xf32, #tpu.memory_space<vmem>>, vector<2x8x64xf32>
    %1 = vector.shape_cast %0 : vector<2x8x64xf32> to vector<16x64xf32>
    %c0_2 = arith.constant 0 : index
    %c0_3 = arith.constant 0 : index
    %2 = vector.load %arg2[%c0_2, %c0_3] : memref<64x128xf32, #tpu.memory_space<vmem>>, vector<64x128xf32>
    %cst = arith.constant dense<0.000000e+00> : vector<16x128xf32>
    %3 = tpu.matmul %1, %2, %cst {dimension_numbers = #tpu.dot_dimension_numbers<[1], [0], [0], [1], [0, 0, 1, 1], [], []>} : vector<16x64xf32>, vector<64x128xf32>, vector<16x128xf32> -> vector<16x128xf32>
    %c0_4 = arith.constant 0 : index
    %c0_5 = arith.constant 0 : index
    %4 = vector.load %arg3[%c0_4, %c0_5] : memref<1x128xf32, #tpu.memory_space<vmem>>, vector<1x128xf32>
    %5 = vector.broadcast %4 : vector<1x128xf32> to vector<16x128xf32>
    %6 = arith.addf %3, %5 : vector<16x128xf32>
    %cst_6 = arith.constant dense<0xFF800000> : vector<16xf32>
    %7 = vector.multi_reduction <maximumf>, %6, %cst_6 [1] : vector<16x128xf32> to vector<16xf32>
    %8 = vector.shape_cast %7 : vector<16xf32> to vector<16x1xf32>
    %9 = vector.broadcast %8 : vector<16x1xf32> to vector<16x128xf32>
    %10 = arith.subf %6, %9 : vector<16x128xf32>
    %11 = tpu.iota {dimensions = array<i32: 1>} : vector<16x128xi32>
    %12 = math.exp %10 : vector<16x128xf32>
    %c50_i32 = arith.constant 50 : i32
    %13 = vector.broadcast %c50_i32 : i32 to vector<16x128xi32>
    %14 = arith.cmpi slt, %11, %13 : vector<16x128xi32>
    %15 = arith.extui %14 : vector<16x128xi1> to vector<16x128xi32>
    %16 = arith.sitofp %15 : vector<16x128xi32> to vector<16x128xf32>
    %17 = arith.mulf %12, %16 : vector<16x128xf32>
    %cst_7 = arith.constant dense<0.000000e+00> : vector<16xf32>
    %18 = vector.multi_reduction <add>, %17, %cst_7 [1] : vector<16x128xf32> to vector<16xf32>
    %19 = vector.shape_cast %18 : vector<16xf32> to vector<16x1xf32>
    %20 = tpu.reciprocal %19 {approx = true} : vector<16x1xf32> -> vector<16x1xf32>
    %21 = vector.broadcast %20 : vector<16x1xf32> to vector<16x128xf32>
    %22 = arith.mulf %17, %21 : vector<16x128xf32>
    %23 = vector.shape_cast %22 : vector<16x128xf32> to vector<2x8x128xf32>
    %24 = vector.extract_strided_slice %23 {offsets = [0, 0, 0], sizes = [2, 8, 8], strides = [1, 1, 1]} : vector<2x8x128xf32> to vector<2x8x8xf32>
    %c0_8 = arith.constant 0 : index
    %c0_9 = arith.constant 0 : index
    %c0_10 = arith.constant 0 : index
    %25 = vector.load %arg1[%c0_8, %c0_9, %c0_10] : memref<2x8x32xf32, #tpu.memory_space<vmem>>, vector<2x8x32xf32>
    %26 = vector.shape_cast %25 : vector<2x8x32xf32> to vector<16x32xf32>
    %c0_11 = arith.constant 0 : index
    %c0_12 = arith.constant 0 : index
    %27 = vector.load %arg4[%c0_11, %c0_12] : memref<32x1024xf32, #tpu.memory_space<vmem>>, vector<32x1024xf32>
    %cst_13 = arith.constant dense<0.000000e+00> : vector<16x1024xf32>
    %28 = tpu.matmul %26, %27, %cst_13 {dimension_numbers = #tpu.dot_dimension_numbers<[1], [0], [0], [1], [0, 0, 1, 1], [], []>} : vector<16x32xf32>, vector<32x1024xf32>, vector<16x1024xf32> -> vector<16x1024xf32>
    %c0_14 = arith.constant 0 : index
    %c0_15 = arith.constant 0 : index
    %29 = vector.load %arg5[%c0_14, %c0_15] : memref<1x1024xf32, #tpu.memory_space<vmem>>, vector<1x1024xf32>
    %30 = vector.broadcast %29 : vector<1x1024xf32> to vector<16x1024xf32>
    %31 = arith.addf %28, %30 : vector<16x1024xf32>
    %32 = vector.shape_cast %31 : vector<16x1024xf32> to vector<2x8x1024xf32>
    %c0_16 = arith.constant 0 : index
    %c0_17 = arith.constant 0 : index
    %33 = vector.load %arg6[%c0_16, %c0_17] : memref<128x512xf32, #tpu.memory_space<vmem>>, vector<128x512xf32>
    %c0_18 = arith.constant 0 : index
    %c0_19 = arith.constant 0 : index
    %34 = vector.load %arg7[%c0_18, %c0_19] : memref<128x512xf32, #tpu.memory_space<vmem>>, vector<128x512xf32>
    %cst_20 = arith.constant 0.000000e+00 : f32
    %35 = vector.broadcast %cst_20 : f32 to vector<2x128xf32>
    %cst_21 = arith.constant 0.000000e+00 : f32
    %36 = vector.broadcast %cst_21 : f32 to vector<2x128xf32>
    %cst_22 = arith.constant 0.000000e+00 : f32
    %37 = vector.broadcast %cst_22 : f32 to vector<2x128xf32>
    %cst_23 = arith.constant 0.000000e+00 : f32
    %38 = vector.broadcast %cst_23 : f32 to vector<2x128xf32>
    %39 = vector.extract_strided_slice %32 {offsets = [0, 0, 0], sizes = [2, 1, 512], strides = [1, 1, 1]} : vector<2x8x1024xf32> to vector<2x1x512xf32>
    %40 = vector.shape_cast %39 : vector<2x1x512xf32> to vector<2x512xf32>
    %cst_24 = arith.constant dense<0.000000e+00> : vector<2x512xf32>
    %41 = tpu.matmul %35, %33, %cst_24 {dimension_numbers = #tpu.dot_dimension_numbers<[1], [0], [0], [1], [0, 0, 1, 1], [], []>} : vector<2x128xf32>, vector<128x512xf32>, vector<2x512xf32> -> vector<2x512xf32>
    %42 = arith.addf %40, %41 : vector<2x512xf32>
    %43 = vector.extract_strided_slice %32 {offsets = [0, 7, 512], sizes = [2, 1, 512], strides = [1, 1, 1]} : vector<2x8x1024xf32> to vector<2x1x512xf32>
    %44 = vector.shape_cast %43 : vector<2x1x512xf32> to vector<2x512xf32>
    %cst_25 = arith.constant dense<0.000000e+00> : vector<2x512xf32>
    %45 = tpu.matmul %37, %34, %cst_25 {dimension_numbers = #tpu.dot_dimension_numbers<[1], [0], [0], [1], [0, 0, 1, 1], [], []>} : vector<2x128xf32>, vector<128x512xf32>, vector<2x512xf32> -> vector<2x512xf32>
    %46 = arith.addf %44, %45 : vector<2x512xf32>
    %47 = vector.extract_strided_slice %42 {offsets = [0, 0], sizes = [2, 128], strides = [1, 1]} : vector<2x512xf32> to vector<2x128xf32>
    %48 = arith.negf %47 : vector<2x128xf32>
    %49 = math.exp %48 : vector<2x128xf32>
    %cst_26 = arith.constant 1.000000e+00 : f32
    %50 = vector.broadcast %cst_26 : f32 to vector<2x128xf32>
    %51 = arith.addf %50, %49 : vector<2x128xf32>
    %52 = arith.divf %50, %51 : vector<2x128xf32>
    %53 = vector.extract_strided_slice %42 {offsets = [0, 128], sizes = [2, 128], strides = [1, 1]} : vector<2x512xf32> to vector<2x128xf32>
    %54 = arith.negf %53 : vector<2x128xf32>
    %55 = math.exp %54 : vector<2x128xf32>
    %cst_27 = arith.constant 1.000000e+00 : f32
    %56 = vector.broadcast %cst_27 : f32 to vector<2x128xf32>
    %57 = arith.addf %56, %55 : vector<2x128xf32>
    %58 = arith.divf %56, %57 : vector<2x128xf32>
    %59 = vector.extract_strided_slice %42 {offsets = [0, 256], sizes = [2, 128], strides = [1, 1]} : vector<2x512xf32> to vector<2x128xf32>
    %60 = math.tanh %59 : vector<2x128xf32>
    %61 = vector.extract_strided_slice %42 {offsets = [0, 384], sizes = [2, 128], strides = [1, 1]} : vector<2x512xf32> to vector<2x128xf32>
    %62 = arith.negf %61 : vector<2x128xf32>
    %63 = math.exp %62 : vector<2x128xf32>
    %cst_28 = arith.constant 1.000000e+00 : f32
    %64 = vector.broadcast %cst_28 : f32 to vector<2x128xf32>
    %65 = arith.addf %64, %63 : vector<2x128xf32>
    %66 = arith.divf %64, %65 : vector<2x128xf32>
    %67 = arith.mulf %58, %36 : vector<2x128xf32>
    %68 = arith.mulf %52, %60 : vector<2x128xf32>
    %69 = arith.addf %67, %68 : vector<2x128xf32>
    %70 = math.tanh %69 : vector<2x128xf32>
    %71 = arith.mulf %66, %70 : vector<2x128xf32>
    %72 = vector.extract_strided_slice %46 {offsets = [0, 0], sizes = [2, 128], strides = [1, 1]} : vector<2x512xf32> to vector<2x128xf32>
    %73 = arith.negf %72 : vector<2x128xf32>
    %74 = math.exp %73 : vector<2x128xf32>
    %cst_29 = arith.constant 1.000000e+00 : f32
    %75 = vector.broadcast %cst_29 : f32 to vector<2x128xf32>
    %76 = arith.addf %75, %74 : vector<2x128xf32>
    %77 = arith.divf %75, %76 : vector<2x128xf32>
    %78 = vector.extract_strided_slice %46 {offsets = [0, 128], sizes = [2, 128], strides = [1, 1]} : vector<2x512xf32> to vector<2x128xf32>
    %79 = arith.negf %78 : vector<2x128xf32>
    %80 = math.exp %79 : vector<2x128xf32>
    %cst_30 = arith.constant 1.000000e+00 : f32
    %81 = vector.broadcast %cst_30 : f32 to vector<2x128xf32>
    %82 = arith.addf %81, %80 : vector<2x128xf32>
    %83 = arith.divf %81, %82 : vector<2x128xf32>
    %84 = vector.extract_strided_slice %46 {offsets = [0, 256], sizes = [2, 128], strides = [1, 1]} : vector<2x512xf32> to vector<2x128xf32>
    %85 = math.tanh %84 : vector<2x128xf32>
    %86 = vector.extract_strided_slice %46 {offsets = [0, 384], sizes = [2, 128], strides = [1, 1]} : vector<2x512xf32> to vector<2x128xf32>
    %87 = arith.negf %86 : vector<2x128xf32>
    %88 = math.exp %87 : vector<2x128xf32>
    %cst_31 = arith.constant 1.000000e+00 : f32
    %89 = vector.broadcast %cst_31 : f32 to vector<2x128xf32>
    %90 = arith.addf %89, %88 : vector<2x128xf32>
    %91 = arith.divf %89, %90 : vector<2x128xf32>
    %92 = arith.mulf %83, %38 : vector<2x128xf32>
    %93 = arith.mulf %77, %85 : vector<2x128xf32>
    %94 = arith.addf %92, %93 : vector<2x128xf32>
    %95 = math.tanh %94 : vector<2x128xf32>
    %96 = arith.mulf %91, %95 : vector<2x128xf32>
    %c0_32 = arith.constant 0 : index
    %c0_33 = arith.constant 0 : index
    %c0_34 = arith.constant 0 : index
    %97 = vector.load %arg11[%c0_32, %c0_33, %c0_34] : memref<2x8x256xf32, #tpu.memory_space<vmem>>, vector<2x1x128xf32>
    %98 = vector.shape_cast %97 : vector<2x1x128xf32> to vector<2x128xf32>
    %99 = vector.shape_cast %71 : vector<2x128xf32> to vector<2x1x128xf32>
    tpu.vector_store %arg11[%c0_32, %c0_33, %c0_34], %99 {strides = array<i32>} : memref<2x8x256xf32, #tpu.memory_space<vmem>>, vector<2x1x128xf32>,
    %c0_35 = arith.constant 0 : index
    %c7 = arith.constant 7 : index
    %c128 = arith.constant 128 : index
    %100 = vector.load %arg11[%c0_35, %c7, %c128] : memref<2x8x256xf32, #tpu.memory_space<vmem>>, vector<2x1x128xf32>
    %101 = vector.shape_cast %100 : vector<2x1x128xf32> to vector<2x128xf32>
    %102 = vector.shape_cast %96 : vector<2x128xf32> to vector<2x1x128xf32>
    tpu.vector_store %arg11[%c0_35, %c7, %c128], %102 {strides = array<i32>} : memref<2x8x256xf32, #tpu.memory_space<vmem>>, vector<2x1x128xf32>,
    %103 = vector.extract_strided_slice %32 {offsets = [0, 1, 0], sizes = [2, 1, 512], strides = [1, 1, 1]} : vector<2x8x1024xf32> to vector<2x1x512xf32>
    %104 = vector.shape_cast %103 : vector<2x1x512xf32> to vector<2x512xf32>
    %cst_36 = arith.constant dense<0.000000e+00> : vector<2x512xf32>
    %105 = tpu.matmul %71, %33, %cst_36 {dimension_numbers = #tpu.dot_dimension_numbers<[1], [0], [0], [1], [0, 0, 1, 1], [], []>} : vector<2x128xf32>, vector<128x512xf32>, vector<2x512xf32> -> vector<2x512xf32>
    %106 = arith.addf %104, %105 : vector<2x512xf32>
    %107 = vector.extract_strided_slice %32 {offsets = [0, 6, 512], sizes = [2, 1, 512], strides = [1, 1, 1]} : vector<2x8x1024xf32> to vector<2x1x512xf32>
    %108 = vector.shape_cast %107 : vector<2x1x512xf32> to vector<2x512xf32>
    %cst_37 = arith.constant dense<0.000000e+00> : vector<2x512xf32>
    %109 = tpu.matmul %96, %34, %cst_37 {dimension_numbers = #tpu.dot_dimension_numbers<[1], [0], [0], [1], [0, 0, 1, 1], [], []>} : vector<2x128xf32>, vector<128x512xf32>, vector<2x512xf32> -> vector<2x512xf32>
    %110 = arith.addf %108, %109 : vector<2x512xf32>
    %111 = vector.extract_strided_slice %106 {offsets = [0, 0], sizes = [2, 128], strides = [1, 1]} : vector<2x512xf32> to vector<2x128xf32>
    %112 = arith.negf %111 : vector<2x128xf32>
    %113 = math.exp %112 : vector<2x128xf32>
    %cst_38 = arith.constant 1.000000e+00 : f32
    %114 = vector.broadcast %cst_38 : f32 to vector<2x128xf32>
    %115 = arith.addf %114, %113 : vector<2x128xf32>
    %116 = arith.divf %114, %115 : vector<2x128xf32>
    %117 = vector.extract_strided_slice %106 {offsets = [0, 128], sizes = [2, 128], strides = [1, 1]} : vector<2x512xf32> to vector<2x128xf32>
    %118 = arith.negf %117 : vector<2x128xf32>
    %119 = math.exp %118 : vector<2x128xf32>
    %cst_39 = arith.constant 1.000000e+00 : f32
    %120 = vector.broadcast %cst_39 : f32 to vector<2x128xf32>
    %121 = arith.addf %120, %119 : vector<2x128xf32>
    %122 = arith.divf %120, %121 : vector<2x128xf32>
    %123 = vector.extract_strided_slice %106 {offsets = [0, 256], sizes = [2, 128], strides = [1, 1]} : vector<2x512xf32> to vector<2x128xf32>
    %124 = math.tanh %123 : vector<2x128xf32>
    %125 = vector.extract_strided_slice %106 {offsets = [0, 384], sizes = [2, 128], strides = [1, 1]} : vector<2x512xf32> to vector<2x128xf32>
    %126 = arith.negf %125 : vector<2x128xf32>
    %127 = math.exp %126 : vector<2x128xf32>
    %cst_40 = arith.constant 1.000000e+00 : f32
    %128 = vector.broadcast %cst_40 : f32 to vector<2x128xf32>
    %129 = arith.addf %128, %127 : vector<2x128xf32>
    %130 = arith.divf %128, %129 : vector<2x128xf32>
    %131 = arith.mulf %122, %69 : vector<2x128xf32>
    %132 = arith.mulf %116, %124 : vector<2x128xf32>
    %133 = arith.addf %131, %132 : vector<2x128xf32>
    %134 = math.tanh %133 : vector<2x128xf32>
    %135 = arith.mulf %130, %134 : vector<2x128xf32>
    %136 = vector.extract_strided_slice %110 {offsets = [0, 0], sizes = [2, 128], strides = [1, 1]} : vector<2x512xf32> to vector<2x128xf32>
    %137 = arith.negf %136 : vector<2x128xf32>
    %138 = math.exp %137 : vector<2x128xf32>
    %cst_41 = arith.constant 1.000000e+00 : f32
    %139 = vector.broadcast %cst_41 : f32 to vector<2x128xf32>
    %140 = arith.addf %139, %138 : vector<2x128xf32>
    %141 = arith.divf %139, %140 : vector<2x128xf32>
    %142 = vector.extract_strided_slice %110 {offsets = [0, 128], sizes = [2, 128], strides = [1, 1]} : vector<2x512xf32> to vector<2x128xf32>
    %143 = arith.negf %142 : vector<2x128xf32>
    %144 = math.exp %143 : vector<2x128xf32>
    %cst_42 = arith.constant 1.000000e+00 : f32
    %145 = vector.broadcast %cst_42 : f32 to vector<2x128xf32>
    %146 = arith.addf %145, %144 : vector<2x128xf32>
    %147 = arith.divf %145, %146 : vector<2x128xf32>
    %148 = vector.extract_strided_slice %110 {offsets = [0, 256], sizes = [2, 128], strides = [1, 1]} : vector<2x512xf32> to vector<2x128xf32>
    %149 = math.tanh %148 : vector<2x128xf32>
    %150 = vector.extract_strided_slice %110 {offsets = [0, 384], sizes = [2, 128], strides = [1, 1]} : vector<2x512xf32> to vector<2x128xf32>
    %151 = arith.negf %150 : vector<2x128xf32>
    %152 = math.exp %151 : vector<2x128xf32>
    %cst_43 = arith.constant 1.000000e+00 : f32
    %153 = vector.broadcast %cst_43 : f32 to vector<2x128xf32>
    %154 = arith.addf %153, %152 : vector<2x128xf32>
    %155 = arith.divf %153, %154 : vector<2x128xf32>
    %156 = arith.mulf %147, %94 : vector<2x128xf32>
    %157 = arith.mulf %141, %149 : vector<2x128xf32>
    %158 = arith.addf %156, %157 : vector<2x128xf32>
    %159 = math.tanh %158 : vector<2x128xf32>
    %160 = arith.mulf %155, %159 : vector<2x128xf32>
    %c0_44 = arith.constant 0 : index
    %c1 = arith.constant 1 : index
    %c0_45 = arith.constant 0 : index
    %161 = vector.load %arg11[%c0_44, %c1, %c0_45] : memref<2x8x256xf32, #tpu.memory_space<vmem>>, vector<2x1x128xf32>
    %162 = vector.shape_cast %161 : vector<2x1x128xf32> to vector<2x128xf32>
    %163 = vector.shape_cast %135 : vector<2x128xf32> to vector<2x1x128xf32>
    tpu.vector_store %arg11[%c0_44, %c1, %c0_45], %163 {strides = array<i32>} : memref<2x8x256xf32, #tpu.memory_space<vmem>>, vector<2x1x128xf32>,
    %c0_46 = arith.constant 0 : index
    %c6 = arith.constant 6 : index
    %c128_47 = arith.constant 128 : index
    %164 = vector.load %arg11[%c0_46, %c6, %c128_47] : memref<2x8x256xf32, #tpu.memory_space<vmem>>, vector<2x1x128xf32>
    %165 = vector.shape_cast %164 : vector<2x1x128xf32> to vector<2x128xf32>
    %166 = vector.shape_cast %160 : vector<2x128xf32> to vector<2x1x128xf32>
    tpu.vector_store %arg11[%c0_46, %c6, %c128_47], %166 {strides = array<i32>} : memref<2x8x256xf32, #tpu.memory_space<vmem>>, vector<2x1x128xf32>,
    %167 = vector.extract_strided_slice %32 {offsets = [0, 2, 0], sizes = [2, 1, 512], strides = [1, 1, 1]} : vector<2x8x1024xf32> to vector<2x1x512xf32>
    %168 = vector.shape_cast %167 : vector<2x1x512xf32> to vector<2x512xf32>
    %cst_48 = arith.constant dense<0.000000e+00> : vector<2x512xf32>
    %169 = tpu.matmul %135, %33, %cst_48 {dimension_numbers = #tpu.dot_dimension_numbers<[1], [0], [0], [1], [0, 0, 1, 1], [], []>} : vector<2x128xf32>, vector<128x512xf32>, vector<2x512xf32> -> vector<2x512xf32>
    %170 = arith.addf %168, %169 : vector<2x512xf32>
    %171 = vector.extract_strided_slice %32 {offsets = [0, 5, 512], sizes = [2, 1, 512], strides = [1, 1, 1]} : vector<2x8x1024xf32> to vector<2x1x512xf32>
    %172 = vector.shape_cast %171 : vector<2x1x512xf32> to vector<2x512xf32>
    %cst_49 = arith.constant dense<0.000000e+00> : vector<2x512xf32>
    %173 = tpu.matmul %160, %34, %cst_49 {dimension_numbers = #tpu.dot_dimension_numbers<[1], [0], [0], [1], [0, 0, 1, 1], [], []>} : vector<2x128xf32>, vector<128x512xf32>, vector<2x512xf32> -> vector<2x512xf32>
    %174 = arith.addf %172, %173 : vector<2x512xf32>
    %175 = vector.extract_strided_slice %170 {offsets = [0, 0], sizes = [2, 128], strides = [1, 1]} : vector<2x512xf32> to vector<2x128xf32>
    %176 = arith.negf %175 : vector<2x128xf32>
    %177 = math.exp %176 : vector<2x128xf32>
    %cst_50 = arith.constant 1.000000e+00 : f32
    %178 = vector.broadcast %cst_50 : f32 to vector<2x128xf32>
    %179 = arith.addf %178, %177 : vector<2x128xf32>
    %180 = arith.divf %178, %179 : vector<2x128xf32>
    %181 = vector.extract_strided_slice %170 {offsets = [0, 128], sizes = [2, 128], strides = [1, 1]} : vector<2x512xf32> to vector<2x128xf32>
    %182 = arith.negf %181 : vector<2x128xf32>
    %183 = math.exp %182 : vector<2x128xf32>
    %cst_51 = arith.constant 1.000000e+00 : f32
    %184 = vector.broadcast %cst_51 : f32 to vector<2x128xf32>
    %185 = arith.addf %184, %183 : vector<2x128xf32>
    %186 = arith.divf %184, %185 : vector<2x128xf32>
    %187 = vector.extract_strided_slice %170 {offsets = [0, 256], sizes = [2, 128], strides = [1, 1]} : vector<2x512xf32> to vector<2x128xf32>
    %188 = math.tanh %187 : vector<2x128xf32>
    %189 = vector.extract_strided_slice %170 {offsets = [0, 384], sizes = [2, 128], strides = [1, 1]} : vector<2x512xf32> to vector<2x128xf32>
    %190 = arith.negf %189 : vector<2x128xf32>
    %191 = math.exp %190 : vector<2x128xf32>
    %cst_52 = arith.constant 1.000000e+00 : f32
    %192 = vector.broadcast %cst_52 : f32 to vector<2x128xf32>
    %193 = arith.addf %192, %191 : vector<2x128xf32>
    %194 = arith.divf %192, %193 : vector<2x128xf32>
    %195 = arith.mulf %186, %133 : vector<2x128xf32>
    %196 = arith.mulf %180, %188 : vector<2x128xf32>
    %197 = arith.addf %195, %196 : vector<2x128xf32>
    %198 = math.tanh %197 : vector<2x128xf32>
    %199 = arith.mulf %194, %198 : vector<2x128xf32>
    %200 = vector.extract_strided_slice %174 {offsets = [0, 0], sizes = [2, 128], strides = [1, 1]} : vector<2x512xf32> to vector<2x128xf32>
    %201 = arith.negf %200 : vector<2x128xf32>
    %202 = math.exp %201 : vector<2x128xf32>
    %cst_53 = arith.constant 1.000000e+00 : f32
    %203 = vector.broadcast %cst_53 : f32 to vector<2x128xf32>
    %204 = arith.addf %203, %202 : vector<2x128xf32>
    %205 = arith.divf %203, %204 : vector<2x128xf32>
    %206 = vector.extract_strided_slice %174 {offsets = [0, 128], sizes = [2, 128], strides = [1, 1]} : vector<2x512xf32> to vector<2x128xf32>
    %207 = arith.negf %206 : vector<2x128xf32>
    %208 = math.exp %207 : vector<2x128xf32>
    %cst_54 = arith.constant 1.000000e+00 : f32
    %209 = vector.broadcast %cst_54 : f32 to vector<2x128xf32>
    %210 = arith.addf %209, %208 : vector<2x128xf32>
    %211 = arith.divf %209, %210 : vector<2x128xf32>
    %212 = vector.extract_strided_slice %174 {offsets = [0, 256], sizes = [2, 128], strides = [1, 1]} : vector<2x512xf32> to vector<2x128xf32>
    %213 = math.tanh %212 : vector<2x128xf32>
    %214 = vector.extract_strided_slice %174 {offsets = [0, 384], sizes = [2, 128], strides = [1, 1]} : vector<2x512xf32> to vector<2x128xf32>
    %215 = arith.negf %214 : vector<2x128xf32>
    %216 = math.exp %215 : vector<2x128xf32>
    %cst_55 = arith.constant 1.000000e+00 : f32
    %217 = vector.broadcast %cst_55 : f32 to vector<2x128xf32>
    %218 = arith.addf %217, %216 : vector<2x128xf32>
    %219 = arith.divf %217, %218 : vector<2x128xf32>
    %220 = arith.mulf %211, %158 : vector<2x128xf32>
    %221 = arith.mulf %205, %213 : vector<2x128xf32>
    %222 = arith.addf %220, %221 : vector<2x128xf32>
    %223 = math.tanh %222 : vector<2x128xf32>
    %224 = arith.mulf %219, %223 : vector<2x128xf32>
    %c0_56 = arith.constant 0 : index
    %c2 = arith.constant 2 : index
    %c0_57 = arith.constant 0 : index
    %225 = vector.load %arg11[%c0_56, %c2, %c0_57] : memref<2x8x256xf32, #tpu.memory_space<vmem>>, vector<2x1x128xf32>
    %226 = vector.shape_cast %225 : vector<2x1x128xf32> to vector<2x128xf32>
    %227 = vector.shape_cast %199 : vector<2x128xf32> to vector<2x1x128xf32>
    tpu.vector_store %arg11[%c0_56, %c2, %c0_57], %227 {strides = array<i32>} : memref<2x8x256xf32, #tpu.memory_space<vmem>>, vector<2x1x128xf32>,
    %c0_58 = arith.constant 0 : index
    %c5 = arith.constant 5 : index
    %c128_59 = arith.constant 128 : index
    %228 = vector.load %arg11[%c0_58, %c5, %c128_59] : memref<2x8x256xf32, #tpu.memory_space<vmem>>, vector<2x1x128xf32>
    %229 = vector.shape_cast %228 : vector<2x1x128xf32> to vector<2x128xf32>
    %230 = vector.shape_cast %224 : vector<2x128xf32> to vector<2x1x128xf32>
    tpu.vector_store %arg11[%c0_58, %c5, %c128_59], %230 {strides = array<i32>} : memref<2x8x256xf32, #tpu.memory_space<vmem>>, vector<2x1x128xf32>,
    %231 = vector.extract_strided_slice %32 {offsets = [0, 3, 0], sizes = [2, 1, 512], strides = [1, 1, 1]} : vector<2x8x1024xf32> to vector<2x1x512xf32>
    %232 = vector.shape_cast %231 : vector<2x1x512xf32> to vector<2x512xf32>
    %cst_60 = arith.constant dense<0.000000e+00> : vector<2x512xf32>
    %233 = tpu.matmul %199, %33, %cst_60 {dimension_numbers = #tpu.dot_dimension_numbers<[1], [0], [0], [1], [0, 0, 1, 1], [], []>} : vector<2x128xf32>, vector<128x512xf32>, vector<2x512xf32> -> vector<2x512xf32>
    %234 = arith.addf %232, %233 : vector<2x512xf32>
    %235 = vector.extract_strided_slice %32 {offsets = [0, 4, 512], sizes = [2, 1, 512], strides = [1, 1, 1]} : vector<2x8x1024xf32> to vector<2x1x512xf32>
    %236 = vector.shape_cast %235 : vector<2x1x512xf32> to vector<2x512xf32>
    %cst_61 = arith.constant dense<0.000000e+00> : vector<2x512xf32>
    %237 = tpu.matmul %224, %34, %cst_61 {dimension_numbers = #tpu.dot_dimension_numbers<[1], [0], [0], [1], [0, 0, 1, 1], [], []>} : vector<2x128xf32>, vector<128x512xf32>, vector<2x512xf32> -> vector<2x512xf32>
    %238 = arith.addf %236, %237 : vector<2x512xf32>
    %239 = vector.extract_strided_slice %234 {offsets = [0, 0], sizes = [2, 128], strides = [1, 1]} : vector<2x512xf32> to vector<2x128xf32>
    %240 = arith.negf %239 : vector<2x128xf32>
    %241 = math.exp %240 : vector<2x128xf32>
    %cst_62 = arith.constant 1.000000e+00 : f32
    %242 = vector.broadcast %cst_62 : f32 to vector<2x128xf32>
    %243 = arith.addf %242, %241 : vector<2x128xf32>
    %244 = arith.divf %242, %243 : vector<2x128xf32>
    %245 = vector.extract_strided_slice %234 {offsets = [0, 128], sizes = [2, 128], strides = [1, 1]} : vector<2x512xf32> to vector<2x128xf32>
    %246 = arith.negf %245 : vector<2x128xf32>
    %247 = math.exp %246 : vector<2x128xf32>
    %cst_63 = arith.constant 1.000000e+00 : f32
    %248 = vector.broadcast %cst_63 : f32 to vector<2x128xf32>
    %249 = arith.addf %248, %247 : vector<2x128xf32>
    %250 = arith.divf %248, %249 : vector<2x128xf32>
    %251 = vector.extract_strided_slice %234 {offsets = [0, 256], sizes = [2, 128], strides = [1, 1]} : vector<2x512xf32> to vector<2x128xf32>
    %252 = math.tanh %251 : vector<2x128xf32>
    %253 = vector.extract_strided_slice %234 {offsets = [0, 384], sizes = [2, 128], strides = [1, 1]} : vector<2x512xf32> to vector<2x128xf32>
    %254 = arith.negf %253 : vector<2x128xf32>
    %255 = math.exp %254 : vector<2x128xf32>
    %cst_64 = arith.constant 1.000000e+00 : f32
    %256 = vector.broadcast %cst_64 : f32 to vector<2x128xf32>
    %257 = arith.addf %256, %255 : vector<2x128xf32>
    %258 = arith.divf %256, %257 : vector<2x128xf32>
    %259 = arith.mulf %250, %197 : vector<2x128xf32>
    %260 = arith.mulf %244, %252 : vector<2x128xf32>
    %261 = arith.addf %259, %260 : vector<2x128xf32>
    %262 = math.tanh %261 : vector<2x128xf32>
    %263 = arith.mulf %258, %262 : vector<2x128xf32>
    %264 = vector.extract_strided_slice %238 {offsets = [0, 0], sizes = [2, 128], strides = [1, 1]} : vector<2x512xf32> to vector<2x128xf32>
    %265 = arith.negf %264 : vector<2x128xf32>
    %266 = math.exp %265 : vector<2x128xf32>
    %cst_65 = arith.constant 1.000000e+00 : f32
    %267 = vector.broadcast %cst_65 : f32 to vector<2x128xf32>
    %268 = arith.addf %267, %266 : vector<2x128xf32>
    %269 = arith.divf %267, %268 : vector<2x128xf32>
    %270 = vector.extract_strided_slice %238 {offsets = [0, 128], sizes = [2, 128], strides = [1, 1]} : vector<2x512xf32> to vector<2x128xf32>
    %271 = arith.negf %270 : vector<2x128xf32>
    %272 = math.exp %271 : vector<2x128xf32>
    %cst_66 = arith.constant 1.000000e+00 : f32
    %273 = vector.broadcast %cst_66 : f32 to vector<2x128xf32>
    %274 = arith.addf %273, %272 : vector<2x128xf32>
    %275 = arith.divf %273, %274 : vector<2x128xf32>
    %276 = vector.extract_strided_slice %238 {offsets = [0, 256], sizes = [2, 128], strides = [1, 1]} : vector<2x512xf32> to vector<2x128xf32>
    %277 = math.tanh %276 : vector<2x128xf32>
    %278 = vector.extract_strided_slice %238 {offsets = [0, 384], sizes = [2, 128], strides = [1, 1]} : vector<2x512xf32> to vector<2x128xf32>
    %279 = arith.negf %278 : vector<2x128xf32>
    %280 = math.exp %279 : vector<2x128xf32>
    %cst_67 = arith.constant 1.000000e+00 : f32
    %281 = vector.broadcast %cst_67 : f32 to vector<2x128xf32>
    %282 = arith.addf %281, %280 : vector<2x128xf32>
    %283 = arith.divf %281, %282 : vector<2x128xf32>
    %284 = arith.mulf %275, %222 : vector<2x128xf32>
    %285 = arith.mulf %269, %277 : vector<2x128xf32>
    %286 = arith.addf %284, %285 : vector<2x128xf32>
    %287 = math.tanh %286 : vector<2x128xf32>
    %288 = arith.mulf %283, %287 : vector<2x128xf32>
    %c0_68 = arith.constant 0 : index
    %c3 = arith.constant 3 : index
    %c0_69 = arith.constant 0 : index
    %289 = vector.load %arg11[%c0_68, %c3, %c0_69] : memref<2x8x256xf32, #tpu.memory_space<vmem>>, vector<2x1x128xf32>
    %290 = vector.shape_cast %289 : vector<2x1x128xf32> to vector<2x128xf32>
    %291 = vector.shape_cast %263 : vector<2x128xf32> to vector<2x1x128xf32>
    tpu.vector_store %arg11[%c0_68, %c3, %c0_69], %291 {strides = array<i32>} : memref<2x8x256xf32, #tpu.memory_space<vmem>>, vector<2x1x128xf32>,
    %c0_70 = arith.constant 0 : index
    %c4 = arith.constant 4 : index
    %c128_71 = arith.constant 128 : index
    %292 = vector.load %arg11[%c0_70, %c4, %c128_71] : memref<2x8x256xf32, #tpu.memory_space<vmem>>, vector<2x1x128xf32>
    %293 = vector.shape_cast %292 : vector<2x1x128xf32> to vector<2x128xf32>
    %294 = vector.shape_cast %288 : vector<2x128xf32> to vector<2x1x128xf32>
    tpu.vector_store %arg11[%c0_70, %c4, %c128_71], %294 {strides = array<i32>} : memref<2x8x256xf32, #tpu.memory_space<vmem>>, vector<2x1x128xf32>,
    %295 = vector.extract_strided_slice %32 {offsets = [0, 4, 0], sizes = [2, 1, 512], strides = [1, 1, 1]} : vector<2x8x1024xf32> to vector<2x1x512xf32>
    %296 = vector.shape_cast %295 : vector<2x1x512xf32> to vector<2x512xf32>
    %cst_72 = arith.constant dense<0.000000e+00> : vector<2x512xf32>
    %297 = tpu.matmul %263, %33, %cst_72 {dimension_numbers = #tpu.dot_dimension_numbers<[1], [0], [0], [1], [0, 0, 1, 1], [], []>} : vector<2x128xf32>, vector<128x512xf32>, vector<2x512xf32> -> vector<2x512xf32>
    %298 = arith.addf %296, %297 : vector<2x512xf32>
    %299 = vector.extract_strided_slice %32 {offsets = [0, 3, 512], sizes = [2, 1, 512], strides = [1, 1, 1]} : vector<2x8x1024xf32> to vector<2x1x512xf32>
    %300 = vector.shape_cast %299 : vector<2x1x512xf32> to vector<2x512xf32>
    %cst_73 = arith.constant dense<0.000000e+00> : vector<2x512xf32>
    %301 = tpu.matmul %288, %34, %cst_73 {dimension_numbers = #tpu.dot_dimension_numbers<[1], [0], [0], [1], [0, 0, 1, 1], [], []>} : vector<2x128xf32>, vector<128x512xf32>, vector<2x512xf32> -> vector<2x512xf32>
    %302 = arith.addf %300, %301 : vector<2x512xf32>
    %303 = vector.extract_strided_slice %298 {offsets = [0, 0], sizes = [2, 128], strides = [1, 1]} : vector<2x512xf32> to vector<2x128xf32>
    %304 = arith.negf %303 : vector<2x128xf32>
    %305 = math.exp %304 : vector<2x128xf32>
    %cst_74 = arith.constant 1.000000e+00 : f32
    %306 = vector.broadcast %cst_74 : f32 to vector<2x128xf32>
    %307 = arith.addf %306, %305 : vector<2x128xf32>
    %308 = arith.divf %306, %307 : vector<2x128xf32>
    %309 = vector.extract_strided_slice %298 {offsets = [0, 128], sizes = [2, 128], strides = [1, 1]} : vector<2x512xf32> to vector<2x128xf32>
    %310 = arith.negf %309 : vector<2x128xf32>
    %311 = math.exp %310 : vector<2x128xf32>
    %cst_75 = arith.constant 1.000000e+00 : f32
    %312 = vector.broadcast %cst_75 : f32 to vector<2x128xf32>
    %313 = arith.addf %312, %311 : vector<2x128xf32>
    %314 = arith.divf %312, %313 : vector<2x128xf32>
    %315 = vector.extract_strided_slice %298 {offsets = [0, 256], sizes = [2, 128], strides = [1, 1]} : vector<2x512xf32> to vector<2x128xf32>
    %316 = math.tanh %315 : vector<2x128xf32>
    %317 = vector.extract_strided_slice %298 {offsets = [0, 384], sizes = [2, 128], strides = [1, 1]} : vector<2x512xf32> to vector<2x128xf32>
    %318 = arith.negf %317 : vector<2x128xf32>
    %319 = math.exp %318 : vector<2x128xf32>
    %cst_76 = arith.constant 1.000000e+00 : f32
    %320 = vector.broadcast %cst_76 : f32 to vector<2x128xf32>
    %321 = arith.addf %320, %319 : vector<2x128xf32>
    %322 = arith.divf %320, %321 : vector<2x128xf32>
    %323 = arith.mulf %314, %261 : vector<2x128xf32>
    %324 = arith.mulf %308, %316 : vector<2x128xf32>
    %325 = arith.addf %323, %324 : vector<2x128xf32>
    %326 = math.tanh %325 : vector<2x128xf32>
    %327 = arith.mulf %322, %326 : vector<2x128xf32>
    %328 = vector.extract_strided_slice %302 {offsets = [0, 0], sizes = [2, 128], strides = [1, 1]} : vector<2x512xf32> to vector<2x128xf32>
    %329 = arith.negf %328 : vector<2x128xf32>
    %330 = math.exp %329 : vector<2x128xf32>
    %cst_77 = arith.constant 1.000000e+00 : f32
    %331 = vector.broadcast %cst_77 : f32 to vector<2x128xf32>
    %332 = arith.addf %331, %330 : vector<2x128xf32>
    %333 = arith.divf %331, %332 : vector<2x128xf32>
    %334 = vector.extract_strided_slice %302 {offsets = [0, 128], sizes = [2, 128], strides = [1, 1]} : vector<2x512xf32> to vector<2x128xf32>
    %335 = arith.negf %334 : vector<2x128xf32>
    %336 = math.exp %335 : vector<2x128xf32>
    %cst_78 = arith.constant 1.000000e+00 : f32
    %337 = vector.broadcast %cst_78 : f32 to vector<2x128xf32>
    %338 = arith.addf %337, %336 : vector<2x128xf32>
    %339 = arith.divf %337, %338 : vector<2x128xf32>
    %340 = vector.extract_strided_slice %302 {offsets = [0, 256], sizes = [2, 128], strides = [1, 1]} : vector<2x512xf32> to vector<2x128xf32>
    %341 = math.tanh %340 : vector<2x128xf32>
    %342 = vector.extract_strided_slice %302 {offsets = [0, 384], sizes = [2, 128], strides = [1, 1]} : vector<2x512xf32> to vector<2x128xf32>
    %343 = arith.negf %342 : vector<2x128xf32>
    %344 = math.exp %343 : vector<2x128xf32>
    %cst_79 = arith.constant 1.000000e+00 : f32
    %345 = vector.broadcast %cst_79 : f32 to vector<2x128xf32>
    %346 = arith.addf %345, %344 : vector<2x128xf32>
    %347 = arith.divf %345, %346 : vector<2x128xf32>
    %348 = arith.mulf %339, %286 : vector<2x128xf32>
    %349 = arith.mulf %333, %341 : vector<2x128xf32>
    %350 = arith.addf %348, %349 : vector<2x128xf32>
    %351 = math.tanh %350 : vector<2x128xf32>
    %352 = arith.mulf %347, %351 : vector<2x128xf32>
    %c0_80 = arith.constant 0 : index
    %c4_81 = arith.constant 4 : index
    %c0_82 = arith.constant 0 : index
    %353 = vector.load %arg11[%c0_80, %c4_81, %c0_82] : memref<2x8x256xf32, #tpu.memory_space<vmem>>, vector<2x1x128xf32>
    %354 = vector.shape_cast %353 : vector<2x1x128xf32> to vector<2x128xf32>
    %355 = vector.shape_cast %327 : vector<2x128xf32> to vector<2x1x128xf32>
    tpu.vector_store %arg11[%c0_80, %c4_81, %c0_82], %355 {strides = array<i32>} : memref<2x8x256xf32, #tpu.memory_space<vmem>>, vector<2x1x128xf32>,
    %c0_83 = arith.constant 0 : index
    %c3_84 = arith.constant 3 : index
    %c128_85 = arith.constant 128 : index
    %356 = vector.load %arg11[%c0_83, %c3_84, %c128_85] : memref<2x8x256xf32, #tpu.memory_space<vmem>>, vector<2x1x128xf32>
    %357 = vector.shape_cast %356 : vector<2x1x128xf32> to vector<2x128xf32>
    %358 = vector.shape_cast %352 : vector<2x128xf32> to vector<2x1x128xf32>
    tpu.vector_store %arg11[%c0_83, %c3_84, %c128_85], %358 {strides = array<i32>} : memref<2x8x256xf32, #tpu.memory_space<vmem>>, vector<2x1x128xf32>,
    %359 = vector.extract_strided_slice %32 {offsets = [0, 5, 0], sizes = [2, 1, 512], strides = [1, 1, 1]} : vector<2x8x1024xf32> to vector<2x1x512xf32>
    %360 = vector.shape_cast %359 : vector<2x1x512xf32> to vector<2x512xf32>
    %cst_86 = arith.constant dense<0.000000e+00> : vector<2x512xf32>
    %361 = tpu.matmul %327, %33, %cst_86 {dimension_numbers = #tpu.dot_dimension_numbers<[1], [0], [0], [1], [0, 0, 1, 1], [], []>} : vector<2x128xf32>, vector<128x512xf32>, vector<2x512xf32> -> vector<2x512xf32>
    %362 = arith.addf %360, %361 : vector<2x512xf32>
    %363 = vector.extract_strided_slice %32 {offsets = [0, 2, 512], sizes = [2, 1, 512], strides = [1, 1, 1]} : vector<2x8x1024xf32> to vector<2x1x512xf32>
    %364 = vector.shape_cast %363 : vector<2x1x512xf32> to vector<2x512xf32>
    %cst_87 = arith.constant dense<0.000000e+00> : vector<2x512xf32>
    %365 = tpu.matmul %352, %34, %cst_87 {dimension_numbers = #tpu.dot_dimension_numbers<[1], [0], [0], [1], [0, 0, 1, 1], [], []>} : vector<2x128xf32>, vector<128x512xf32>, vector<2x512xf32> -> vector<2x512xf32>
    %366 = arith.addf %364, %365 : vector<2x512xf32>
    %367 = vector.extract_strided_slice %362 {offsets = [0, 0], sizes = [2, 128], strides = [1, 1]} : vector<2x512xf32> to vector<2x128xf32>
    %368 = arith.negf %367 : vector<2x128xf32>
    %369 = math.exp %368 : vector<2x128xf32>
    %cst_88 = arith.constant 1.000000e+00 : f32
    %370 = vector.broadcast %cst_88 : f32 to vector<2x128xf32>
    %371 = arith.addf %370, %369 : vector<2x128xf32>
    %372 = arith.divf %370, %371 : vector<2x128xf32>
    %373 = vector.extract_strided_slice %362 {offsets = [0, 128], sizes = [2, 128], strides = [1, 1]} : vector<2x512xf32> to vector<2x128xf32>
    %374 = arith.negf %373 : vector<2x128xf32>
    %375 = math.exp %374 : vector<2x128xf32>
    %cst_89 = arith.constant 1.000000e+00 : f32
    %376 = vector.broadcast %cst_89 : f32 to vector<2x128xf32>
    %377 = arith.addf %376, %375 : vector<2x128xf32>
    %378 = arith.divf %376, %377 : vector<2x128xf32>
    %379 = vector.extract_strided_slice %362 {offsets = [0, 256], sizes = [2, 128], strides = [1, 1]} : vector<2x512xf32> to vector<2x128xf32>
    %380 = math.tanh %379 : vector<2x128xf32>
    %381 = vector.extract_strided_slice %362 {offsets = [0, 384], sizes = [2, 128], strides = [1, 1]} : vector<2x512xf32> to vector<2x128xf32>
    %382 = arith.negf %381 : vector<2x128xf32>
    %383 = math.exp %382 : vector<2x128xf32>
    %cst_90 = arith.constant 1.000000e+00 : f32
    %384 = vector.broadcast %cst_90 : f32 to vector<2x128xf32>
    %385 = arith.addf %384, %383 : vector<2x128xf32>
    %386 = arith.divf %384, %385 : vector<2x128xf32>
    %387 = arith.mulf %378, %325 : vector<2x128xf32>
    %388 = arith.mulf %372, %380 : vector<2x128xf32>
    %389 = arith.addf %387, %388 : vector<2x128xf32>
    %390 = math.tanh %389 : vector<2x128xf32>
    %391 = arith.mulf %386, %390 : vector<2x128xf32>
    %392 = vector.extract_strided_slice %366 {offsets = [0, 0], sizes = [2, 128], strides = [1, 1]} : vector<2x512xf32> to vector<2x128xf32>
    %393 = arith.negf %392 : vector<2x128xf32>
    %394 = math.exp %393 : vector<2x128xf32>
    %cst_91 = arith.constant 1.000000e+00 : f32
    %395 = vector.broadcast %cst_91 : f32 to vector<2x128xf32>
    %396 = arith.addf %395, %394 : vector<2x128xf32>
    %397 = arith.divf %395, %396 : vector<2x128xf32>
    %398 = vector.extract_strided_slice %366 {offsets = [0, 128], sizes = [2, 128], strides = [1, 1]} : vector<2x512xf32> to vector<2x128xf32>
    %399 = arith.negf %398 : vector<2x128xf32>
    %400 = math.exp %399 : vector<2x128xf32>
    %cst_92 = arith.constant 1.000000e+00 : f32
    %401 = vector.broadcast %cst_92 : f32 to vector<2x128xf32>
    %402 = arith.addf %401, %400 : vector<2x128xf32>
    %403 = arith.divf %401, %402 : vector<2x128xf32>
    %404 = vector.extract_strided_slice %366 {offsets = [0, 256], sizes = [2, 128], strides = [1, 1]} : vector<2x512xf32> to vector<2x128xf32>
    %405 = math.tanh %404 : vector<2x128xf32>
    %406 = vector.extract_strided_slice %366 {offsets = [0, 384], sizes = [2, 128], strides = [1, 1]} : vector<2x512xf32> to vector<2x128xf32>
    %407 = arith.negf %406 : vector<2x128xf32>
    %408 = math.exp %407 : vector<2x128xf32>
    %cst_93 = arith.constant 1.000000e+00 : f32
    %409 = vector.broadcast %cst_93 : f32 to vector<2x128xf32>
    %410 = arith.addf %409, %408 : vector<2x128xf32>
    %411 = arith.divf %409, %410 : vector<2x128xf32>
    %412 = arith.mulf %403, %350 : vector<2x128xf32>
    %413 = arith.mulf %397, %405 : vector<2x128xf32>
    %414 = arith.addf %412, %413 : vector<2x128xf32>
    %415 = math.tanh %414 : vector<2x128xf32>
    %416 = arith.mulf %411, %415 : vector<2x128xf32>
    %c0_94 = arith.constant 0 : index
    %c5_95 = arith.constant 5 : index
    %c0_96 = arith.constant 0 : index
    %417 = vector.load %arg11[%c0_94, %c5_95, %c0_96] : memref<2x8x256xf32, #tpu.memory_space<vmem>>, vector<2x1x128xf32>
    %418 = vector.shape_cast %417 : vector<2x1x128xf32> to vector<2x128xf32>
    %419 = vector.shape_cast %391 : vector<2x128xf32> to vector<2x1x128xf32>
    tpu.vector_store %arg11[%c0_94, %c5_95, %c0_96], %419 {strides = array<i32>} : memref<2x8x256xf32, #tpu.memory_space<vmem>>, vector<2x1x128xf32>,
    %c0_97 = arith.constant 0 : index
    %c2_98 = arith.constant 2 : index
    %c128_99 = arith.constant 128 : index
    %420 = vector.load %arg11[%c0_97, %c2_98, %c128_99] : memref<2x8x256xf32, #tpu.memory_space<vmem>>, vector<2x1x128xf32>
    %421 = vector.shape_cast %420 : vector<2x1x128xf32> to vector<2x128xf32>
    %422 = vector.shape_cast %416 : vector<2x128xf32> to vector<2x1x128xf32>
    tpu.vector_store %arg11[%c0_97, %c2_98, %c128_99], %422 {strides = array<i32>} : memref<2x8x256xf32, #tpu.memory_space<vmem>>, vector<2x1x128xf32>,
    %423 = vector.extract_strided_slice %32 {offsets = [0, 6, 0], sizes = [2, 1, 512], strides = [1, 1, 1]} : vector<2x8x1024xf32> to vector<2x1x512xf32>
    %424 = vector.shape_cast %423 : vector<2x1x512xf32> to vector<2x512xf32>
    %cst_100 = arith.constant dense<0.000000e+00> : vector<2x512xf32>
    %425 = tpu.matmul %391, %33, %cst_100 {dimension_numbers = #tpu.dot_dimension_numbers<[1], [0], [0], [1], [0, 0, 1, 1], [], []>} : vector<2x128xf32>, vector<128x512xf32>, vector<2x512xf32> -> vector<2x512xf32>
    %426 = arith.addf %424, %425 : vector<2x512xf32>
    %427 = vector.extract_strided_slice %32 {offsets = [0, 1, 512], sizes = [2, 1, 512], strides = [1, 1, 1]} : vector<2x8x1024xf32> to vector<2x1x512xf32>
    %428 = vector.shape_cast %427 : vector<2x1x512xf32> to vector<2x512xf32>
    %cst_101 = arith.constant dense<0.000000e+00> : vector<2x512xf32>
    %429 = tpu.matmul %416, %34, %cst_101 {dimension_numbers = #tpu.dot_dimension_numbers<[1], [0], [0], [1], [0, 0, 1, 1], [], []>} : vector<2x128xf32>, vector<128x512xf32>, vector<2x512xf32> -> vector<2x512xf32>
    %430 = arith.addf %428, %429 : vector<2x512xf32>
    %431 = vector.extract_strided_slice %426 {offsets = [0, 0], sizes = [2, 128], strides = [1, 1]} : vector<2x512xf32> to vector<2x128xf32>
    %432 = arith.negf %431 : vector<2x128xf32>
    %433 = math.exp %432 : vector<2x128xf32>
    %cst_102 = arith.constant 1.000000e+00 : f32
    %434 = vector.broadcast %cst_102 : f32 to vector<2x128xf32>
    %435 = arith.addf %434, %433 : vector<2x128xf32>
    %436 = arith.divf %434, %435 : vector<2x128xf32>
    %437 = vector.extract_strided_slice %426 {offsets = [0, 128], sizes = [2, 128], strides = [1, 1]} : vector<2x512xf32> to vector<2x128xf32>
    %438 = arith.negf %437 : vector<2x128xf32>
    %439 = math.exp %438 : vector<2x128xf32>
    %cst_103 = arith.constant 1.000000e+00 : f32
    %440 = vector.broadcast %cst_103 : f32 to vector<2x128xf32>
    %441 = arith.addf %440, %439 : vector<2x128xf32>
    %442 = arith.divf %440, %441 : vector<2x128xf32>
    %443 = vector.extract_strided_slice %426 {offsets = [0, 256], sizes = [2, 128], strides = [1, 1]} : vector<2x512xf32> to vector<2x128xf32>
    %444 = math.tanh %443 : vector<2x128xf32>
    %445 = vector.extract_strided_slice %426 {offsets = [0, 384], sizes = [2, 128], strides = [1, 1]} : vector<2x512xf32> to vector<2x128xf32>
    %446 = arith.negf %445 : vector<2x128xf32>
    %447 = math.exp %446 : vector<2x128xf32>
    %cst_104 = arith.constant 1.000000e+00 : f32
    %448 = vector.broadcast %cst_104 : f32 to vector<2x128xf32>
    %449 = arith.addf %448, %447 : vector<2x128xf32>
    %450 = arith.divf %448, %449 : vector<2x128xf32>
    %451 = arith.mulf %442, %389 : vector<2x128xf32>
    %452 = arith.mulf %436, %444 : vector<2x128xf32>
    %453 = arith.addf %451, %452 : vector<2x128xf32>
    %454 = math.tanh %453 : vector<2x128xf32>
    %455 = arith.mulf %450, %454 : vector<2x128xf32>
    %456 = vector.extract_strided_slice %430 {offsets = [0, 0], sizes = [2, 128], strides = [1, 1]} : vector<2x512xf32> to vector<2x128xf32>
    %457 = arith.negf %456 : vector<2x128xf32>
    %458 = math.exp %457 : vector<2x128xf32>
    %cst_105 = arith.constant 1.000000e+00 : f32
    %459 = vector.broadcast %cst_105 : f32 to vector<2x128xf32>
    %460 = arith.addf %459, %458 : vector<2x128xf32>
    %461 = arith.divf %459, %460 : vector<2x128xf32>
    %462 = vector.extract_strided_slice %430 {offsets = [0, 128], sizes = [2, 128], strides = [1, 1]} : vector<2x512xf32> to vector<2x128xf32>
    %463 = arith.negf %462 : vector<2x128xf32>
    %464 = math.exp %463 : vector<2x128xf32>
    %cst_106 = arith.constant 1.000000e+00 : f32
    %465 = vector.broadcast %cst_106 : f32 to vector<2x128xf32>
    %466 = arith.addf %465, %464 : vector<2x128xf32>
    %467 = arith.divf %465, %466 : vector<2x128xf32>
    %468 = vector.extract_strided_slice %430 {offsets = [0, 256], sizes = [2, 128], strides = [1, 1]} : vector<2x512xf32> to vector<2x128xf32>
    %469 = math.tanh %468 : vector<2x128xf32>
    %470 = vector.extract_strided_slice %430 {offsets = [0, 384], sizes = [2, 128], strides = [1, 1]} : vector<2x512xf32> to vector<2x128xf32>
    %471 = arith.negf %470 : vector<2x128xf32>
    %472 = math.exp %471 : vector<2x128xf32>
    %cst_107 = arith.constant 1.000000e+00 : f32
    %473 = vector.broadcast %cst_107 : f32 to vector<2x128xf32>
    %474 = arith.addf %473, %472 : vector<2x128xf32>
    %475 = arith.divf %473, %474 : vector<2x128xf32>
    %476 = arith.mulf %467, %414 : vector<2x128xf32>
    %477 = arith.mulf %461, %469 : vector<2x128xf32>
    %478 = arith.addf %476, %477 : vector<2x128xf32>
    %479 = math.tanh %478 : vector<2x128xf32>
    %480 = arith.mulf %475, %479 : vector<2x128xf32>
    %c0_108 = arith.constant 0 : index
    %c6_109 = arith.constant 6 : index
    %c0_110 = arith.constant 0 : index
    %481 = vector.load %arg11[%c0_108, %c6_109, %c0_110] : memref<2x8x256xf32, #tpu.memory_space<vmem>>, vector<2x1x128xf32>
    %482 = vector.shape_cast %481 : vector<2x1x128xf32> to vector<2x128xf32>
    %483 = vector.shape_cast %455 : vector<2x128xf32> to vector<2x1x128xf32>
    tpu.vector_store %arg11[%c0_108, %c6_109, %c0_110], %483 {strides = array<i32>} : memref<2x8x256xf32, #tpu.memory_space<vmem>>, vector<2x1x128xf32>,
    %c0_111 = arith.constant 0 : index
    %c1_112 = arith.constant 1 : index
    %c128_113 = arith.constant 128 : index
    %484 = vector.load %arg11[%c0_111, %c1_112, %c128_113] : memref<2x8x256xf32, #tpu.memory_space<vmem>>, vector<2x1x128xf32>
    %485 = vector.shape_cast %484 : vector<2x1x128xf32> to vector<2x128xf32>
    %486 = vector.shape_cast %480 : vector<2x128xf32> to vector<2x1x128xf32>
    tpu.vector_store %arg11[%c0_111, %c1_112, %c128_113], %486 {strides = array<i32>} : memref<2x8x256xf32, #tpu.memory_space<vmem>>, vector<2x1x128xf32>,
    %487 = vector.extract_strided_slice %32 {offsets = [0, 7, 0], sizes = [2, 1, 512], strides = [1, 1, 1]} : vector<2x8x1024xf32> to vector<2x1x512xf32>
    %488 = vector.shape_cast %487 : vector<2x1x512xf32> to vector<2x512xf32>
    %cst_114 = arith.constant dense<0.000000e+00> : vector<2x512xf32>
    %489 = tpu.matmul %455, %33, %cst_114 {dimension_numbers = #tpu.dot_dimension_numbers<[1], [0], [0], [1], [0, 0, 1, 1], [], []>} : vector<2x128xf32>, vector<128x512xf32>, vector<2x512xf32> -> vector<2x512xf32>
    %490 = arith.addf %488, %489 : vector<2x512xf32>
    %491 = vector.extract_strided_slice %32 {offsets = [0, 0, 512], sizes = [2, 1, 512], strides = [1, 1, 1]} : vector<2x8x1024xf32> to vector<2x1x512xf32>
    %492 = vector.shape_cast %491 : vector<2x1x512xf32> to vector<2x512xf32>
    %cst_115 = arith.constant dense<0.000000e+00> : vector<2x512xf32>
    %493 = tpu.matmul %480, %34, %cst_115 {dimension_numbers = #tpu.dot_dimension_numbers<[1], [0], [0], [1], [0, 0, 1, 1], [], []>} : vector<2x128xf32>, vector<128x512xf32>, vector<2x512xf32> -> vector<2x512xf32>
    %494 = arith.addf %492, %493 : vector<2x512xf32>
    %495 = vector.extract_strided_slice %490 {offsets = [0, 0], sizes = [2, 128], strides = [1, 1]} : vector<2x512xf32> to vector<2x128xf32>
    %496 = arith.negf %495 : vector<2x128xf32>
    %497 = math.exp %496 : vector<2x128xf32>
    %cst_116 = arith.constant 1.000000e+00 : f32
    %498 = vector.broadcast %cst_116 : f32 to vector<2x128xf32>
    %499 = arith.addf %498, %497 : vector<2x128xf32>
    %500 = arith.divf %498, %499 : vector<2x128xf32>
    %501 = vector.extract_strided_slice %490 {offsets = [0, 128], sizes = [2, 128], strides = [1, 1]} : vector<2x512xf32> to vector<2x128xf32>
    %502 = arith.negf %501 : vector<2x128xf32>
    %503 = math.exp %502 : vector<2x128xf32>
    %cst_117 = arith.constant 1.000000e+00 : f32
    %504 = vector.broadcast %cst_117 : f32 to vector<2x128xf32>
    %505 = arith.addf %504, %503 : vector<2x128xf32>
    %506 = arith.divf %504, %505 : vector<2x128xf32>
    %507 = vector.extract_strided_slice %490 {offsets = [0, 256], sizes = [2, 128], strides = [1, 1]} : vector<2x512xf32> to vector<2x128xf32>
    %508 = math.tanh %507 : vector<2x128xf32>
    %509 = vector.extract_strided_slice %490 {offsets = [0, 384], sizes = [2, 128], strides = [1, 1]} : vector<2x512xf32> to vector<2x128xf32>
    %510 = arith.negf %509 : vector<2x128xf32>
    %511 = math.exp %510 : vector<2x128xf32>
    %cst_118 = arith.constant 1.000000e+00 : f32
    %512 = vector.broadcast %cst_118 : f32 to vector<2x128xf32>
    %513 = arith.addf %512, %511 : vector<2x128xf32>
    %514 = arith.divf %512, %513 : vector<2x128xf32>
    %515 = arith.mulf %506, %453 : vector<2x128xf32>
    %516 = arith.mulf %500, %508 : vector<2x128xf32>
    %517 = arith.addf %515, %516 : vector<2x128xf32>
    %518 = math.tanh %517 : vector<2x128xf32>
    %519 = arith.mulf %514, %518 : vector<2x128xf32>
    %520 = vector.extract_strided_slice %494 {offsets = [0, 0], sizes = [2, 128], strides = [1, 1]} : vector<2x512xf32> to vector<2x128xf32>
    %521 = arith.negf %520 : vector<2x128xf32>
    %522 = math.exp %521 : vector<2x128xf32>
    %cst_119 = arith.constant 1.000000e+00 : f32
    %523 = vector.broadcast %cst_119 : f32 to vector<2x128xf32>
    %524 = arith.addf %523, %522 : vector<2x128xf32>
    %525 = arith.divf %523, %524 : vector<2x128xf32>
    %526 = vector.extract_strided_slice %494 {offsets = [0, 128], sizes = [2, 128], strides = [1, 1]} : vector<2x512xf32> to vector<2x128xf32>
    %527 = arith.negf %526 : vector<2x128xf32>
    %528 = math.exp %527 : vector<2x128xf32>
    %cst_120 = arith.constant 1.000000e+00 : f32
    %529 = vector.broadcast %cst_120 : f32 to vector<2x128xf32>
    %530 = arith.addf %529, %528 : vector<2x128xf32>
    %531 = arith.divf %529, %530 : vector<2x128xf32>
    %532 = vector.extract_strided_slice %494 {offsets = [0, 256], sizes = [2, 128], strides = [1, 1]} : vector<2x512xf32> to vector<2x128xf32>
    %533 = math.tanh %532 : vector<2x128xf32>
    %534 = vector.extract_strided_slice %494 {offsets = [0, 384], sizes = [2, 128], strides = [1, 1]} : vector<2x512xf32> to vector<2x128xf32>
    %535 = arith.negf %534 : vector<2x128xf32>
    %536 = math.exp %535 : vector<2x128xf32>
    %cst_121 = arith.constant 1.000000e+00 : f32
    %537 = vector.broadcast %cst_121 : f32 to vector<2x128xf32>
    %538 = arith.addf %537, %536 : vector<2x128xf32>
    %539 = arith.divf %537, %538 : vector<2x128xf32>
    %540 = arith.mulf %531, %478 : vector<2x128xf32>
    %541 = arith.mulf %525, %533 : vector<2x128xf32>
    %542 = arith.addf %540, %541 : vector<2x128xf32>
    %543 = math.tanh %542 : vector<2x128xf32>
    %544 = arith.mulf %539, %543 : vector<2x128xf32>
    %c0_122 = arith.constant 0 : index
    %c7_123 = arith.constant 7 : index
    %c0_124 = arith.constant 0 : index
    %545 = vector.load %arg11[%c0_122, %c7_123, %c0_124] : memref<2x8x256xf32, #tpu.memory_space<vmem>>, vector<2x1x128xf32>
    %546 = vector.shape_cast %545 : vector<2x1x128xf32> to vector<2x128xf32>
    %547 = vector.shape_cast %519 : vector<2x128xf32> to vector<2x1x128xf32>
    tpu.vector_store %arg11[%c0_122, %c7_123, %c0_124], %547 {strides = array<i32>} : memref<2x8x256xf32, #tpu.memory_space<vmem>>, vector<2x1x128xf32>,
    %c0_125 = arith.constant 0 : index
    %c0_126 = arith.constant 0 : index
    %c128_127 = arith.constant 128 : index
    %548 = vector.load %arg11[%c0_125, %c0_126, %c128_127] : memref<2x8x256xf32, #tpu.memory_space<vmem>>, vector<2x1x128xf32>
    %549 = vector.shape_cast %548 : vector<2x1x128xf32> to vector<2x128xf32>
    %550 = vector.shape_cast %544 : vector<2x128xf32> to vector<2x1x128xf32>
    tpu.vector_store %arg11[%c0_125, %c0_126, %c128_127], %550 {strides = array<i32>} : memref<2x8x256xf32, #tpu.memory_space<vmem>>, vector<2x1x128xf32>,
    %c0_128 = arith.constant 0 : index
    %c0_129 = arith.constant 0 : index
    %c0_130 = arith.constant 0 : index
    %551 = vector.load %arg11[%c0_128, %c0_129, %c0_130] : memref<2x8x256xf32, #tpu.memory_space<vmem>>, vector<2x8x256xf32>
    "tpu.trace_start"() <{level = 10 : i32, message = "bts,bsh->bth"}> : () -> ()
    %cst_131 = arith.constant dense<0.000000e+00> : vector<2x8x256xf32>
    %552 = tpu.matmul %24, %551, %cst_131 {dimension_numbers = #tpu.dot_dimension_numbers<[2], [1], [1], [2], [0, 0, 0, 1, 1, 2], [0], [0]>} : vector<2x8x8xf32>, vector<2x8x256xf32>, vector<2x8x256xf32> -> vector<2x8x256xf32>
    "tpu.trace_stop"() : () -> ()
    %553 = tpu.concatenate %552, %551 in 2 : vector<2x8x256xf32>, vector<2x8x256xf32> -> vector<2x8x512xf32>
    %554 = vector.shape_cast %553 : vector<2x8x512xf32> to vector<16x512xf32>
    %c0_132 = arith.constant 0 : index
    %c0_133 = arith.constant 0 : index
    %555 = vector.load %arg8[%c0_132, %c0_133] : memref<512x128xf32, #tpu.memory_space<vmem>>, vector<512x128xf32>
    %cst_134 = arith.constant dense<0.000000e+00> : vector<16x128xf32>
    %556 = tpu.matmul %554, %555, %cst_134 {dimension_numbers = #tpu.dot_dimension_numbers<[1], [0], [0], [1], [0, 0, 1, 1], [], []>} : vector<16x512xf32>, vector<512x128xf32>, vector<16x128xf32> -> vector<16x128xf32>
    %c0_135 = arith.constant 0 : index
    %c0_136 = arith.constant 0 : index
    %557 = vector.load %arg9[%c0_135, %c0_136] : memref<1x128xf32, #tpu.memory_space<vmem>>, vector<1x128xf32>
    %558 = vector.broadcast %557 : vector<1x128xf32> to vector<16x128xf32>
    %559 = arith.addf %556, %558 : vector<16x128xf32>
    %560 = vector.shape_cast %559 : vector<16x128xf32> to vector<2x8x128xf32>
    %c0_137 = arith.constant 0 : index
    %c0_138 = arith.constant 0 : index
    %c0_139 = arith.constant 0 : index
    %561 = vector.load %arg10[%c0_137, %c0_138, %c0_139] : memref<2x8x128xf32, #tpu.memory_space<vmem>>, vector<2x8x128xf32>
    tpu.vector_store %arg10[%c0_137, %c0_138, %c0_139], %560 {strides = array<i32>} : memref<2x8x128xf32, #tpu.memory_space<vmem>>, vector<2x8x128xf32>,
    return
  }
}

</mosaic_0001>

<llo_original>
// kernel: tpu_custom_call.1
$region0: #{tpu_custom_call.1}
  #allocation0 [shape = 'u32[]', space=smem, size = 0x4, offset = 0x4, fixed_abs, tag = 'smem constant byte address 0x4 - core index']
  #allocation1 [shape = 'u32[144,128]{1,0:T(1,128)}', space=vmem, size = 0x12000, scoped, tag = 'internal scratch']
  #allocation2 [shape = 'f32[2,8,256]{2,1,0:T(8,128)}', space=vmem, size = 0x4000, scoped, tag = 'scratch operand']
  %s0 = inlined_call_operand.hbm [shape: f32[2,8,64], index: 0, kind: input, shape index: {}]
  %s1 = inlined_call_operand.hbm [shape: f32[2,8,32], index: 1, kind: input, shape index: {}]
  %s2 = inlined_call_operand.hbm [shape: f32[64,128], index: 2, kind: input, shape index: {}]
  %s3 = inlined_call_operand.vmem [shape: f32[1,128], index: 3, kind: input, shape index: {}]
  %s4 = inlined_call_operand.hbm [shape: f32[32,1024], index: 4, kind: input, shape index: {}]
  %s5 = inlined_call_operand.vmem [shape: f32[1,1024], index: 5, kind: input, shape index: {}]
  %s6 = inlined_call_operand.hbm [shape: f32[128,512], index: 6, kind: input, shape index: {}]
  %s7 = inlined_call_operand.hbm [shape: f32[128,512], index: 7, kind: input, shape index: {}]
  %s8 = inlined_call_operand.hbm [shape: f32[512,128], index: 8, kind: input, shape index: {}]
  %s9 = inlined_call_operand.vmem [shape: f32[1,128], index: 9, kind: input, shape index: {}]
  %s10 = inlined_call_operand.hbm [shape: f32[2,8,128], index: 10, kind: output, shape index: {}]
  %s11 = sld [smem:[#allocation0]]
  $region78: #{tpu_custom_call.1} parent=0
    _
  %s13 = ssub.s32 1, %s11
  %s14 = scalar_select 0, %s13, %s11
  $region1: #{tpu_custom_call.1} parent=0
    #allocation3 [shape = 'u8[8192]{0}', space=vmem, size = 0x2000, scoped, tag = 'input window, operand 0, single buffered']
    #allocation4 [shape = 's32[1]{0}', space=sflag, size = 0x4, scoped, tag = 'scoped memory for tpu_custom_call.1']
    #allocation5 [shape = 's32[1]{0}', space=sflag, size = 0x4, scoped, tag = 'scoped memory for tpu_custom_call.1']
    #allocation6 [shape = 'u8[8192]{0}', space=vmem, size = 0x2000, scoped, tag = 'input window, operand 1, single buffered']
    #allocation7 [shape = 's32[1]{0}', space=sflag, size = 0x4, scoped, tag = 'scoped memory for tpu_custom_call.1']
    #allocation8 [shape = 'u8[32768]{0}', space=vmem, size = 0x8000, scoped, tag = 'input window, operand 2, single buffered']
    #allocation9 [shape = 'u8[131072]{0}', space=vmem, size = 0x20000, scoped, tag = 'input window, operand 4, single buffered']
    #allocation10 [shape = 's32[1]{0}', space=sflag, size = 0x4, scoped, tag = 'scoped memory for tpu_custom_call.1']
    #allocation11 [shape = 'u8[262144]{0}', space=vmem, size = 0x40000, scoped, tag = 'input window, operand 6, single buffered']
    #allocation12 [shape = 'u8[262144]{0}', space=vmem, size = 0x40000, scoped, tag = 'input window, operand 7, single buffered']
    #allocation13 [shape = 's32[1]{0}', space=sflag, size = 0x4, scoped, tag = 'scoped memory for tpu_custom_call.1']
    #allocation14 [shape = 'u8[262144]{0}', space=vmem, size = 0x40000, scoped, tag = 'input window, operand 8, single buffered']
    #allocation15 [shape = 'u8[8192]{0}', space=vmem, size = 0x2000, scoped, tag = 'output window, operand 0, single buffered']
    %15 = vsyncpa [#allocation4], 0
    %16 = vsyncpa [#allocation7], 0
    %17 = vsyncpa [#allocation10], 0
    %18 = vsyncpa [#allocation13], 0
    %19 = vsyncpa [#allocation5], 0
    // Predicated region
    $region2: #{tpu_custom_call.1} parent=1 // pred_check
      _
    $region3: #{tpu_custom_call.1} parent=1 // pred_check_branch
      %21 = sbr.rel (0) target = $region5
    $region4: #{tpu_custom_call.1} parent=1 // pred_region
      %s23 = ssub.s32 256, 256
      %24 = vsyncadd [#allocation4], %s23
      %s25 = sshll.u32 [#allocation3], 4
      %s26 = int_to_ptr.vmem [resolvable:$true] %s25
      %31 = dma.hbm_to_vmem [thread:$0]  %s0, 256, %s26, [#allocation4], 128, 128, 8
    $region5: #{tpu_custom_call.1} parent=1 // pred_fallthru
      _
    // Predicated region
    $region6: #{tpu_custom_call.1} parent=1 // pred_check
      _
    $region7: #{tpu_custom_call.1} parent=1 // pred_check_branch
      %33 = sbr.rel (0) target = $region9
    $region8: #{tpu_custom_call.1} parent=1 // pred_region
      %s35 = ssub.s32 256, 256
      %36 = vsyncadd [#allocation7], %s35
      %s37 = sshll.u32 [#allocation6], 4
      %s38 = int_to_ptr.vmem [resolvable:$true] %s37
      %43 = dma.hbm_to_vmem [thread:$0]  %s1, 256, %s38, [#allocation7], 128, 128, 8
    $region9: #{tpu_custom_call.1} parent=1 // pred_fallthru
      _
    // Predicated region
    $region10: #{tpu_custom_call.1} parent=1 // pred_check
      _
    $region11: #{tpu_custom_call.1} parent=1 // pred_check_branch
      %45 = sbr.rel (0) target = $region13
    $region12: #{tpu_custom_call.1} parent=1 // pred_region
      %s47 = ssub.s32 1024, 1024
      %48 = vsyncadd [#allocation7], %s47
      %s49 = sshll.u32 [#allocation8], 4
      %s50 = int_to_ptr.vmem [resolvable:$true] %s49
      %55 = dma.hbm_to_vmem [thread:$0]  %s2, 1024, %s50, [#allocation7], 128, 128, 8
    $region13: #{tpu_custom_call.1} parent=1 // pred_fallthru
      _
    // Predicated region
    $region14: #{tpu_custom_call.1} parent=1 // pred_check
      _
    $region15: #{tpu_custom_call.1} parent=1 // pred_check_branch
      %57 = sbr.rel (0) target = $region17
    $region16: #{tpu_custom_call.1} parent=1 // pred_region
      _
    $region17: #{tpu_custom_call.1} parent=1 // pred_fallthru
      _
    // Predicated region
    $region18: #{tpu_custom_call.1} parent=1 // pred_check
      _
    $region19: #{tpu_custom_call.1} parent=1 // pred_check_branch
      %59 = sbr.rel (0) target = $region21
    $region20: #{tpu_custom_call.1} parent=1 // pred_region
      %s61 = ssub.s32 4096, 4096
      %62 = vsyncadd [#allocation10], %s61
      %s63 = sshll.u32 [#allocation9], 4
      %s64 = int_to_ptr.vmem [resolvable:$true] %s63
      %69 = dma.hbm_to_vmem [thread:$0]  %s4, 4096, %s64, [#allocation10], 1024, 1024, 64
    $region21: #{tpu_custom_call.1} parent=1 // pred_fallthru
      _
    // Predicated region
    $region22: #{tpu_custom_call.1} parent=1 // pred_check
      _
    $region23: #{tpu_custom_call.1} parent=1 // pred_check_branch
      %71 = sbr.rel (0) target = $region25
    $region24: #{tpu_custom_call.1} parent=1 // pred_region
      _
    $region25: #{tpu_custom_call.1} parent=1 // pred_fallthru
      _
    // Predicated region
    $region26: #{tpu_custom_call.1} parent=1 // pred_check
      _
    $region27: #{tpu_custom_call.1} parent=1 // pred_check_branch
      %73 = sbr.rel (0) target = $region29
    $region28: #{tpu_custom_call.1} parent=1 // pred_region
      %s75 = ssub.s32 8192, 8192
      %76 = vsyncadd [#allocation10], %s75
      %s77 = sshll.u32 [#allocation11], 4
      %s78 = int_to_ptr.vmem [resolvable:$true] %s77
      %83 = dma.hbm_to_vmem [thread:$0]  %s6, 8192, %s78, [#allocation10], 512, 512, 32
    $region29: #{tpu_custom_call.1} parent=1 // pred_fallthru
      _
    // Predicated region
    $region30: #{tpu_custom_call.1} parent=1 // pred_check
      _
    $region31: #{tpu_custom_call.1} parent=1 // pred_check_branch
      %85 = sbr.rel (0) target = $region33
    $region32: #{tpu_custom_call.1} parent=1 // pred_region
      %s87 = ssub.s32 8192, 8192
      %88 = vsyncadd [#allocation13], %s87
      %s89 = sshll.u32 [#allocation12], 4
      %s90 = int_to_ptr.vmem [resolvable:$true] %s89
      %95 = dma.hbm_to_vmem [thread:$0]  %s7, 8192, %s90, [#allocation13], 512, 512, 32
    $region33: #{tpu_custom_call.1} parent=1 // pred_fallthru
      _
    // Predicated region
    $region34: #{tpu_custom_call.1} parent=1 // pred_check
      _
    $region35: #{tpu_custom_call.1} parent=1 // pred_check_branch
      %97 = sbr.rel (0) target = $region37
    $region36: #{tpu_custom_call.1} parent=1 // pred_region
      %s99 = ssub.s32 8192, 8192
      %100 = vsyncadd [#allocation13], %s99
      %s101 = sshll.u32 [#allocation14], 4
      %s102 = int_to_ptr.vmem [resolvable:$true] %s101
      %107 = dma.hbm_to_vmem [thread:$0]  %s8, 8192, %s102, [#allocation13], 128, 128, 8
    $region37: #{tpu_custom_call.1} parent=1 // pred_fallthru
      _
    // Predicated region
    $region38: #{tpu_custom_call.1} parent=1 // pred_check
      _
    $region39: #{tpu_custom_call.1} parent=1 // pred_check_branch
      %109 = sbr.rel (0) target = $region41
    $region40: #{tpu_custom_call.1} parent=1 // pred_region
      _
    $region41: #{tpu_custom_call.1} parent=1 // pred_fallthru
      _
    // Predicated region
    $region42: #{tpu_custom_call.1} parent=1 // pred_check
      _
    $region43: #{tpu_custom_call.1} parent=1 // pred_check_branch
      %111 = sbr.rel (0) target = $region45
    $region44: #{tpu_custom_call.1} parent=1 // pred_region
      %112 = dma.done [#allocation4], 256
    $region45: #{tpu_custom_call.1} parent=1 // pred_fallthru
      _
    // Predicated region
    $region46: #{tpu_custom_call.1} parent=1 // pred_check
      _
    $region47: #{tpu_custom_call.1} parent=1 // pred_check_branch
      %114 = sbr.rel (0) target = $region49
    $region48: #{tpu_custom_call.1} parent=1 // pred_region
      %115 = dma.done [#allocation7], 256
    $region49: #{tpu_custom_call.1} parent=1 // pred_fallthru
      _
    // Predicated region
    $region50: #{tpu_custom_call.1} parent=1 // pred_check
      _
    $region51: #{tpu_custom_call.1} parent=1 // pred_check_branch
      %117 = sbr.rel (0) target = $region53
    $region52: #{tpu_custom_call.1} parent=1 // pred_region
      %118 = dma.done [#allocation7], 1024
    $region53: #{tpu_custom_call.1} parent=1 // pred_fallthru
      _
    // Predicated region
    $region54: #{tpu_custom_call.1} parent=1 // pred_check
      _
    $region55: #{tpu_custom_call.1} parent=1 // pred_check_branch
      %120 = sbr.rel (0) target = $region57
    $region56: #{tpu_custom_call.1} parent=1 // pred_region
      %121 = dma.done [#allocation10], 4096
    $region57: #{tpu_custom_call.1} parent=1 // pred_fallthru
      _
    // Predicated region
    $region58: #{tpu_custom_call.1} parent=1 // pred_check
      _
    $region59: #{tpu_custom_call.1} parent=1 // pred_check_branch
      %123 = sbr.rel (0) target = $region61
    $region60: #{tpu_custom_call.1} parent=1 // pred_region
      %124 = dma.done [#allocation10], 8192
    $region61: #{tpu_custom_call.1} parent=1 // pred_fallthru
      _
    // Predicated region
    $region62: #{tpu_custom_call.1} parent=1 // pred_check
      _
    $region63: #{tpu_custom_call.1} parent=1 // pred_check_branch
      %126 = sbr.rel (0) target = $region65
    $region64: #{tpu_custom_call.1} parent=1 // pred_region
      %127 = dma.done [#allocation13], 8192
    $region65: #{tpu_custom_call.1} parent=1 // pred_fallthru
      _
    // Predicated region
    $region66: #{tpu_custom_call.1} parent=1 // pred_check
      _
    $region67: #{tpu_custom_call.1} parent=1 // pred_check_branch
      %129 = sbr.rel (0) target = $region69
    $region68: #{tpu_custom_call.1} parent=1 // pred_region
      %130 = dma.done [#allocation13], 8192
    $region69: #{tpu_custom_call.1} parent=1 // pred_fallthru
      _
    %v131 = vld [vmem:[#allocation3] sm:$0xff]
    %v132 = vld [vmem:[#allocation3 + $0x8] sm:$0xff]
    %v133 = vld [vmem:[#allocation8] sm:$0xff]
    %v134 = vld [vmem:[#allocation8 + $0x8] sm:$0xff]
    %v135 = vld [vmem:[#allocation8 + $0x10] sm:$0xff]
    %v136 = vld [vmem:[#allocation8 + $0x18] sm:$0xff]
    %v137 = vld [vmem:[#allocation8 + $0x20] sm:$0xff]
    %v138 = vld [vmem:[#allocation8 + $0x28] sm:$0xff]
    %v139 = vld [vmem:[#allocation8 + $0x30] sm:$0xff]
    %v140 = vld [vmem:[#allocation8 + $0x38] sm:$0xff]
    %v141 = vld [vmem:[%s3] sm:$0x1]
    %v143 = vlaneseq
    %v144 = vshrl.u32 %v143, 7
    %v145 = vsub.s32 0, %v144
    %v146 = vrot.slane %v141, %v145
    %vm148 = vcmask 523264
    %v150 = vsel %vm148, %v131, 0
    %v153 = vsel %vm148, %v132, 0
    %155 = vmatprep.subr.mxu0 0.0
    %156 = vmatpush1.msra.mxu0 %v133
    %157 = vmatprep.subr.mxu0 0.0
    %158 = vmatpush1.msra.mxu0 %v134
    %159 = vmatprep.subr.mxu0 0.0
    %160 = vmatpush1.msra.mxu0 %v135
    %161 = vmatprep.subr.mxu0 0.0
    %162 = vmatpush1.msra.mxu0 %v136
    %163 = vmatprep.subr.mxu0 0.0
    %164 = vmatpush1.msra.mxu0 %v137
    %165 = vmatprep.subr.mxu0 0.0
    %166 = vmatpush1.msra.mxu0 %v138
    %167 = vmatprep.subr.mxu0 0.0
    %168 = vmatpush1.msra.mxu0 %v139
    %169 = vmatprep.subr.mxu0 0.0
    %170 = vmatpush1.msra.mxu0 %v140
    %171 = vmatprep.subr.mxu0 0.0
    %172 = vmatpush1.msra.mxu0 0.0
    %173 = vmatprep.subr.mxu0 0.0
    %174 = vmatpush1.msra.mxu0 0.0
    %175 = vmatprep.subr.mxu0 0.0
    %176 = vmatpush1.msra.mxu0 0.0
    %177 = vmatprep.subr.mxu0 0.0
    %178 = vmatpush1.msra.mxu0 0.0
    %179 = vmatprep.subr.mxu0 0.0
    %180 = vmatpush1.msra.mxu0 0.0
    %181 = vmatprep.subr.mxu0 0.0
    %182 = vmatpush1.msra.mxu0 0.0
    %183 = vmatprep.subr.mxu0 0.0
    %184 = vmatpush1.msra.mxu0 0.0
    %185 = vmatprep.subr.mxu0 0.0
    %186 = vmatpush1.msra.mxu0 0.0
    %187 = vmatprep.subr.mxu0 0.0
    %188 = vmatpush1.msra.mxu0 0.0
    %189 = vmatprep.subr.mxu0 0.0
    %190 = vmatpush1.msra.mxu0 0.0
    %191 = vmatprep.subr.mxu0 0.0
    %192 = vmatpush1.msra.mxu0 0.0
    %193 = vmatprep.subr.mxu0 0.0
    %194 = vmatpush1.msra.mxu0 0.0
    %195 = vmatprep.subr.mxu0 0.0
    %196 = vmatpush1.msra.mxu0 0.0
    %197 = vmatprep.subr.mxu0 0.0
    %198 = vmatpush1.msra.mxu0 0.0
    %199 = vmatprep.subr.mxu0 0.0
    %200 = vmatpush1.msra.mxu0 0.0
    %201 = vmatprep.subr.mxu0 0.0
    %202 = vmatpush1.msra.mxu0 0.0
    %203 = vmatprep.subr.mxu0 0.0
    %204 = vmatpush1.msra.mxu0 0.0
    %205 = vmatprep.subr.mxu0 0.0
    %206 = vmatpush1.msra.mxu0 0.0
    %207 = vmatprep.subr.mxu0 0.0
    %208 = vmatpush1.msra.mxu0 0.0
    %209 = vmatprep.subr.mxu0 0.0
    %210 = vmatpush1.msra.mxu0 0.0
    %211 = vmatprep.subr.mxu0 0.0
    %212 = vmatpush1.msra.mxu0 0.0
    %213 = vmatprep.subr.mxu0 0.0
    %214 = vmatpush1.msra.mxu0 0.0
    %215 = vmatprep.subr.mxu0 0.0
    %216 = vmatpush1.msra.mxu0 0.0
    %217 = vmatprep.subr.mxu0 0.0
    %218 = vmatpush1.msra.mxu0 0.0
    %219 = vmatprep.mubr.f32.mxu0 0.0
    %220 = vmatmul.mubr.f32.gmra.mrb[0].mxu0 %v150
    %v221 = vpop.f32.mrb[0].mxu0
    %v222 = vadd.f32 %v146, %v221
    %v223 = vpop.f32.mrb[0].mxu0
    %224 = vmatprep.mubr.f32.mxu0 0.0
    %225 = vmatmul.mubr.f32.gmra.mrb[0].mxu0 %v153
    %v226 = vpop.f32.mrb[0].mxu0
    %v227 = vadd.f32 %v146, %v226
    %v228 = vpop.f32.mrb[0].mxu0
    %229 = vdwg.mxu0
    %230 = vmax.xlane.f32.xlu0 %v222
    %v231 = vpop.xlane.xlu0 %230
    %232 = vmax.xlane.f32.xlu0 %v227
    %v233 = vpop.xlane.xlu0 %232
    %v234 = vsub.f32 %v222, %v231
    %v235 = vsub.f32 %v227, %v233
    %v236 = vlaneseq
    %v237 = vand.u32 %v236, 127
    %v238 = vmul.f32 %v234, 1.442695
    %v239 = vpow.pop %v238
    %v240 = vmul.f32 %v235, 1.442695
    %v241 = vpow.pop %v240
    %vm242 = vcmp.lt.s32.totalorder %v237, 50
    %v243 = vsel %vm242, 1, 0
    %v244 = vcvt.s32.f32 %v243
    %v245 = vmul.f32 %v239, %v244
    %v246 = vmul.f32 %v241, %v244
    %247 = vadd.xlane.f32.xlu0 %v245
    %v248 = vpop.xlane.xlu0 %247
    %249 = vadd.xlane.f32.xlu0 %v246
    %v250 = vpop.xlane.xlu0 %249
    %v251 = vrcp.pop %v248
    %v252 = vrcp.pop %v250
    %v253 = vmul.f32 %v245, %v251
    %v254 = vmul.f32 %v246, %v252
    %v255 = vld [vmem:[#allocation6] sm:$0xff]
    %v256 = vld [vmem:[#allocation6 + $0x8] sm:$0xff]
    %v257 = vld [vmem:[#allocation9] sm:$0xff]
    %v258 = vld [vmem:[#allocation9 + $0x8] sm:$0xff]
    %v259 = vld [vmem:[#allocation9 + $0x10] sm:$0xff]
    %v260 = vld [vmem:[#allocation9 + $0x18] sm:$0xff]
    %v261 = vld [vmem:[#allocation9 + $0x20] sm:$0xff]
    %v262 = vld [vmem:[#allocation9 + $0x28] sm:$0xff]
    %v263 = vld [vmem:[#allocation9 + $0x30] sm:$0xff]
    %v264 = vld [vmem:[#allocation9 + $0x38] sm:$0xff]
    %v265 = vld [vmem:[#allocation9 + $0x40] sm:$0xff]
    %v266 = vld [vmem:[#allocation9 + $0x48] sm:$0xff]
    %v267 = vld [vmem:[#allocation9 + $0x50] sm:$0xff]
    %v268 = vld [vmem:[#allocation9 + $0x58] sm:$0xff]
    %v269 = vld [vmem:[#allocation9 + $0x60] sm:$0xff]
    %v270 = vld [vmem:[#allocation9 + $0x68] sm:$0xff]
    %v271 = vld [vmem:[#allocation9 + $0x70] sm:$0xff]
    %v272 = vld [vmem:[#allocation9 + $0x78] sm:$0xff]
    %v273 = vld [vmem:[#allocation9 + $0x80] sm:$0xff]
    %v274 = vld [vmem:[#allocation9 + $0x88] sm:$0xff]
    %v275 = vld [vmem:[#allocation9 + $0x90] sm:$0xff]
    %v276 = vld [vmem:[#allocation9 + $0x98] sm:$0xff]
    %v277 = vld [vmem:[#allocation9 + $0xa0] sm:$0xff]
    %v278 = vld [vmem:[#allocation9 + $0xa8] sm:$0xff]
    %v279 = vld [vmem:[#allocation9 + $0xb0] sm:$0xff]
    %v280 = vld [vmem:[#allocation9 + $0xb8] sm:$0xff]
    %v281 = vld [vmem:[#allocation9 + $0xc0] sm:$0xff]
    %v282 = vld [vmem:[#allocation9 + $0xc8] sm:$0xff]
    %v283 = vld [vmem:[#allocation9 + $0xd0] sm:$0xff]
    %v284 = vld [vmem:[#allocation9 + $0xd8] sm:$0xff]
    %v285 = vld [vmem:[#allocation9 + $0xe0] sm:$0xff]
    %v286 = vld [vmem:[#allocation9 + $0xe8] sm:$0xff]
    %v287 = vld [vmem:[#allocation9 + $0xf0] sm:$0xff]
    %v288 = vld [vmem:[#allocation9 + $0xf8] sm:$0xff]
    %v289 = vld [vmem:[%s5] sm:$0xff]
    %v291 = vlaneseq
    %v292 = vshrl.u32 %v291, 7
    %v293 = vsub.s32 0, %v292
    %v294 = vrot.slane %v289, %v293
    %v295 = vlaneseq
    %v296 = vshrl.u32 %v295, 7
    %v297 = vsub.s32 1, %v296
    %v298 = vrot.slane %v289, %v297
    %v299 = vlaneseq
    %v300 = vshrl.u32 %v299, 7
    %v301 = vsub.s32 2, %v300
    %v302 = vrot.slane %v289, %v301
    %v303 = vlaneseq
    %v304 = vshrl.u32 %v303, 7
    %v305 = vsub.s32 3, %v304
    %v306 = vrot.slane %v289, %v305
    %v307 = vlaneseq
    %v308 = vshrl.u32 %v307, 7
    %v309 = vsub.s32 4, %v308
    %v310 = vrot.slane %v289, %v309
    %v311 = vlaneseq
    %v312 = vshrl.u32 %v311, 7
    %v313 = vsub.s32 5, %v312
    %v314 = vrot.slane %v289, %v313
    %v315 = vlaneseq
    %v316 = vshrl.u32 %v315, 7
    %v317 = vsub.s32 6, %v316
    %v318 = vrot.slane %v289, %v317
    %v319 = vlaneseq
    %v320 = vshrl.u32 %v319, 7
    %v321 = vsub.s32 7, %v320
    %v322 = vrot.slane %v289, %v321
    %vm331 = vcmask 261120
    %v333 = vsel %vm331, %v255, 0
    %v336 = vsel %vm331, %v256, 0
    %338 = vmatprep.subr.mxu0 %v258
    %339 = vmatpush1.msra.mxu0 %v257
    %340 = vmatprep.subr.mxu0 %v266
    %341 = vmatpush1.msra.mxu0 %v265
    %342 = vmatprep.subr.mxu0 %v274
    %343 = vmatpush1.msra.mxu0 %v273
    %344 = vmatprep.subr.mxu0 %v282
    %345 = vmatpush1.msra.mxu0 %v281
    %346 = vmatprep.subr.mxu0 0.0
    %347 = vmatpush1.msra.mxu0 0.0
    %348 = vmatprep.subr.mxu0 0.0
    %349 = vmatpush1.msra.mxu0 0.0
    %350 = vmatprep.subr.mxu0 0.0
    %351 = vmatpush1.msra.mxu0 0.0
    %352 = vmatprep.subr.mxu0 0.0
    %353 = vmatpush1.msra.mxu0 0.0
    %354 = vmatprep.subr.mxu0 0.0
    %355 = vmatpush1.msra.mxu0 0.0
    %356 = vmatprep.subr.mxu0 0.0
    %357 = vmatpush1.msra.mxu0 0.0
    %358 = vmatprep.subr.mxu0 0.0
    %359 = vmatpush1.msra.mxu0 0.0
    %360 = vmatprep.subr.mxu0 0.0
    %361 = vmatpush1.msra.mxu0 0.0
    %362 = vmatprep.subr.mxu0 0.0
    %363 = vmatpush1.msra.mxu0 0.0
    %364 = vmatprep.subr.mxu0 0.0
    %365 = vmatpush1.msra.mxu0 0.0
    %366 = vmatprep.subr.mxu0 0.0
    %367 = vmatpush1.msra.mxu0 0.0
    %368 = vmatprep.subr.mxu0 0.0
    %369 = vmatpush1.msra.mxu0 0.0
    %370 = vmatprep.subr.mxu0 0.0
    %371 = vmatpush1.msra.mxu0 0.0
    %372 = vmatprep.subr.mxu0 0.0
    %373 = vmatpush1.msra.mxu0 0.0
    %374 = vmatprep.subr.mxu0 0.0
    %375 = vmatpush1.msra.mxu0 0.0
    %376 = vmatprep.subr.mxu0 0.0
    %377 = vmatpush1.msra.mxu0 0.0
    %378 = vmatprep.subr.mxu0 0.0
    %379 = vmatpush1.msra.mxu0 0.0
    %380 = vmatprep.subr.mxu0 0.0
    %381 = vmatpush1.msra.mxu0 0.0
    %382 = vmatprep.subr.mxu0 0.0
    %383 = vmatpush1.msra.mxu0 0.0
    %384 = vmatprep.subr.mxu0 0.0
    %385 = vmatpush1.msra.mxu0 0.0
    %386 = vmatprep.subr.mxu0 0.0
    %387 = vmatpush1.msra.mxu0 0.0
    %388 = vmatprep.subr.mxu0 0.0
    %389 = vmatpush1.msra.mxu0 0.0
    %390 = vmatprep.subr.mxu0 0.0
    %391 = vmatpush1.msra.mxu0 0.0
    %392 = vmatprep.subr.mxu0 0.0
    %393 = vmatpush1.msra.mxu0 0.0
    %394 = vmatprep.subr.mxu0 0.0
    %395 = vmatpush1.msra.mxu0 0.0
    %396 = vmatprep.subr.mxu0 0.0
    %397 = vmatpush1.msra.mxu0 0.0
    %398 = vmatprep.subr.mxu0 0.0
    %399 = vmatpush1.msra.mxu0 0.0
    %400 = vmatprep.subr.mxu0 0.0
    %401 = vmatpush1.msra.mxu0 0.0
    %402 = vmatprep.mubr.f32.mxu0 0.0
    %403 = vmatmul.mubr.f32.gmra.mrb[0].mxu0 %v333
    %v404 = vpop.f32.mrb[0].mxu0
    %v405 = vadd.f32 %v294, %v404
    %v406 = vpop.f32.mrb[0].mxu0
    %v407 = vadd.f32 %v298, %v406
    %408 = vmatprep.mubr.f32.mxu0 0.0
    %409 = vmatmul.mubr.f32.gmra.mrb[0].mxu0 %v336
    %v410 = vpop.f32.mrb[0].mxu0
    %v411 = vadd.f32 %v294, %v410
    %v412 = vpop.f32.mrb[0].mxu0
    %v413 = vadd.f32 %v298, %v412
    %414 = vdwg.mxu0
    %415 = vmatprep.subr.mxu0 %v260
    %416 = vmatpush1.msra.mxu0 %v259
    %417 = vmatprep.subr.mxu0 %v268
    %418 = vmatpush1.msra.mxu0 %v267
    %419 = vmatprep.subr.mxu0 %v276
    %420 = vmatpush1.msra.mxu0 %v275
    %421 = vmatprep.subr.mxu0 %v284
    %422 = vmatpush1.msra.mxu0 %v283
    %423 = vmatprep.subr.mxu0 0.0
    %424 = vmatpush1.msra.mxu0 0.0
    %425 = vmatprep.subr.mxu0 0.0
    %426 = vmatpush1.msra.mxu0 0.0
    %427 = vmatprep.subr.mxu0 0.0
    %428 = vmatpush1.msra.mxu0 0.0
    %429 = vmatprep.subr.mxu0 0.0
    %430 = vmatpush1.msra.mxu0 0.0
    %431 = vmatprep.subr.mxu0 0.0
    %432 = vmatpush1.msra.mxu0 0.0
    %433 = vmatprep.subr.mxu0 0.0
    %434 = vmatpush1.msra.mxu0 0.0
    %435 = vmatprep.subr.mxu0 0.0
    %436 = vmatpush1.msra.mxu0 0.0
    %437 = vmatprep.subr.mxu0 0.0
    %438 = vmatpush1.msra.mxu0 0.0
    %439 = vmatprep.subr.mxu0 0.0
    %440 = vmatpush1.msra.mxu0 0.0
    %441 = vmatprep.subr.mxu0 0.0
    %442 = vmatpush1.msra.mxu0 0.0
    %443 = vmatprep.subr.mxu0 0.0
    %444 = vmatpush1.msra.mxu0 0.0
    %445 = vmatprep.subr.mxu0 0.0
    %446 = vmatpush1.msra.mxu0 0.0
    %447 = vmatprep.subr.mxu0 0.0
    %448 = vmatpush1.msra.mxu0 0.0
    %449 = vmatprep.subr.mxu0 0.0
    %450 = vmatpush1.msra.mxu0 0.0
    %451 = vmatprep.subr.mxu0 0.0
    %452 = vmatpush1.msra.mxu0 0.0
    %453 = vmatprep.subr.mxu0 0.0
    %454 = vmatpush1.msra.mxu0 0.0
    %455 = vmatprep.subr.mxu0 0.0
    %456 = vmatpush1.msra.mxu0 0.0
    %457 = vmatprep.subr.mxu0 0.0
    %458 = vmatpush1.msra.mxu0 0.0
    %459 = vmatprep.subr.mxu0 0.0
    %460 = vmatpush1.msra.mxu0 0.0
    %461 = vmatprep.subr.mxu0 0.0
    %462 = vmatpush1.msra.mxu0 0.0
    %463 = vmatprep.subr.mxu0 0.0
    %464 = vmatpush1.msra.mxu0 0.0
    %465 = vmatprep.subr.mxu0 0.0
    %466 = vmatpush1.msra.mxu0 0.0
    %467 = vmatprep.subr.mxu0 0.0
    %468 = vmatpush1.msra.mxu0 0.0
    %469 = vmatprep.subr.mxu0 0.0
    %470 = vmatpush1.msra.mxu0 0.0
    %471 = vmatprep.subr.mxu0 0.0
    %472 = vmatpush1.msra.mxu0 0.0
    %473 = vmatprep.subr.mxu0 0.0
    %474 = vmatpush1.msra.mxu0 0.0
    %475 = vmatprep.subr.mxu0 0.0
    %476 = vmatpush1.msra.mxu0 0.0
    %477 = vmatprep.subr.mxu0 0.0
    %478 = vmatpush1.msra.mxu0 0.0
    %479 = vmatprep.mubr.f32.mxu0 0.0
    %480 = vmatmul.mubr.f32.gmra.mrb[0].mxu0 %v333
    %v481 = vpop.f32.mrb[0].mxu0
    %v482 = vadd.f32 %v302, %v481
    %v483 = vpop.f32.mrb[0].mxu0
    %v484 = vadd.f32 %v306, %v483
    %485 = vmatprep.mubr.f32.mxu0 0.0
    %486 = vmatmul.mubr.f32.gmra.mrb[0].mxu0 %v336
    %v487 = vpop.f32.mrb[0].mxu0
    %v488 = vadd.f32 %v302, %v487
    %v489 = vpop.f32.mrb[0].mxu0
    %v490 = vadd.f32 %v306, %v489
    %491 = vdwg.mxu0
    %492 = vmatprep.subr.mxu0 %v262
    %493 = vmatpush1.msra.mxu0 %v261
    %494 = vmatprep.subr.mxu0 %v270
    %495 = vmatpush1.msra.mxu0 %v269
    %496 = vmatprep.subr.mxu0 %v278
    %497 = vmatpush1.msra.mxu0 %v277
    %498 = vmatprep.subr.mxu0 %v286
    %499 = vmatpush1.msra.mxu0 %v285
    %500 = vmatprep.subr.mxu0 0.0
    %501 = vmatpush1.msra.mxu0 0.0
    %502 = vmatprep.subr.mxu0 0.0
    %503 = vmatpush1.msra.mxu0 0.0
    %504 = vmatprep.subr.mxu0 0.0
    %505 = vmatpush1.msra.mxu0 0.0
    %506 = vmatprep.subr.mxu0 0.0
    %507 = vmatpush1.msra.mxu0 0.0
    %508 = vmatprep.subr.mxu0 0.0
    %509 = vmatpush1.msra.mxu0 0.0
    %510 = vmatprep.subr.mxu0 0.0
    %511 = vmatpush1.msra.mxu0 0.0
    %512 = vmatprep.subr.mxu0 0.0
    %513 = vmatpush1.msra.mxu0 0.0
    %514 = vmatprep.subr.mxu0 0.0
    %515 = vmatpush1.msra.mxu0 0.0
    %516 = vmatprep.subr.mxu0 0.0
    %517 = vmatpush1.msra.mxu0 0.0
    %518 = vmatprep.subr.mxu0 0.0
    %519 = vmatpush1.msra.mxu0 0.0
    %520 = vmatprep.subr.mxu0 0.0
    %521 = vmatpush1.msra.mxu0 0.0
    %522 = vmatprep.subr.mxu0 0.0
    %523 = vmatpush1.msra.mxu0 0.0
    %524 = vmatprep.subr.mxu0 0.0
    %525 = vmatpush1.msra.mxu0 0.0
    %526 = vmatprep.subr.mxu0 0.0
    %527 = vmatpush1.msra.mxu0 0.0
    %528 = vmatprep.subr.mxu0 0.0
    %529 = vmatpush1.msra.mxu0 0.0
    %530 = vmatprep.subr.mxu0 0.0
    %531 = vmatpush1.msra.mxu0 0.0
    %532 = vmatprep.subr.mxu0 0.0
    %533 = vmatpush1.msra.mxu0 0.0
    %534 = vmatprep.subr.mxu0 0.0
    %535 = vmatpush1.msra.mxu0 0.0
    %536 = vmatprep.subr.mxu0 0.0
    %537 = vmatpush1.msra.mxu0 0.0
    %538 = vmatprep.subr.mxu0 0.0
    %539 = vmatpush1.msra.mxu0 0.0
    %540 = vmatprep.subr.mxu0 0.0
    %541 = vmatpush1.msra.mxu0 0.0
    %542 = vmatprep.subr.mxu0 0.0
    %543 = vmatpush1.msra.mxu0 0.0
    %544 = vmatprep.subr.mxu0 0.0
    %545 = vmatpush1.msra.mxu0 0.0
    %546 = vmatprep.subr.mxu0 0.0
    %547 = vmatpush1.msra.mxu0 0.0
    %548 = vmatprep.subr.mxu0 0.0
    %549 = vmatpush1.msra.mxu0 0.0
    %550 = vmatprep.subr.mxu0 0.0
    %551 = vmatpush1.msra.mxu0 0.0
    %552 = vmatprep.subr.mxu0 0.0
    %553 = vmatpush1.msra.mxu0 0.0
    %554 = vmatprep.subr.mxu0 0.0
    %555 = vmatpush1.msra.mxu0 0.0
    %556 = vmatprep.mubr.f32.mxu0 0.0
    %557 = vmatmul.mubr.f32.gmra.mrb[0].mxu0 %v333
    %v558 = vpop.f32.mrb[0].mxu0
    %v559 = vadd.f32 %v310, %v558
    %v560 = vpop.f32.mrb[0].mxu0
    %v561 = vadd.f32 %v314, %v560
    %562 = vmatprep.mubr.f32.mxu0 0.0
    %563 = vmatmul.mubr.f32.gmra.mrb[0].mxu0 %v336
    %v564 = vpop.f32.mrb[0].mxu0
    %v565 = vadd.f32 %v310, %v564
    %v566 = vpop.f32.mrb[0].mxu0
    %v567 = vadd.f32 %v314, %v566
    %568 = vdwg.mxu0
    %569 = vmatprep.subr.mxu0 %v264
    %570 = vmatpush1.msra.mxu0 %v263
    %571 = vmatprep.subr.mxu0 %v272
    %572 = vmatpush1.msra.mxu0 %v271
    %573 = vmatprep.subr.mxu0 %v280
    %574 = vmatpush1.msra.mxu0 %v279
    %575 = vmatprep.subr.mxu0 %v288
    %576 = vmatpush1.msra.mxu0 %v287
    %577 = vmatprep.subr.mxu0 0.0
    %578 = vmatpush1.msra.mxu0 0.0
    %579 = vmatprep.subr.mxu0 0.0
    %580 = vmatpush1.msra.mxu0 0.0
    %581 = vmatprep.subr.mxu0 0.0
    %582 = vmatpush1.msra.mxu0 0.0
    %583 = vmatprep.subr.mxu0 0.0
    %584 = vmatpush1.msra.mxu0 0.0
    %585 = vmatprep.subr.mxu0 0.0
    %586 = vmatpush1.msra.mxu0 0.0
    %587 = vmatprep.subr.mxu0 0.0
    %588 = vmatpush1.msra.mxu0 0.0
    %589 = vmatprep.subr.mxu0 0.0
    %590 = vmatpush1.msra.mxu0 0.0
    %591 = vmatprep.subr.mxu0 0.0
    %592 = vmatpush1.msra.mxu0 0.0
    %593 = vmatprep.subr.mxu0 0.0
    %594 = vmatpush1.msra.mxu0 0.0
    %595 = vmatprep.subr.mxu0 0.0
    %596 = vmatpush1.msra.mxu0 0.0
    %597 = vmatprep.subr.mxu0 0.0
    %598 = vmatpush1.msra.mxu0 0.0
    %599 = vmatprep.subr.mxu0 0.0
    %600 = vmatpush1.msra.mxu0 0.0
    %601 = vmatprep.subr.mxu0 0.0
    %602 = vmatpush1.msra.mxu0 0.0
    %603 = vmatprep.subr.mxu0 0.0
    %604 = vmatpush1.msra.mxu0 0.0
    %605 = vmatprep.subr.mxu0 0.0
    %606 = vmatpush1.msra.mxu0 0.0
    %607 = vmatprep.subr.mxu0 0.0
    %608 = vmatpush1.msra.mxu0 0.0
    %609 = vmatprep.subr.mxu0 0.0
    %610 = vmatpush1.msra.mxu0 0.0
    %611 = vmatprep.subr.mxu0 0.0
    %612 = vmatpush1.msra.mxu0 0.0
    %613 = vmatprep.subr.mxu0 0.0
    %614 = vmatpush1.msra.mxu0 0.0
    %615 = vmatprep.subr.mxu0 0.0
    %616 = vmatpush1.msra.mxu0 0.0
    %617 = vmatprep.subr.mxu0 0.0
    %618 = vmatpush1.msra.mxu0 0.0
    %619 = vmatprep.subr.mxu0 0.0
    %620 = vmatpush1.msra.mxu0 0.0
    %621 = vmatprep.subr.mxu0 0.0
    %622 = vmatpush1.msra.mxu0 0.0
    %623 = vmatprep.subr.mxu0 0.0
    %624 = vmatpush1.msra.mxu0 0.0
    %625 = vmatprep.subr.mxu0 0.0
    %626 = vmatpush1.msra.mxu0 0.0
    %627 = vmatprep.subr.mxu0 0.0
    %628 = vmatpush1.msra.mxu0 0.0
    %629 = vmatprep.subr.mxu0 0.0
    %630 = vmatpush1.msra.mxu0 0.0
    %631 = vmatprep.subr.mxu0 0.0
    %632 = vmatpush1.msra.mxu0 0.0
    %633 = vmatprep.mubr.f32.mxu0 0.0
    %634 = vmatmul.mubr.f32.gmra.mrb[0].mxu0 %v333
    %v635 = vpop.f32.mrb[0].mxu0
    %v636 = vadd.f32 %v318, %v635
    %v637 = vpop.f32.mrb[0].mxu0
    %v638 = vadd.f32 %v322, %v637
    %639 = vmatprep.mubr.f32.mxu0 0.0
    %640 = vmatmul.mubr.f32.gmra.mrb[0].mxu0 %v336
    %v641 = vpop.f32.mrb[0].mxu0
    %v642 = vadd.f32 %v318, %v641
    %v643 = vpop.f32.mrb[0].mxu0
    %v644 = vadd.f32 %v322, %v643
    %645 = vdwg.mxu0
    %v646 = vld [vmem:[#allocation11] sm:$0xff]
    %v647 = vld [vmem:[#allocation11 + $0x8] sm:$0xff]
    %v648 = vld [vmem:[#allocation11 + $0x10] sm:$0xff]
    %v649 = vld [vmem:[#allocation11 + $0x18] sm:$0xff]
    %v650 = vld [vmem:[#allocation11 + $0x20] sm:$0xff]
    %v651 = vld [vmem:[#allocation11 + $0x28] sm:$0xff]
    %v652 = vld [vmem:[#allocation11 + $0x30] sm:$0xff]
    %v653 = vld [vmem:[#allocation11 + $0x38] sm:$0xff]
    %v654 = vld [vmem:[#allocation11 + $0x40] sm:$0xff]
    %v655 = vld [vmem:[#allocation11 + $0x48] sm:$0xff]
    %v656 = vld [vmem:[#allocation11 + $0x50] sm:$0xff]
    %v657 = vld [vmem:[#allocation11 + $0x58] sm:$0xff]
    %v658 = vld [vmem:[#allocation11 + $0x60] sm:$0xff]
    %v659 = vld [vmem:[#allocation11 + $0x68] sm:$0xff]
    %v660 = vld [vmem:[#allocation11 + $0x70] sm:$0xff]
    %v661 = vld [vmem:[#allocation11 + $0x78] sm:$0xff]
    %v662 = vld [vmem:[#allocation11 + $0x80] sm:$0xff]
    %v663 = vld [vmem:[#allocation11 + $0x88] sm:$0xff]
    %v664 = vld [vmem:[#allocation11 + $0x90] sm:$0xff]
    %v665 = vld [vmem:[#allocation11 + $0x98] sm:$0xff]
    %v666 = vld [vmem:[#allocation11 + $0xa0] sm:$0xff]
    %v667 = vld [vmem:[#allocation11 + $0xa8] sm:$0xff]
    %v668 = vld [vmem:[#allocation11 + $0xb0] sm:$0xff]
    %v669 = vld [vmem:[#allocation11 + $0xb8] sm:$0xff]
    %v670 = vld [vmem:[#allocation11 + $0xc0] sm:$0xff]
    %v671 = vld [vmem:[#allocation11 + $0xc8] sm:$0xff]
    %v672 = vld [vmem:[#allocation11 + $0xd0] sm:$0xff]
    %v673 = vld [vmem:[#allocation11 + $0xd8] sm:$0xff]
    %v674 = vld [vmem:[#allocation11 + $0xe0] sm:$0xff]
    %v675 = vld [vmem:[#allocation11 + $0xe8] sm:$0xff]
    %v676 = vld [vmem:[#allocation11 + $0xf0] sm:$0xff]
    %v677 = vld [vmem:[#allocation11 + $0xf8] sm:$0xff]
    %v678 = vld [vmem:[#allocation11 + $0x100] sm:$0xff]
    %v679 = vld [vmem:[#allocation11 + $0x108] sm:$0xff]
    %v680 = vld [vmem:[#allocation11 + $0x110] sm:$0xff]
    %v681 = vld [vmem:[#allocation11 + $0x118] sm:$0xff]
    %v682 = vld [vmem:[#allocation11 + $0x120] sm:$0xff]
    %v683 = vld [vmem:[#allocation11 + $0x128] sm:$0xff]
    %v684 = vld [vmem:[#allocation11 + $0x130] sm:$0xff]
    %v685 = vld [vmem:[#allocation11 + $0x138] sm:$0xff]
    %v686 = vld [vmem:[#allocation11 + $0x140] sm:$0xff]
    %v687 = vld [vmem:[#allocation11 + $0x148] sm:$0xff]
    %v688 = vld [vmem:[#allocation11 + $0x150] sm:$0xff]
    %v689 = vld [vmem:[#allocation11 + $0x158] sm:$0xff]
    %v690 = vld [vmem:[#allocation11 + $0x160] sm:$0xff]
    %v691 = vld [vmem:[#allocation11 + $0x168] sm:$0xff]
    %v692 = vld [vmem:[#allocation11 + $0x170] sm:$0xff]
    %v693 = vld [vmem:[#allocation11 + $0x178] sm:$0xff]
    %v694 = vld [vmem:[#allocation11 + $0x180] sm:$0xff]
    %v695 = vld [vmem:[#allocation11 + $0x188] sm:$0xff]
    %v696 = vld [vmem:[#allocation11 + $0x190] sm:$0xff]
    %v697 = vld [vmem:[#allocation11 + $0x198] sm:$0xff]
    %v698 = vld [vmem:[#allocation11 + $0x1a0] sm:$0xff]
    %v699 = vld [vmem:[#allocation11 + $0x1a8] sm:$0xff]
    %v700 = vld [vmem:[#allocation11 + $0x1b0] sm:$0xff]
    %v701 = vld [vmem:[#allocation11 + $0x1b8] sm:$0xff]
    %v702 = vld [vmem:[#allocation11 + $0x1c0] sm:$0xff]
    %v703 = vld [vmem:[#allocation11 + $0x1c8] sm:$0xff]
    %v704 = vld [vmem:[#allocation11 + $0x1d0] sm:$0xff]
    %v705 = vld [vmem:[#allocation11 + $0x1d8] sm:$0xff]
    %v706 = vld [vmem:[#allocation11 + $0x1e0] sm:$0xff]
    %v707 = vld [vmem:[#allocation11 + $0x1e8] sm:$0xff]
    %v708 = vld [vmem:[#allocation11 + $0x1f0] sm:$0xff]
    %v709 = vld [vmem:[#allocation11 + $0x1f8] sm:$0xff]
    %v710 = vld [vmem:[#allocation12] sm:$0xff]
    %v711 = vld [vmem:[#allocation12 + $0x8] sm:$0xff]
    %v712 = vld [vmem:[#allocation12 + $0x10] sm:$0xff]
    %v713 = vld [vmem:[#allocation12 + $0x18] sm:$0xff]
    %v714 = vld [vmem:[#allocation12 + $0x20] sm:$0xff]
    %v715 = vld [vmem:[#allocation12 + $0x28] sm:$0xff]
    %v716 = vld [vmem:[#allocation12 + $0x30] sm:$0xff]
    %v717 = vld [vmem:[#allocation12 + $0x38] sm:$0xff]
    %v718 = vld [vmem:[#allocation12 + $0x40] sm:$0xff]
    %v719 = vld [vmem:[#allocation12 + $0x48] sm:$0xff]
    %v720 = vld [vmem:[#allocation12 + $0x50] sm:$0xff]
    %v721 = vld [vmem:[#allocation12 + $0x58] sm:$0xff]
    %v722 = vld [vmem:[#allocation12 + $0x60] sm:$0xff]
    %v723 = vld [vmem:[#allocation12 + $0x68] sm:$0xff]
    %v724 = vld [vmem:[#allocation12 + $0x70] sm:$0xff]
    %v725 = vld [vmem:[#allocation12 + $0x78] sm:$0xff]
    %v726 = vld [vmem:[#allocation12 + $0x80] sm:$0xff]
    %v727 = vld [vmem:[#allocation12 + $0x88] sm:$0xff]
    %v728 = vld [vmem:[#allocation12 + $0x90] sm:$0xff]
    %v729 = vld [vmem:[#allocation12 + $0x98] sm:$0xff]
    %v730 = vld [vmem:[#allocation12 + $0xa0] sm:$0xff]
    %v731 = vld [vmem:[#allocation12 + $0xa8] sm:$0xff]
    %v732 = vld [vmem:[#allocation12 + $0xb0] sm:$0xff]
    %v733 = vld [vmem:[#allocation12 + $0xb8] sm:$0xff]
    %v734 = vld [vmem:[#allocation12 + $0xc0] sm:$0xff]
    %v735 = vld [vmem:[#allocation12 + $0xc8] sm:$0xff]
    %v736 = vld [vmem:[#allocation12 + $0xd0] sm:$0xff]
    %v737 = vld [vmem:[#allocation12 + $0xd8] sm:$0xff]
    %v738 = vld [vmem:[#allocation12 + $0xe0] sm:$0xff]
    %v739 = vld [vmem:[#allocation12 + $0xe8] sm:$0xff]
    %v740 = vld [vmem:[#allocation12 + $0xf0] sm:$0xff]
    %v741 = vld [vmem:[#allocation12 + $0xf8] sm:$0xff]
    %v742 = vld [vmem:[#allocation12 + $0x100] sm:$0xff]
    %v743 = vld [vmem:[#allocation12 + $0x108] sm:$0xff]
    %v744 = vld [vmem:[#allocation12 + $0x110] sm:$0xff]
    %v745 = vld [vmem:[#allocation12 + $0x118] sm:$0xff]
    %v746 = vld [vmem:[#allocation12 + $0x120] sm:$0xff]
    %v747 = vld [vmem:[#allocation12 + $0x128] sm:$0xff]
    %v748 = vld [vmem:[#allocation12 + $0x130] sm:$0xff]
    %v749 = vld [vmem:[#allocation12 + $0x138] sm:$0xff]
    %v750 = vld [vmem:[#allocation12 + $0x140] sm:$0xff]
    %v751 = vld [vmem:[#allocation12 + $0x148] sm:$0xff]
    %v752 = vld [vmem:[#allocation12 + $0x150] sm:$0xff]
    %v753 = vld [vmem:[#allocation12 + $0x158] sm:$0xff]
    %v754 = vld [vmem:[#allocation12 + $0x160] sm:$0xff]
    %v755 = vld [vmem:[#allocation12 + $0x168] sm:$0xff]
    %v756 = vld [vmem:[#allocation12 + $0x170] sm:$0xff]
    %v757 = vld [vmem:[#allocation12 + $0x178] sm:$0xff]
    %v758 = vld [vmem:[#allocation12 + $0x180] sm:$0xff]
    %v759 = vld [vmem:[#allocation12 + $0x188] sm:$0xff]
    %v760 = vld [vmem:[#allocation12 + $0x190] sm:$0xff]
    %v761 = vld [vmem:[#allocation12 + $0x198] sm:$0xff]
    %v762 = vld [vmem:[#allocation12 + $0x1a0] sm:$0xff]
    %v763 = vld [vmem:[#allocation12 + $0x1a8] sm:$0xff]
    %v764 = vld [vmem:[#allocation12 + $0x1b0] sm:$0xff]
    %v765 = vld [vmem:[#allocation12 + $0x1b8] sm:$0xff]
    %v766 = vld [vmem:[#allocation12 + $0x1c0] sm:$0xff]
    %v767 = vld [vmem:[#allocation12 + $0x1c8] sm:$0xff]
    %v768 = vld [vmem:[#allocation12 + $0x1d0] sm:$0xff]
    %v769 = vld [vmem:[#allocation12 + $0x1d8] sm:$0xff]
    %v770 = vld [vmem:[#allocation12 + $0x1e0] sm:$0xff]
    %v771 = vld [vmem:[#allocation12 + $0x1e8] sm:$0xff]
    %v772 = vld [vmem:[#allocation12 + $0x1f0] sm:$0xff]
    %v773 = vld [vmem:[#allocation12 + $0x1f8] sm:$0xff]
    %774 = vmatprep.subr.mxu0 %v647
    %775 = vmatpush1.msra.mxu0 %v646
    %776 = vmatprep.subr.mxu0 %v651
    %777 = vmatpush1.msra.mxu0 %v650
    %778 = vmatprep.subr.mxu0 %v655
    %779 = vmatpush1.msra.mxu0 %v654
    %780 = vmatprep.subr.mxu0 %v659
    %781 = vmatpush1.msra.mxu0 %v658
    %782 = vmatprep.subr.mxu0 %v663
    %783 = vmatpush1.msra.mxu0 %v662
    %784 = vmatprep.subr.mxu0 %v667
    %785 = vmatpush1.msra.mxu0 %v666
    %786 = vmatprep.subr.mxu0 %v671
    %787 = vmatpush1.msra.mxu0 %v670
    %788 = vmatprep.subr.mxu0 %v675
    %789 = vmatpush1.msra.mxu0 %v674
    %790 = vmatprep.subr.mxu0 %v679
    %791 = vmatpush1.msra.mxu0 %v678
    %792 = vmatprep.subr.mxu0 %v683
    %793 = vmatpush1.msra.mxu0 %v682
    %794 = vmatprep.subr.mxu0 %v687
    %795 = vmatpush1.msra.mxu0 %v686
    %796 = vmatprep.subr.mxu0 %v691
    %797 = vmatpush1.msra.mxu0 %v690
    %798 = vmatprep.subr.mxu0 %v695
    %799 = vmatpush1.msra.mxu0 %v694
    %800 = vmatprep.subr.mxu0 %v699
    %801 = vmatpush1.msra.mxu0 %v698
    %802 = vmatprep.subr.mxu0 %v703
    %803 = vmatpush1.msra.mxu0 %v702
    %804 = vmatprep.subr.mxu0 %v707
    %805 = vmatpush1.msra.mxu0 %v706
    %806 = vmatprep.subr.mxu0 0.0
    %807 = vmatpush1.msra.mxu0 0.0
    %808 = vmatprep.subr.mxu0 0.0
    %809 = vmatpush1.msra.mxu0 0.0
    %810 = vmatprep.subr.mxu0 0.0
    %811 = vmatpush1.msra.mxu0 0.0
    %812 = vmatprep.subr.mxu0 0.0
    %813 = vmatpush1.msra.mxu0 0.0
    %814 = vmatprep.subr.mxu0 0.0
    %815 = vmatpush1.msra.mxu0 0.0
    %816 = vmatprep.subr.mxu0 0.0
    %817 = vmatpush1.msra.mxu0 0.0
    %818 = vmatprep.subr.mxu0 0.0
    %819 = vmatpush1.msra.mxu0 0.0
    %820 = vmatprep.subr.mxu0 0.0
    %821 = vmatpush1.msra.mxu0 0.0
    %822 = vmatprep.subr.mxu0 0.0
    %823 = vmatpush1.msra.mxu0 0.0
    %824 = vmatprep.subr.mxu0 0.0
    %825 = vmatpush1.msra.mxu0 0.0
    %826 = vmatprep.subr.mxu0 0.0
    %827 = vmatpush1.msra.mxu0 0.0
    %828 = vmatprep.subr.mxu0 0.0
    %829 = vmatpush1.msra.mxu0 0.0
    %830 = vmatprep.subr.mxu0 0.0
    %831 = vmatpush1.msra.mxu0 0.0
    %832 = vmatprep.subr.mxu0 0.0
    %833 = vmatpush1.msra.mxu0 0.0
    %834 = vmatprep.subr.mxu0 0.0
    %835 = vmatpush1.msra.mxu0 0.0
    %836 = vmatprep.subr.mxu0 0.0
    %837 = vmatpush1.msra.mxu0 0.0
    %838 = vmatprep.mubr.f32.mxu0 0.0
    %839 = vmatmul.mubr.f32.gmra.mrb[0].mxu0 0.0
    %v840 = vpop.f32.mrb[0].mxu0
    %v841 = vadd.f32 0.0, %v840
    %v842 = vpop.f32.mrb[0].mxu0
    %v843 = vadd.f32 0.0, %v842
    %844 = vdwg.mxu0
    %845 = vmatprep.subr.mxu0 %v649
    %846 = vmatpush1.msra.mxu0 %v648
    %847 = vmatprep.subr.mxu0 %v653
    %848 = vmatpush1.msra.mxu0 %v652
    %849 = vmatprep.subr.mxu0 %v657
    %850 = vmatpush1.msra.mxu0 %v656
    %851 = vmatprep.subr.mxu0 %v661
    %852 = vmatpush1.msra.mxu0 %v660
    %853 = vmatprep.subr.mxu0 %v665
    %854 = vmatpush1.msra.mxu0 %v664
    %855 = vmatprep.subr.mxu0 %v669
    %856 = vmatpush1.msra.mxu0 %v668
    %857 = vmatprep.subr.mxu0 %v673
    %858 = vmatpush1.msra.mxu0 %v672
    %859 = vmatprep.subr.mxu0 %v677
    %860 = vmatpush1.msra.mxu0 %v676
    %861 = vmatprep.subr.mxu0 %v681
    %862 = vmatpush1.msra.mxu0 %v680
    %863 = vmatprep.subr.mxu0 %v685
    %864 = vmatpush1.msra.mxu0 %v684
    %865 = vmatprep.subr.mxu0 %v689
    %866 = vmatpush1.msra.mxu0 %v688
    %867 = vmatprep.subr.mxu0 %v693
    %868 = vmatpush1.msra.mxu0 %v692
    %869 = vmatprep.subr.mxu0 %v697
    %870 = vmatpush1.msra.mxu0 %v696
    %871 = vmatprep.subr.mxu0 %v701
    %872 = vmatpush1.msra.mxu0 %v700
    %873 = vmatprep.subr.mxu0 %v705
    %874 = vmatpush1.msra.mxu0 %v704
    %875 = vmatprep.subr.mxu0 %v709
    %876 = vmatpush1.msra.mxu0 %v708
    %877 = vmatprep.subr.mxu0 0.0
    %878 = vmatpush1.msra.mxu0 0.0
    %879 = vmatprep.subr.mxu0 0.0
    %880 = vmatpush1.msra.mxu0 0.0
    %881 = vmatprep.subr.mxu0 0.0
    %882 = vmatpush1.msra.mxu0 0.0
    %883 = vmatprep.subr.mxu0 0.0
    %884 = vmatpush1.msra.mxu0 0.0
    %885 = vmatprep.subr.mxu0 0.0
    %886 = vmatpush1.msra.mxu0 0.0
    %887 = vmatprep.subr.mxu0 0.0
    %888 = vmatpush1.msra.mxu0 0.0
    %889 = vmatprep.subr.mxu0 0.0
    %890 = vmatpush1.msra.mxu0 0.0
    %891 = vmatprep.subr.mxu0 0.0
    %892 = vmatpush1.msra.mxu0 0.0
    %893 = vmatprep.subr.mxu0 0.0
    %894 = vmatpush1.msra.mxu0 0.0
    %895 = vmatprep.subr.mxu0 0.0
    %896 = vmatpush1.msra.mxu0 0.0
    %897 = vmatprep.subr.mxu0 0.0
    %898 = vmatpush1.msra.mxu0 0.0
    %899 = vmatprep.subr.mxu0 0.0
    %900 = vmatpush1.msra.mxu0 0.0
    %901 = vmatprep.subr.mxu0 0.0
    %902 = vmatpush1.msra.mxu0 0.0
    %903 = vmatprep.subr.mxu0 0.0
    %904 = vmatpush1.msra.mxu0 0.0
    %905 = vmatprep.subr.mxu0 0.0
    %906 = vmatpush1.msra.mxu0 0.0
    %907 = vmatprep.subr.mxu0 0.0
    %908 = vmatpush1.msra.mxu0 0.0
    %909 = vmatprep.mubr.f32.mxu0 0.0
    %910 = vmatmul.mubr.f32.gmra.mrb[0].mxu0 0.0
    %v911 = vpop.f32.mrb[0].mxu0
    %v912 = vadd.f32 0.0, %v911
    %v913 = vpop.f32.mrb[0].mxu0
    %v914 = vadd.f32 0.0, %v913
    %915 = vdwg.mxu0
    %v920 = vrot.slane %v841, 1
    %v921 = vrot.slane %v843, 1
    %v922 = vrot.slane %v912, 1
    %v923 = vrot.slane %v914, 1
    %v932 = vadd.f32 %v405, %v841
    %v933 = vadd.f32 %v407, %v843
    %v934 = vadd.f32 %v482, %v912
    %v935 = vadd.f32 %v484, %v914
    %v936 = vadd.f32 %v411, %v920
    %v937 = vadd.f32 %v413, %v921
    %v938 = vadd.f32 %v488, %v922
    %v939 = vadd.f32 %v490, %v923
    %940 = vmatprep.subr.mxu0 %v711
    %941 = vmatpush1.msra.mxu0 %v710
    %942 = vmatprep.subr.mxu0 %v715
    %943 = vmatpush1.msra.mxu0 %v714
    %944 = vmatprep.subr.mxu0 %v719
    %945 = vmatpush1.msra.mxu0 %v718
    %946 = vmatprep.subr.mxu0 %v723
    %947 = vmatpush1.msra.mxu0 %v722
    %948 = vmatprep.subr.mxu0 %v727
    %949 = vmatpush1.msra.mxu0 %v726
    %950 = vmatprep.subr.mxu0 %v731
    %951 = vmatpush1.msra.mxu0 %v730
    %952 = vmatprep.subr.mxu0 %v735
    %953 = vmatpush1.msra.mxu0 %v734
    %954 = vmatprep.subr.mxu0 %v739
    %955 = vmatpush1.msra.mxu0 %v738
    %956 = vmatprep.subr.mxu0 %v743
    %957 = vmatpush1.msra.mxu0 %v742
    %958 = vmatprep.subr.mxu0 %v747
    %959 = vmatpush1.msra.mxu0 %v746
    %960 = vmatprep.subr.mxu0 %v751
    %961 = vmatpush1.msra.mxu0 %v750
    %962 = vmatprep.subr.mxu0 %v755
    %963 = vmatpush1.msra.mxu0 %v754
    %964 = vmatprep.subr.mxu0 %v759
    %965 = vmatpush1.msra.mxu0 %v758
    %966 = vmatprep.subr.mxu0 %v763
    %967 = vmatpush1.msra.mxu0 %v762
    %968 = vmatprep.subr.mxu0 %v767
    %969 = vmatpush1.msra.mxu0 %v766
    %970 = vmatprep.subr.mxu0 %v771
    %971 = vmatpush1.msra.mxu0 %v770
    %972 = vmatprep.subr.mxu0 0.0
    %973 = vmatpush1.msra.mxu0 0.0
    %974 = vmatprep.subr.mxu0 0.0
    %975 = vmatpush1.msra.mxu0 0.0
    %976 = vmatprep.subr.mxu0 0.0
    %977 = vmatpush1.msra.mxu0 0.0
    %978 = vmatprep.subr.mxu0 0.0
    %979 = vmatpush1.msra.mxu0 0.0
    %980 = vmatprep.subr.mxu0 0.0
    %981 = vmatpush1.msra.mxu0 0.0
    %982 = vmatprep.subr.mxu0 0.0
    %983 = vmatpush1.msra.mxu0 0.0
    %984 = vmatprep.subr.mxu0 0.0
    %985 = vmatpush1.msra.mxu0 0.0
    %986 = vmatprep.subr.mxu0 0.0
    %987 = vmatpush1.msra.mxu0 0.0
    %988 = vmatprep.subr.mxu0 0.0
    %989 = vmatpush1.msra.mxu0 0.0
    %990 = vmatprep.subr.mxu0 0.0
    %991 = vmatpush1.msra.mxu0 0.0
    %992 = vmatprep.subr.mxu0 0.0
    %993 = vmatpush1.msra.mxu0 0.0
    %994 = vmatprep.subr.mxu0 0.0
    %995 = vmatpush1.msra.mxu0 0.0
    %996 = vmatprep.subr.mxu0 0.0
    %997 = vmatpush1.msra.mxu0 0.0
    %998 = vmatprep.subr.mxu0 0.0
    %999 = vmatpush1.msra.mxu0 0.0
    %1000 = vmatprep.subr.mxu0 0.0
    %1001 = vmatpush1.msra.mxu0 0.0
    %1002 = vmatprep.subr.mxu0 0.0
    %1003 = vmatpush1.msra.mxu0 0.0
    %1004 = vmatprep.mubr.f32.mxu0 0.0
    %1005 = vmatmul.mubr.f32.gmra.mrb[0].mxu0 0.0
    %v1006 = vpop.f32.mrb[0].mxu0
    %v1007 = vadd.f32 0.0, %v1006
    %v1008 = vpop.f32.mrb[0].mxu0
    %v1009 = vadd.f32 0.0, %v1008
    %1010 = vdwg.mxu0
    %1011 = vmatprep.subr.mxu0 %v713
    %1012 = vmatpush1.msra.mxu0 %v712
    %1013 = vmatprep.subr.mxu0 %v717
    %1014 = vmatpush1.msra.mxu0 %v716
    %1015 = vmatprep.subr.mxu0 %v721
    %1016 = vmatpush1.msra.mxu0 %v720
    %1017 = vmatprep.subr.mxu0 %v725
    %1018 = vmatpush1.msra.mxu0 %v724
    %1019 = vmatprep.subr.mxu0 %v729
    %1020 = vmatpush1.msra.mxu0 %v728
    %1021 = vmatprep.subr.mxu0 %v733
    %1022 = vmatpush1.msra.mxu0 %v732
    %1023 = vmatprep.subr.mxu0 %v737
    %1024 = vmatpush1.msra.mxu0 %v736
    %1025 = vmatprep.subr.mxu0 %v741
    %1026 = vmatpush1.msra.mxu0 %v740
    %1027 = vmatprep.subr.mxu0 %v745
    %1028 = vmatpush1.msra.mxu0 %v744
    %1029 = vmatprep.subr.mxu0 %v749
    %1030 = vmatpush1.msra.mxu0 %v748
    %1031 = vmatprep.subr.mxu0 %v753
    %1032 = vmatpush1.msra.mxu0 %v752
    %1033 = vmatprep.subr.mxu0 %v757
    %1034 = vmatpush1.msra.mxu0 %v756
    %1035 = vmatprep.subr.mxu0 %v761
    %1036 = vmatpush1.msra.mxu0 %v760
    %1037 = vmatprep.subr.mxu0 %v765
    %1038 = vmatpush1.msra.mxu0 %v764
    %1039 = vmatprep.subr.mxu0 %v769
    %1040 = vmatpush1.msra.mxu0 %v768
    %1041 = vmatprep.subr.mxu0 %v773
    %1042 = vmatpush1.msra.mxu0 %v772
    %1043 = vmatprep.subr.mxu0 0.0
    %1044 = vmatpush1.msra.mxu0 0.0
    %1045 = vmatprep.subr.mxu0 0.0
    %1046 = vmatpush1.msra.mxu0 0.0
    %1047 = vmatprep.subr.mxu0 0.0
    %1048 = vmatpush1.msra.mxu0 0.0
    %1049 = vmatprep.subr.mxu0 0.0
    %1050 = vmatpush1.msra.mxu0 0.0
    %1051 = vmatprep.subr.mxu0 0.0
    %1052 = vmatpush1.msra.mxu0 0.0
    %1053 = vmatprep.subr.mxu0 0.0
    %1054 = vmatpush1.msra.mxu0 0.0
    %1055 = vmatprep.subr.mxu0 0.0
    %1056 = vmatpush1.msra.mxu0 0.0
    %1057 = vmatprep.subr.mxu0 0.0
    %1058 = vmatpush1.msra.mxu0 0.0
    %1059 = vmatprep.subr.mxu0 0.0
    %1060 = vmatpush1.msra.mxu0 0.0
    %1061 = vmatprep.subr.mxu0 0.0
    %1062 = vmatpush1.msra.mxu0 0.0
    %1063 = vmatprep.subr.mxu0 0.0
    %1064 = vmatpush1.msra.mxu0 0.0
    %1065 = vmatprep.subr.mxu0 0.0
    %1066 = vmatpush1.msra.mxu0 0.0
    %1067 = vmatprep.subr.mxu0 0.0
    %1068 = vmatpush1.msra.mxu0 0.0
    %1069 = vmatprep.subr.mxu0 0.0
    %1070 = vmatpush1.msra.mxu0 0.0
    %1071 = vmatprep.subr.mxu0 0.0
    %1072 = vmatpush1.msra.mxu0 0.0
    %1073 = vmatprep.subr.mxu0 0.0
    %1074 = vmatpush1.msra.mxu0 0.0
    %1075 = vmatprep.mubr.f32.mxu0 0.0
    %1076 = vmatmul.mubr.f32.gmra.mrb[0].mxu0 0.0
    %v1077 = vpop.f32.mrb[0].mxu0
    %v1078 = vadd.f32 0.0, %v1077
    %v1079 = vpop.f32.mrb[0].mxu0
    %v1080 = vadd.f32 0.0, %v1079
    %1081 = vdwg.mxu0
    %v1086 = vrot.slane %v1007, 1
    %v1087 = vrot.slane %v1009, 1
    %v1088 = vrot.slane %v1078, 1
    %v1089 = vrot.slane %v1080, 1
    %v1090 = vrot.slane %v1007, 2
    %v1091 = vrot.slane %v1009, 2
    %v1092 = vrot.slane %v1078, 2
    %v1093 = vrot.slane %v1080, 2
    %v1102 = vadd.f32 %v559, %v1086
    %v1103 = vadd.f32 %v561, %v1087
    %v1104 = vadd.f32 %v636, %v1088
    %v1105 = vadd.f32 %v638, %v1089
    %v1106 = vadd.f32 %v565, %v1090
    %v1107 = vadd.f32 %v567, %v1091
    %v1108 = vadd.f32 %v642, %v1092
    %v1109 = vadd.f32 %v644, %v1093
    %v1110 = vxor.u32 %v932, 2147483648
    %v1111 = vxor.u32 %v936, 2147483648
    %v1112 = vmul.f32 %v1110, 1.442695
    %v1113 = vpow.pop %v1112
    %v1114 = vmul.f32 %v1111, 1.442695
    %v1115 = vpow.pop %v1114
    %v1116 = vadd.f32 %v1113, 1.0
    %v1117 = vadd.f32 %v1115, 1.0
    %v1118 = vrcp.pop %v1116
    %v1119 = vmul.f32 1.0, %v1118
    %v1120 = vrcp.pop %v1117
    %v1121 = vmul.f32 1.0, %v1120
    %v1122 = vxor.u32 %v933, 2147483648
    %v1123 = vxor.u32 %v937, 2147483648
    %v1124 = vmul.f32 %v1122, 1.442695
    %v1125 = vpow.pop %v1124
    %v1126 = vmul.f32 %v1123, 1.442695
    %v1127 = vpow.pop %v1126
    %v1128 = vadd.f32 %v1125, 1.0
    %v1129 = vadd.f32 %v1127, 1.0
    %v1130 = vrcp.pop %v1128
    %v1131 = vmul.f32 1.0, %v1130
    %v1132 = vrcp.pop %v1129
    %v1133 = vmul.f32 1.0, %v1132
    %v1134 = vtanh.pop %v934
    %v1135 = vtanh.pop %v938
    %v1136 = vxor.u32 %v935, 2147483648
    %v1137 = vxor.u32 %v939, 2147483648
    %v1138 = vmul.f32 %v1136, 1.442695
    %v1139 = vpow.pop %v1138
    %v1140 = vmul.f32 %v1137, 1.442695
    %v1141 = vpow.pop %v1140
    %v1142 = vadd.f32 %v1139, 1.0
    %v1143 = vadd.f32 %v1141, 1.0
    %v1144 = vrcp.pop %v1142
    %v1145 = vmul.f32 1.0, %v1144
    %v1146 = vrcp.pop %v1143
    %v1147 = vmul.f32 1.0, %v1146
    %v1148 = vmul.f32 %v1131, 0.0
    %v1149 = vmul.f32 %v1133, 0.0
    %v1150 = vmul.f32 %v1119, %v1134
    %v1151 = vmul.f32 %v1121, %v1135
    %v1152 = vadd.f32 %v1148, %v1150
    %v1153 = vadd.f32 %v1149, %v1151
    %v1154 = vtanh.pop %v1152
    %v1155 = vtanh.pop %v1153
    %v1156 = vmul.f32 %v1145, %v1154
    %v1157 = vmul.f32 %v1147, %v1155
    %v1158 = vxor.u32 %v1102, 2147483648
    %v1159 = vxor.u32 %v1106, 2147483648
    %v1160 = vmul.f32 %v1158, 1.442695
    %v1161 = vpow.pop %v1160
    %v1162 = vmul.f32 %v1159, 1.442695
    %v1163 = vpow.pop %v1162
    %v1164 = vadd.f32 %v1161, 1.0
    %v1165 = vadd.f32 %v1163, 1.0
    %v1166 = vrcp.pop %v1164
    %v1167 = vmul.f32 1.0, %v1166
    %v1168 = vrcp.pop %v1165
    %v1169 = vmul.f32 1.0, %v1168
    %v1170 = vxor.u32 %v1103, 2147483648
    %v1171 = vxor.u32 %v1107, 2147483648
    %v1172 = vmul.f32 %v1170, 1.442695
    %v1173 = vpow.pop %v1172
    %v1174 = vmul.f32 %v1171, 1.442695
    %v1175 = vpow.pop %v1174
    %v1176 = vadd.f32 %v1173, 1.0
    %v1177 = vadd.f32 %v1175, 1.0
    %v1178 = vrcp.pop %v1176
    %v1179 = vmul.f32 1.0, %v1178
    %v1180 = vrcp.pop %v1177
    %v1181 = vmul.f32 1.0, %v1180
    %v1182 = vtanh.pop %v1104
    %v1183 = vtanh.pop %v1108
    %v1184 = vxor.u32 %v1105, 2147483648
    %v1185 = vxor.u32 %v1109, 2147483648
    %v1186 = vmul.f32 %v1184, 1.442695
    %v1187 = vpow.pop %v1186
    %v1188 = vmul.f32 %v1185, 1.442695
    %v1189 = vpow.pop %v1188
    %v1190 = vadd.f32 %v1187, 1.0
    %v1191 = vadd.f32 %v1189, 1.0
    %v1192 = vrcp.pop %v1190
    %v1193 = vmul.f32 1.0, %v1192
    %v1194 = vrcp.pop %v1191
    %v1195 = vmul.f32 1.0, %v1194
    %v1196 = vmul.f32 %v1179, 0.0
    %v1197 = vmul.f32 %v1181, 0.0
    %v1198 = vmul.f32 %v1167, %v1182
    %v1199 = vmul.f32 %v1169, %v1183
    %v1200 = vadd.f32 %v1196, %v1198
    %v1201 = vadd.f32 %v1197, %v1199
    %v1202 = vtanh.pop %v1200
    %v1203 = vtanh.pop %v1201
    %v1204 = vmul.f32 %v1193, %v1202
    %v1205 = vmul.f32 %v1195, %v1203
    %1206 = vst [vmem:[#allocation2] sm:$0x1] %v1156
    %1207 = vst [vmem:[#allocation2 + $0x10] sm:$0x1] %v1157
    %v1210 = vrot.slane %v1204, 7
    %v1211 = vrot.slane %v1205, 7
    %1214 = vst [vmem:[#allocation2 + $0xf] sm:$0x1] %v1210
    %1215 = vst [vmem:[#allocation2 + $0x1f] sm:$0x1] %v1211
    %v1218 = vrot.slane %v1157, 7
    %vm1219 = vcmask 1041409
    %v1220 = vsel %vm1219, %v1218, %v1156
    %1222 = vmatprep.subr.mxu0 %v647
    %1223 = vmatpush1.msra.mxu0 %v646
    %1224 = vmatprep.subr.mxu0 %v651
    %1225 = vmatpush1.msra.mxu0 %v650
    %1226 = vmatprep.subr.mxu0 %v655
    %1227 = vmatpush1.msra.mxu0 %v654
    %1228 = vmatprep.subr.mxu0 %v659
    %1229 = vmatpush1.msra.mxu0 %v658
    %1230 = vmatprep.subr.mxu0 %v663
    %1231 = vmatpush1.msra.mxu0 %v662
    %1232 = vmatprep.subr.mxu0 %v667
    %1233 = vmatpush1.msra.mxu0 %v666
    %1234 = vmatprep.subr.mxu0 %v671
    %1235 = vmatpush1.msra.mxu0 %v670
    %1236 = vmatprep.subr.mxu0 %v675
    %1237 = vmatpush1.msra.mxu0 %v674
    %1238 = vmatprep.subr.mxu0 %v679
    %1239 = vmatpush1.msra.mxu0 %v678
    %1240 = vmatprep.subr.mxu0 %v683
    %1241 = vmatpush1.msra.mxu0 %v682
    %1242 = vmatprep.subr.mxu0 %v687
    %1243 = vmatpush1.msra.mxu0 %v686
    %1244 = vmatprep.subr.mxu0 %v691
    %1245 = vmatpush1.msra.mxu0 %v690
    %1246 = vmatprep.subr.mxu0 %v695
    %1247 = vmatpush1.msra.mxu0 %v694
    %1248 = vmatprep.subr.mxu0 %v699
    %1249 = vmatpush1.msra.mxu0 %v698
    %1250 = vmatprep.subr.mxu0 %v703
    %1251 = vmatpush1.msra.mxu0 %v702
    %1252 = vmatprep.subr.mxu0 %v707
    %1253 = vmatpush1.msra.mxu0 %v706
    %1254 = vmatprep.subr.mxu0 0.0
    %1255 = vmatpush1.msra.mxu0 0.0
    %1256 = vmatprep.subr.mxu0 0.0
    %1257 = vmatpush1.msra.mxu0 0.0
    %1258 = vmatprep.subr.mxu0 0.0
    %1259 = vmatpush1.msra.mxu0 0.0
    %1260 = vmatprep.subr.mxu0 0.0
    %1261 = vmatpush1.msra.mxu0 0.0
    %1262 = vmatprep.subr.mxu0 0.0
    %1263 = vmatpush1.msra.mxu0 0.0
    %1264 = vmatprep.subr.mxu0 0.0
    %1265 = vmatpush1.msra.mxu0 0.0
    %1266 = vmatprep.subr.mxu0 0.0
    %1267 = vmatpush1.msra.mxu0 0.0
    %1268 = vmatprep.subr.mxu0 0.0
    %1269 = vmatpush1.msra.mxu0 0.0
    %1270 = vmatprep.subr.mxu0 0.0
    %1271 = vmatpush1.msra.mxu0 0.0
    %1272 = vmatprep.subr.mxu0 0.0
    %1273 = vmatpush1.msra.mxu0 0.0
    %1274 = vmatprep.subr.mxu0 0.0
    %1275 = vmatpush1.msra.mxu0 0.0
    %1276 = vmatprep.subr.mxu0 0.0
    %1277 = vmatpush1.msra.mxu0 0.0
    %1278 = vmatprep.subr.mxu0 0.0
    %1279 = vmatpush1.msra.mxu0 0.0
    %1280 = vmatprep.subr.mxu0 0.0
    %1281 = vmatpush1.msra.mxu0 0.0
    %1282 = vmatprep.subr.mxu0 0.0
    %1283 = vmatpush1.msra.mxu0 0.0
    %1284 = vmatprep.subr.mxu0 0.0
    %1285 = vmatpush1.msra.mxu0 0.0
    %1286 = vmatprep.mubr.f32.mxu0 0.0
    %1287 = vmatmul.mubr.f32.gmra.mrb[0].mxu0 %v1220
    %v1288 = vpop.f32.mrb[0].mxu0
    %v1289 = vadd.f32 0.0, %v1288
    %v1290 = vpop.f32.mrb[0].mxu0
    %v1291 = vadd.f32 0.0, %v1290
    %1292 = vdwg.mxu0
    %1293 = vmatprep.subr.mxu0 %v649
    %1294 = vmatpush1.msra.mxu0 %v648
    %1295 = vmatprep.subr.mxu0 %v653
    %1296 = vmatpush1.msra.mxu0 %v652
    %1297 = vmatprep.subr.mxu0 %v657
    %1298 = vmatpush1.msra.mxu0 %v656
    %1299 = vmatprep.subr.mxu0 %v661
    %1300 = vmatpush1.msra.mxu0 %v660
    %1301 = vmatprep.subr.mxu0 %v665
    %1302 = vmatpush1.msra.mxu0 %v664
    %1303 = vmatprep.subr.mxu0 %v669
    %1304 = vmatpush1.msra.mxu0 %v668
    %1305 = vmatprep.subr.mxu0 %v673
    %1306 = vmatpush1.msra.mxu0 %v672
    %1307 = vmatprep.subr.mxu0 %v677
    %1308 = vmatpush1.msra.mxu0 %v676
    %1309 = vmatprep.subr.mxu0 %v681
    %1310 = vmatpush1.msra.mxu0 %v680
    %1311 = vmatprep.subr.mxu0 %v685
    %1312 = vmatpush1.msra.mxu0 %v684
    %1313 = vmatprep.subr.mxu0 %v689
    %1314 = vmatpush1.msra.mxu0 %v688
    %1315 = vmatprep.subr.mxu0 %v693
    %1316 = vmatpush1.msra.mxu0 %v692
    %1317 = vmatprep.subr.mxu0 %v697
    %1318 = vmatpush1.msra.mxu0 %v696
    %1319 = vmatprep.subr.mxu0 %v701
    %1320 = vmatpush1.msra.mxu0 %v700
    %1321 = vmatprep.subr.mxu0 %v705
    %1322 = vmatpush1.msra.mxu0 %v704
    %1323 = vmatprep.subr.mxu0 %v709
    %1324 = vmatpush1.msra.mxu0 %v708
    %1325 = vmatprep.subr.mxu0 0.0
    %1326 = vmatpush1.msra.mxu0 0.0
    %1327 = vmatprep.subr.mxu0 0.0
    %1328 = vmatpush1.msra.mxu0 0.0
    %1329 = vmatprep.subr.mxu0 0.0
    %1330 = vmatpush1.msra.mxu0 0.0
    %1331 = vmatprep.subr.mxu0 0.0
    %1332 = vmatpush1.msra.mxu0 0.0
    %1333 = vmatprep.subr.mxu0 0.0
    %1334 = vmatpush1.msra.mxu0 0.0
    %1335 = vmatprep.subr.mxu0 0.0
    %1336 = vmatpush1.msra.mxu0 0.0
    %1337 = vmatprep.subr.mxu0 0.0
    %1338 = vmatpush1.msra.mxu0 0.0
    %1339 = vmatprep.subr.mxu0 0.0
    %1340 = vmatpush1.msra.mxu0 0.0
    %1341 = vmatprep.subr.mxu0 0.0
    %1342 = vmatpush1.msra.mxu0 0.0
    %1343 = vmatprep.subr.mxu0 0.0
    %1344 = vmatpush1.msra.mxu0 0.0
    %1345 = vmatprep.subr.mxu0 0.0
    %1346 = vmatpush1.msra.mxu0 0.0
    %1347 = vmatprep.subr.mxu0 0.0
    %1348 = vmatpush1.msra.mxu0 0.0
    %1349 = vmatprep.subr.mxu0 0.0
    %1350 = vmatpush1.msra.mxu0 0.0
    %1351 = vmatprep.subr.mxu0 0.0
    %1352 = vmatpush1.msra.mxu0 0.0
    %1353 = vmatprep.subr.mxu0 0.0
    %1354 = vmatpush1.msra.mxu0 0.0
    %1355 = vmatprep.subr.mxu0 0.0
    %1356 = vmatpush1.msra.mxu0 0.0
    %1357 = vmatprep.mubr.f32.mxu0 0.0
    %1358 = vmatmul.mubr.f32.gmra.mrb[0].mxu0 %v1220
    %v1359 = vpop.f32.mrb[0].mxu0
    %v1360 = vadd.f32 0.0, %v1359
    %v1361 = vpop.f32.mrb[0].mxu0
    %v1362 = vadd.f32 0.0, %v1361
    %1363 = vdwg.mxu0
    %v1368 = vrot.slane %v1289, 7
    %v1369 = vrot.slane %v1291, 7
    %v1370 = vrot.slane %v1360, 7
    %v1371 = vrot.slane %v1362, 7
    %v1380 = vadd.f32 %v405, %v1368
    %v1381 = vadd.f32 %v407, %v1369
    %v1382 = vadd.f32 %v482, %v1370
    %v1383 = vadd.f32 %v484, %v1371
    %v1384 = vadd.f32 %v411, %v1289
    %v1385 = vadd.f32 %v413, %v1291
    %v1386 = vadd.f32 %v488, %v1360
    %v1387 = vadd.f32 %v490, %v1362
    %v1388 = vrot.slane %v1205, 6
    %v1389 = vsel %vm1219, %v1388, %v1210
    %1391 = vmatprep.subr.mxu0 %v711
    %1392 = vmatpush1.msra.mxu0 %v710
    %1393 = vmatprep.subr.mxu0 %v715
    %1394 = vmatpush1.msra.mxu0 %v714
    %1395 = vmatprep.subr.mxu0 %v719
    %1396 = vmatpush1.msra.mxu0 %v718
    %1397 = vmatprep.subr.mxu0 %v723
    %1398 = vmatpush1.msra.mxu0 %v722
    %1399 = vmatprep.subr.mxu0 %v727
    %1400 = vmatpush1.msra.mxu0 %v726
    %1401 = vmatprep.subr.mxu0 %v731
    %1402 = vmatpush1.msra.mxu0 %v730
    %1403 = vmatprep.subr.mxu0 %v735
    %1404 = vmatpush1.msra.mxu0 %v734
    %1405 = vmatprep.subr.mxu0 %v739
    %1406 = vmatpush1.msra.mxu0 %v738
    %1407 = vmatprep.subr.mxu0 %v743
    %1408 = vmatpush1.msra.mxu0 %v742
    %1409 = vmatprep.subr.mxu0 %v747
    %1410 = vmatpush1.msra.mxu0 %v746
    %1411 = vmatprep.subr.mxu0 %v751
    %1412 = vmatpush1.msra.mxu0 %v750
    %1413 = vmatprep.subr.mxu0 %v755
    %1414 = vmatpush1.msra.mxu0 %v754
    %1415 = vmatprep.subr.mxu0 %v759
    %1416 = vmatpush1.msra.mxu0 %v758
    %1417 = vmatprep.subr.mxu0 %v763
    %1418 = vmatpush1.msra.mxu0 %v762
    %1419 = vmatprep.subr.mxu0 %v767
    %1420 = vmatpush1.msra.mxu0 %v766
    %1421 = vmatprep.subr.mxu0 %v771
    %1422 = vmatpush1.msra.mxu0 %v770
    %1423 = vmatprep.subr.mxu0 0.0
    %1424 = vmatpush1.msra.mxu0 0.0
    %1425 = vmatprep.subr.mxu0 0.0
    %1426 = vmatpush1.msra.mxu0 0.0
    %1427 = vmatprep.subr.mxu0 0.0
    %1428 = vmatpush1.msra.mxu0 0.0
    %1429 = vmatprep.subr.mxu0 0.0
    %1430 = vmatpush1.msra.mxu0 0.0
    %1431 = vmatprep.subr.mxu0 0.0
    %1432 = vmatpush1.msra.mxu0 0.0
    %1433 = vmatprep.subr.mxu0 0.0
    %1434 = vmatpush1.msra.mxu0 0.0
    %1435 = vmatprep.subr.mxu0 0.0
    %1436 = vmatpush1.msra.mxu0 0.0
    %1437 = vmatprep.subr.mxu0 0.0
    %1438 = vmatpush1.msra.mxu0 0.0
    %1439 = vmatprep.subr.mxu0 0.0
    %1440 = vmatpush1.msra.mxu0 0.0
    %1441 = vmatprep.subr.mxu0 0.0
    %1442 = vmatpush1.msra.mxu0 0.0
    %1443 = vmatprep.subr.mxu0 0.0
    %1444 = vmatpush1.msra.mxu0 0.0
    %1445 = vmatprep.subr.mxu0 0.0
    %1446 = vmatpush1.msra.mxu0 0.0
    %1447 = vmatprep.subr.mxu0 0.0
    %1448 = vmatpush1.msra.mxu0 0.0
    %1449 = vmatprep.subr.mxu0 0.0
    %1450 = vmatpush1.msra.mxu0 0.0
    %1451 = vmatprep.subr.mxu0 0.0
    %1452 = vmatpush1.msra.mxu0 0.0
    %1453 = vmatprep.subr.mxu0 0.0
    %1454 = vmatpush1.msra.mxu0 0.0
    %1455 = vmatprep.mubr.f32.mxu0 0.0
    %1456 = vmatmul.mubr.f32.gmra.mrb[0].mxu0 %v1389
    %v1457 = vpop.f32.mrb[0].mxu0
    %v1458 = vadd.f32 0.0, %v1457
    %v1459 = vpop.f32.mrb[0].mxu0
    %v1460 = vadd.f32 0.0, %v1459
    %1461 = vdwg.mxu0
    %1462 = vmatprep.subr.mxu0 %v713
    %1463 = vmatpush1.msra.mxu0 %v712
    %1464 = vmatprep.subr.mxu0 %v717
    %1465 = vmatpush1.msra.mxu0 %v716
    %1466 = vmatprep.subr.mxu0 %v721
    %1467 = vmatpush1.msra.mxu0 %v720
    %1468 = vmatprep.subr.mxu0 %v725
    %1469 = vmatpush1.msra.mxu0 %v724
    %1470 = vmatprep.subr.mxu0 %v729
    %1471 = vmatpush1.msra.mxu0 %v728
    %1472 = vmatprep.subr.mxu0 %v733
    %1473 = vmatpush1.msra.mxu0 %v732
    %1474 = vmatprep.subr.mxu0 %v737
    %1475 = vmatpush1.msra.mxu0 %v736
    %1476 = vmatprep.subr.mxu0 %v741
    %1477 = vmatpush1.msra.mxu0 %v740
    %1478 = vmatprep.subr.mxu0 %v745
    %1479 = vmatpush1.msra.mxu0 %v744
    %1480 = vmatprep.subr.mxu0 %v749
    %1481 = vmatpush1.msra.mxu0 %v748
    %1482 = vmatprep.subr.mxu0 %v753
    %1483 = vmatpush1.msra.mxu0 %v752
    %1484 = vmatprep.subr.mxu0 %v757
    %1485 = vmatpush1.msra.mxu0 %v756
    %1486 = vmatprep.subr.mxu0 %v761
    %1487 = vmatpush1.msra.mxu0 %v760
    %1488 = vmatprep.subr.mxu0 %v765
    %1489 = vmatpush1.msra.mxu0 %v764
    %1490 = vmatprep.subr.mxu0 %v769
    %1491 = vmatpush1.msra.mxu0 %v768
    %1492 = vmatprep.subr.mxu0 %v773
    %1493 = vmatpush1.msra.mxu0 %v772
    %1494 = vmatprep.subr.mxu0 0.0
    %1495 = vmatpush1.msra.mxu0 0.0
    %1496 = vmatprep.subr.mxu0 0.0
    %1497 = vmatpush1.msra.mxu0 0.0
    %1498 = vmatprep.subr.mxu0 0.0
    %1499 = vmatpush1.msra.mxu0 0.0
    %1500 = vmatprep.subr.mxu0 0.0
    %1501 = vmatpush1.msra.mxu0 0.0
    %1502 = vmatprep.subr.mxu0 0.0
    %1503 = vmatpush1.msra.mxu0 0.0
    %1504 = vmatprep.subr.mxu0 0.0
    %1505 = vmatpush1.msra.mxu0 0.0
    %1506 = vmatprep.subr.mxu0 0.0
    %1507 = vmatpush1.msra.mxu0 0.0
    %1508 = vmatprep.subr.mxu0 0.0
    %1509 = vmatpush1.msra.mxu0 0.0
    %1510 = vmatprep.subr.mxu0 0.0
    %1511 = vmatpush1.msra.mxu0 0.0
    %1512 = vmatprep.subr.mxu0 0.0
    %1513 = vmatpush1.msra.mxu0 0.0
    %1514 = vmatprep.subr.mxu0 0.0
    %1515 = vmatpush1.msra.mxu0 0.0
    %1516 = vmatprep.subr.mxu0 0.0
    %1517 = vmatpush1.msra.mxu0 0.0
    %1518 = vmatprep.subr.mxu0 0.0
    %1519 = vmatpush1.msra.mxu0 0.0
    %1520 = vmatprep.subr.mxu0 0.0
    %1521 = vmatpush1.msra.mxu0 0.0
    %1522 = vmatprep.subr.mxu0 0.0
    %1523 = vmatpush1.msra.mxu0 0.0
    %1524 = vmatprep.subr.mxu0 0.0
    %1525 = vmatpush1.msra.mxu0 0.0
    %1526 = vmatprep.mubr.f32.mxu0 0.0
    %1527 = vmatmul.mubr.f32.gmra.mrb[0].mxu0 %v1389
    %v1528 = vpop.f32.mrb[0].mxu0
    %v1529 = vadd.f32 0.0, %v1528
    %v1530 = vpop.f32.mrb[0].mxu0
    %v1531 = vadd.f32 0.0, %v1530
    %1532 = vdwg.mxu0
    %v1537 = vrot.slane %v1458, 2
    %v1538 = vrot.slane %v1460, 2
    %v1539 = vrot.slane %v1529, 2
    %v1540 = vrot.slane %v1531, 2
    %v1541 = vrot.slane %v1458, 3
    %v1542 = vrot.slane %v1460, 3
    %v1543 = vrot.slane %v1529, 3
    %v1544 = vrot.slane %v1531, 3
    %v1553 = vadd.f32 %v559, %v1537
    %v1554 = vadd.f32 %v561, %v1538
    %v1555 = vadd.f32 %v636, %v1539
    %v1556 = vadd.f32 %v638, %v1540
    %v1557 = vadd.f32 %v565, %v1541
    %v1558 = vadd.f32 %v567, %v1542
    %v1559 = vadd.f32 %v642, %v1543
    %v1560 = vadd.f32 %v644, %v1544
    %v1561 = vxor.u32 %v1380, 2147483648
    %v1562 = vxor.u32 %v1384, 2147483648
    %v1563 = vmul.f32 %v1561, 1.442695
    %v1564 = vpow.pop %v1563
    %v1565 = vmul.f32 %v1562, 1.442695
    %v1566 = vpow.pop %v1565
    %v1567 = vadd.f32 %v1564, 1.0
    %v1568 = vadd.f32 %v1566, 1.0
    %v1569 = vrcp.pop %v1567
    %v1570 = vmul.f32 1.0, %v1569
    %v1571 = vrcp.pop %v1568
    %v1572 = vmul.f32 1.0, %v1571
    %v1573 = vxor.u32 %v1381, 2147483648
    %v1574 = vxor.u32 %v1385, 2147483648
    %v1575 = vmul.f32 %v1573, 1.442695
    %v1576 = vpow.pop %v1575
    %v1577 = vmul.f32 %v1574, 1.442695
    %v1578 = vpow.pop %v1577
    %v1579 = vadd.f32 %v1576, 1.0
    %v1580 = vadd.f32 %v1578, 1.0
    %v1581 = vrcp.pop %v1579
    %v1582 = vmul.f32 1.0, %v1581
    %v1583 = vrcp.pop %v1580
    %v1584 = vmul.f32 1.0, %v1583
    %v1585 = vtanh.pop %v1382
    %v1586 = vtanh.pop %v1386
    %v1587 = vxor.u32 %v1383, 2147483648
    %v1588 = vxor.u32 %v1387, 2147483648
    %v1589 = vmul.f32 %v1587, 1.442695
    %v1590 = vpow.pop %v1589
    %v1591 = vmul.f32 %v1588, 1.442695
    %v1592 = vpow.pop %v1591
    %v1593 = vadd.f32 %v1590, 1.0
    %v1594 = vadd.f32 %v1592, 1.0
    %v1595 = vrcp.pop %v1593
    %v1596 = vmul.f32 1.0, %v1595
    %v1597 = vrcp.pop %v1594
    %v1598 = vmul.f32 1.0, %v1597
    %v1601 = vrot.slane %v1152, 7
    %v1602 = vrot.slane %v1153, 7
    %v1605 = vmul.f32 %v1582, %v1601
    %v1606 = vmul.f32 %v1584, %v1602
    %v1607 = vmul.f32 %v1570, %v1585
    %v1608 = vmul.f32 %v1572, %v1586
    %v1609 = vadd.f32 %v1605, %v1607
    %v1610 = vadd.f32 %v1606, %v1608
    %v1611 = vtanh.pop %v1609
    %v1612 = vtanh.pop %v1610
    %v1613 = vmul.f32 %v1596, %v1611
    %v1614 = vmul.f32 %v1598, %v1612
    %v1615 = vxor.u32 %v1553, 2147483648
    %v1616 = vxor.u32 %v1557, 2147483648
    %v1617 = vmul.f32 %v1615, 1.442695
    %v1618 = vpow.pop %v1617
    %v1619 = vmul.f32 %v1616, 1.442695
    %v1620 = vpow.pop %v1619
    %v1621 = vadd.f32 %v1618, 1.0
    %v1622 = vadd.f32 %v1620, 1.0
    %v1623 = vrcp.pop %v1621
    %v1624 = vmul.f32 1.0, %v1623
    %v1625 = vrcp.pop %v1622
    %v1626 = vmul.f32 1.0, %v1625
    %v1627 = vxor.u32 %v1554, 2147483648
    %v1628 = vxor.u32 %v1558, 2147483648
    %v1629 = vmul.f32 %v1627, 1.442695
    %v1630 = vpow.pop %v1629
    %v1631 = vmul.f32 %v1628, 1.442695
    %v1632 = vpow.pop %v1631
    %v1633 = vadd.f32 %v1630, 1.0
    %v1634 = vadd.f32 %v1632, 1.0
    %v1635 = vrcp.pop %v1633
    %v1636 = vmul.f32 1.0, %v1635
    %v1637 = vrcp.pop %v1634
    %v1638 = vmul.f32 1.0, %v1637
    %v1639 = vtanh.pop %v1555
    %v1640 = vtanh.pop %v1559
    %v1641 = vxor.u32 %v1556, 2147483648
    %v1642 = vxor.u32 %v1560, 2147483648
    %v1643 = vmul.f32 %v1641, 1.442695
    %v1644 = vpow.pop %v1643
    %v1645 = vmul.f32 %v1642, 1.442695
    %v1646 = vpow.pop %v1645
    %v1647 = vadd.f32 %v1644, 1.0
    %v1648 = vadd.f32 %v1646, 1.0
    %v1649 = vrcp.pop %v1647
    %v1650 = vmul.f32 1.0, %v1649
    %v1651 = vrcp.pop %v1648
    %v1652 = vmul.f32 1.0, %v1651
    %v1655 = vrot.slane %v1200, 1
    %v1656 = vrot.slane %v1201, 1
    %v1659 = vmul.f32 %v1636, %v1655
    %v1660 = vmul.f32 %v1638, %v1656
    %v1661 = vmul.f32 %v1624, %v1639
    %v1662 = vmul.f32 %v1626, %v1640
    %v1663 = vadd.f32 %v1659, %v1661
    %v1664 = vadd.f32 %v1660, %v1662
    %v1665 = vtanh.pop %v1663
    %v1666 = vtanh.pop %v1664
    %v1667 = vmul.f32 %v1650, %v1665
    %v1668 = vmul.f32 %v1652, %v1666
    %v1671 = vrot.slane %v1613, 1
    %v1672 = vrot.slane %v1614, 1
    %1675 = vst [vmem:[#allocation2 + $0x1] sm:$0x1] %v1671
    %1676 = vst [vmem:[#allocation2 + $0x11] sm:$0x1] %v1672
    %v1679 = vrot.slane %v1667, 6
    %v1680 = vrot.slane %v1668, 6
    %1683 = vst [vmem:[#allocation2 + $0xe] sm:$0x1] %v1679
    %1684 = vst [vmem:[#allocation2 + $0x1e] sm:$0x1] %v1680
    %v1685 = vsel %vm1219, %v1614, %v1671
    %1687 = vmatprep.subr.mxu0 %v647
    %1688 = vmatpush1.msra.mxu0 %v646
    %1689 = vmatprep.subr.mxu0 %v651
    %1690 = vmatpush1.msra.mxu0 %v650
    %1691 = vmatprep.subr.mxu0 %v655
    %1692 = vmatpush1.msra.mxu0 %v654
    %1693 = vmatprep.subr.mxu0 %v659
    %1694 = vmatpush1.msra.mxu0 %v658
    %1695 = vmatprep.subr.mxu0 %v663
    %1696 = vmatpush1.msra.mxu0 %v662
    %1697 = vmatprep.subr.mxu0 %v667
    %1698 = vmatpush1.msra.mxu0 %v666
    %1699 = vmatprep.subr.mxu0 %v671
    %1700 = vmatpush1.msra.mxu0 %v670
    %1701 = vmatprep.subr.mxu0 %v675
    %1702 = vmatpush1.msra.mxu0 %v674
    %1703 = vmatprep.subr.mxu0 %v679
    %1704 = vmatpush1.msra.mxu0 %v678
    %1705 = vmatprep.subr.mxu0 %v683
    %1706 = vmatpush1.msra.mxu0 %v682
    %1707 = vmatprep.subr.mxu0 %v687
    %1708 = vmatpush1.msra.mxu0 %v686
    %1709 = vmatprep.subr.mxu0 %v691
    %1710 = vmatpush1.msra.mxu0 %v690
    %1711 = vmatprep.subr.mxu0 %v695
    %1712 = vmatpush1.msra.mxu0 %v694
    %1713 = vmatprep.subr.mxu0 %v699
    %1714 = vmatpush1.msra.mxu0 %v698
    %1715 = vmatprep.subr.mxu0 %v703
    %1716 = vmatpush1.msra.mxu0 %v702
    %1717 = vmatprep.subr.mxu0 %v707
    %1718 = vmatpush1.msra.mxu0 %v706
    %1719 = vmatprep.subr.mxu0 0.0
    %1720 = vmatpush1.msra.mxu0 0.0
    %1721 = vmatprep.subr.mxu0 0.0
    %1722 = vmatpush1.msra.mxu0 0.0
    %1723 = vmatprep.subr.mxu0 0.0
    %1724 = vmatpush1.msra.mxu0 0.0
    %1725 = vmatprep.subr.mxu0 0.0
    %1726 = vmatpush1.msra.mxu0 0.0
    %1727 = vmatprep.subr.mxu0 0.0
    %1728 = vmatpush1.msra.mxu0 0.0
    %1729 = vmatprep.subr.mxu0 0.0
    %1730 = vmatpush1.msra.mxu0 0.0
    %1731 = vmatprep.subr.mxu0 0.0
    %1732 = vmatpush1.msra.mxu0 0.0
    %1733 = vmatprep.subr.mxu0 0.0
    %1734 = vmatpush1.msra.mxu0 0.0
    %1735 = vmatprep.subr.mxu0 0.0
    %1736 = vmatpush1.msra.mxu0 0.0
    %1737 = vmatprep.subr.mxu0 0.0
    %1738 = vmatpush1.msra.mxu0 0.0
    %1739 = vmatprep.subr.mxu0 0.0
    %1740 = vmatpush1.msra.mxu0 0.0
    %1741 = vmatprep.subr.mxu0 0.0
    %1742 = vmatpush1.msra.mxu0 0.0
    %1743 = vmatprep.subr.mxu0 0.0
    %1744 = vmatpush1.msra.mxu0 0.0
    %1745 = vmatprep.subr.mxu0 0.0
    %1746 = vmatpush1.msra.mxu0 0.0
    %1747 = vmatprep.subr.mxu0 0.0
    %1748 = vmatpush1.msra.mxu0 0.0
    %1749 = vmatprep.subr.mxu0 0.0
    %1750 = vmatpush1.msra.mxu0 0.0
    %1751 = vmatprep.mubr.f32.mxu0 0.0
    %1752 = vmatmul.mubr.f32.gmra.mrb[0].mxu0 %v1685
    %v1753 = vpop.f32.mrb[0].mxu0
    %v1754 = vadd.f32 0.0, %v1753
    %v1755 = vpop.f32.mrb[0].mxu0
    %v1756 = vadd.f32 0.0, %v1755
    %1757 = vdwg.mxu0
    %1758 = vmatprep.subr.mxu0 %v649
    %1759 = vmatpush1.msra.mxu0 %v648
    %1760 = vmatprep.subr.mxu0 %v653
    %1761 = vmatpush1.msra.mxu0 %v652
    %1762 = vmatprep.subr.mxu0 %v657
    %1763 = vmatpush1.msra.mxu0 %v656
    %1764 = vmatprep.subr.mxu0 %v661
    %1765 = vmatpush1.msra.mxu0 %v660
    %1766 = vmatprep.subr.mxu0 %v665
    %1767 = vmatpush1.msra.mxu0 %v664
    %1768 = vmatprep.subr.mxu0 %v669
    %1769 = vmatpush1.msra.mxu0 %v668
    %1770 = vmatprep.subr.mxu0 %v673
    %1771 = vmatpush1.msra.mxu0 %v672
    %1772 = vmatprep.subr.mxu0 %v677
    %1773 = vmatpush1.msra.mxu0 %v676
    %1774 = vmatprep.subr.mxu0 %v681
    %1775 = vmatpush1.msra.mxu0 %v680
    %1776 = vmatprep.subr.mxu0 %v685
    %1777 = vmatpush1.msra.mxu0 %v684
    %1778 = vmatprep.subr.mxu0 %v689
    %1779 = vmatpush1.msra.mxu0 %v688
    %1780 = vmatprep.subr.mxu0 %v693
    %1781 = vmatpush1.msra.mxu0 %v692
    %1782 = vmatprep.subr.mxu0 %v697
    %1783 = vmatpush1.msra.mxu0 %v696
    %1784 = vmatprep.subr.mxu0 %v701
    %1785 = vmatpush1.msra.mxu0 %v700
    %1786 = vmatprep.subr.mxu0 %v705
    %1787 = vmatpush1.msra.mxu0 %v704
    %1788 = vmatprep.subr.mxu0 %v709
    %1789 = vmatpush1.msra.mxu0 %v708
    %1790 = vmatprep.subr.mxu0 0.0
    %1791 = vmatpush1.msra.mxu0 0.0
    %1792 = vmatprep.subr.mxu0 0.0
    %1793 = vmatpush1.msra.mxu0 0.0
    %1794 = vmatprep.subr.mxu0 0.0
    %1795 = vmatpush1.msra.mxu0 0.0
    %1796 = vmatprep.subr.mxu0 0.0
    %1797 = vmatpush1.msra.mxu0 0.0
    %1798 = vmatprep.subr.mxu0 0.0
    %1799 = vmatpush1.msra.mxu0 0.0
    %1800 = vmatprep.subr.mxu0 0.0
    %1801 = vmatpush1.msra.mxu0 0.0
    %1802 = vmatprep.subr.mxu0 0.0
    %1803 = vmatpush1.msra.mxu0 0.0
    %1804 = vmatprep.subr.mxu0 0.0
    %1805 = vmatpush1.msra.mxu0 0.0
    %1806 = vmatprep.subr.mxu0 0.0
    %1807 = vmatpush1.msra.mxu0 0.0
    %1808 = vmatprep.subr.mxu0 0.0
    %1809 = vmatpush1.msra.mxu0 0.0
    %1810 = vmatprep.subr.mxu0 0.0
    %1811 = vmatpush1.msra.mxu0 0.0
    %1812 = vmatprep.subr.mxu0 0.0
    %1813 = vmatpush1.msra.mxu0 0.0
    %1814 = vmatprep.subr.mxu0 0.0
    %1815 = vmatpush1.msra.mxu0 0.0
    %1816 = vmatprep.subr.mxu0 0.0
    %1817 = vmatpush1.msra.mxu0 0.0
    %1818 = vmatprep.subr.mxu0 0.0
    %1819 = vmatpush1.msra.mxu0 0.0
    %1820 = vmatprep.subr.mxu0 0.0
    %1821 = vmatpush1.msra.mxu0 0.0
    %1822 = vmatprep.mubr.f32.mxu0 0.0
    %1823 = vmatmul.mubr.f32.gmra.mrb[0].mxu0 %v1685
    %v1824 = vpop.f32.mrb[0].mxu0
    %v1825 = vadd.f32 0.0, %v1824
    %v1826 = vpop.f32.mrb[0].mxu0
    %v1827 = vadd.f32 0.0, %v1826
    %1828 = vdwg.mxu0
    %v1833 = vrot.slane %v1754, 6
    %v1834 = vrot.slane %v1756, 6
    %v1835 = vrot.slane %v1825, 6
    %v1836 = vrot.slane %v1827, 6
    %v1837 = vrot.slane %v1754, 7
    %v1838 = vrot.slane %v1756, 7
    %v1839 = vrot.slane %v1825, 7
    %v1840 = vrot.slane %v1827, 7
    %v1849 = vadd.f32 %v405, %v1833
    %v1850 = vadd.f32 %v407, %v1834
    %v1851 = vadd.f32 %v482, %v1835
    %v1852 = vadd.f32 %v484, %v1836
    %v1853 = vadd.f32 %v411, %v1837
    %v1854 = vadd.f32 %v413, %v1838
    %v1855 = vadd.f32 %v488, %v1839
    %v1856 = vadd.f32 %v490, %v1840
    %v1857 = vrot.slane %v1668, 5
    %v1858 = vsel %vm1219, %v1857, %v1679
    %1860 = vmatprep.subr.mxu0 %v711
    %1861 = vmatpush1.msra.mxu0 %v710
    %1862 = vmatprep.subr.mxu0 %v715
    %1863 = vmatpush1.msra.mxu0 %v714
    %1864 = vmatprep.subr.mxu0 %v719
    %1865 = vmatpush1.msra.mxu0 %v718
    %1866 = vmatprep.subr.mxu0 %v723
    %1867 = vmatpush1.msra.mxu0 %v722
    %1868 = vmatprep.subr.mxu0 %v727
    %1869 = vmatpush1.msra.mxu0 %v726
    %1870 = vmatprep.subr.mxu0 %v731
    %1871 = vmatpush1.msra.mxu0 %v730
    %1872 = vmatprep.subr.mxu0 %v735
    %1873 = vmatpush1.msra.mxu0 %v734
    %1874 = vmatprep.subr.mxu0 %v739
    %1875 = vmatpush1.msra.mxu0 %v738
    %1876 = vmatprep.subr.mxu0 %v743
    %1877 = vmatpush1.msra.mxu0 %v742
    %1878 = vmatprep.subr.mxu0 %v747
    %1879 = vmatpush1.msra.mxu0 %v746
    %1880 = vmatprep.subr.mxu0 %v751
    %1881 = vmatpush1.msra.mxu0 %v750
    %1882 = vmatprep.subr.mxu0 %v755
    %1883 = vmatpush1.msra.mxu0 %v754
    %1884 = vmatprep.subr.mxu0 %v759
    %1885 = vmatpush1.msra.mxu0 %v758
    %1886 = vmatprep.subr.mxu0 %v763
    %1887 = vmatpush1.msra.mxu0 %v762
    %1888 = vmatprep.subr.mxu0 %v767
    %1889 = vmatpush1.msra.mxu0 %v766
    %1890 = vmatprep.subr.mxu0 %v771
    %1891 = vmatpush1.msra.mxu0 %v770
    %1892 = vmatprep.subr.mxu0 0.0
    %1893 = vmatpush1.msra.mxu0 0.0
    %1894 = vmatprep.subr.mxu0 0.0
    %1895 = vmatpush1.msra.mxu0 0.0
    %1896 = vmatprep.subr.mxu0 0.0
    %1897 = vmatpush1.msra.mxu0 0.0
    %1898 = vmatprep.subr.mxu0 0.0
    %1899 = vmatpush1.msra.mxu0 0.0
    %1900 = vmatprep.subr.mxu0 0.0
    %1901 = vmatpush1.msra.mxu0 0.0
    %1902 = vmatprep.subr.mxu0 0.0
    %1903 = vmatpush1.msra.mxu0 0.0
    %1904 = vmatprep.subr.mxu0 0.0
    %1905 = vmatpush1.msra.mxu0 0.0
    %1906 = vmatprep.subr.mxu0 0.0
    %1907 = vmatpush1.msra.mxu0 0.0
    %1908 = vmatprep.subr.mxu0 0.0
    %1909 = vmatpush1.msra.mxu0 0.0
    %1910 = vmatprep.subr.mxu0 0.0
    %1911 = vmatpush1.msra.mxu0 0.0
    %1912 = vmatprep.subr.mxu0 0.0
    %1913 = vmatpush1.msra.mxu0 0.0
    %1914 = vmatprep.subr.mxu0 0.0
    %1915 = vmatpush1.msra.mxu0 0.0
    %1916 = vmatprep.subr.mxu0 0.0
    %1917 = vmatpush1.msra.mxu0 0.0
    %1918 = vmatprep.subr.mxu0 0.0
    %1919 = vmatpush1.msra.mxu0 0.0
    %1920 = vmatprep.subr.mxu0 0.0
    %1921 = vmatpush1.msra.mxu0 0.0
    %1922 = vmatprep.subr.mxu0 0.0
    %1923 = vmatpush1.msra.mxu0 0.0
    %1924 = vmatprep.mubr.f32.mxu0 0.0
    %1925 = vmatmul.mubr.f32.gmra.mrb[0].mxu0 %v1858
    %v1926 = vpop.f32.mrb[0].mxu0
    %v1927 = vadd.f32 0.0, %v1926
    %v1928 = vpop.f32.mrb[0].mxu0
    %v1929 = vadd.f32 0.0, %v1928
    %1930 = vdwg.mxu0
    %1931 = vmatprep.subr.mxu0 %v713
    %1932 = vmatpush1.msra.mxu0 %v712
    %1933 = vmatprep.subr.mxu0 %v717
    %1934 = vmatpush1.msra.mxu0 %v716
    %1935 = vmatprep.subr.mxu0 %v721
    %1936 = vmatpush1.msra.mxu0 %v720
    %1937 = vmatprep.subr.mxu0 %v725
    %1938 = vmatpush1.msra.mxu0 %v724
    %1939 = vmatprep.subr.mxu0 %v729
    %1940 = vmatpush1.msra.mxu0 %v728
    %1941 = vmatprep.subr.mxu0 %v733
    %1942 = vmatpush1.msra.mxu0 %v732
    %1943 = vmatprep.subr.mxu0 %v737
    %1944 = vmatpush1.msra.mxu0 %v736
    %1945 = vmatprep.subr.mxu0 %v741
    %1946 = vmatpush1.msra.mxu0 %v740
    %1947 = vmatprep.subr.mxu0 %v745
    %1948 = vmatpush1.msra.mxu0 %v744
    %1949 = vmatprep.subr.mxu0 %v749
    %1950 = vmatpush1.msra.mxu0 %v748
    %1951 = vmatprep.subr.mxu0 %v753
    %1952 = vmatpush1.msra.mxu0 %v752
    %1953 = vmatprep.subr.mxu0 %v757
    %1954 = vmatpush1.msra.mxu0 %v756
    %1955 = vmatprep.subr.mxu0 %v761
    %1956 = vmatpush1.msra.mxu0 %v760
    %1957 = vmatprep.subr.mxu0 %v765
    %1958 = vmatpush1.msra.mxu0 %v764
    %1959 = vmatprep.subr.mxu0 %v769
    %1960 = vmatpush1.msra.mxu0 %v768
    %1961 = vmatprep.subr.mxu0 %v773
    %1962 = vmatpush1.msra.mxu0 %v772
    %1963 = vmatprep.subr.mxu0 0.0
    %1964 = vmatpush1.msra.mxu0 0.0
    %1965 = vmatprep.subr.mxu0 0.0
    %1966 = vmatpush1.msra.mxu0 0.0
    %1967 = vmatprep.subr.mxu0 0.0
    %1968 = vmatpush1.msra.mxu0 0.0
    %1969 = vmatprep.subr.mxu0 0.0
    %1970 = vmatpush1.msra.mxu0 0.0
    %1971 = vmatprep.subr.mxu0 0.0
    %1972 = vmatpush1.msra.mxu0 0.0
    %1973 = vmatprep.subr.mxu0 0.0
    %1974 = vmatpush1.msra.mxu0 0.0
    %1975 = vmatprep.subr.mxu0 0.0
    %1976 = vmatpush1.msra.mxu0 0.0
    %1977 = vmatprep.subr.mxu0 0.0
    %1978 = vmatpush1.msra.mxu0 0.0
    %1979 = vmatprep.subr.mxu0 0.0
    %1980 = vmatpush1.msra.mxu0 0.0
    %1981 = vmatprep.subr.mxu0 0.0
    %1982 = vmatpush1.msra.mxu0 0.0
    %1983 = vmatprep.subr.mxu0 0.0
    %1984 = vmatpush1.msra.mxu0 0.0
    %1985 = vmatprep.subr.mxu0 0.0
    %1986 = vmatpush1.msra.mxu0 0.0
    %1987 = vmatprep.subr.mxu0 0.0
    %1988 = vmatpush1.msra.mxu0 0.0
    %1989 = vmatprep.subr.mxu0 0.0
    %1990 = vmatpush1.msra.mxu0 0.0
    %1991 = vmatprep.subr.mxu0 0.0
    %1992 = vmatpush1.msra.mxu0 0.0
    %1993 = vmatprep.subr.mxu0 0.0
    %1994 = vmatpush1.msra.mxu0 0.0
    %1995 = vmatprep.mubr.f32.mxu0 0.0
    %1996 = vmatmul.mubr.f32.gmra.mrb[0].mxu0 %v1858
    %v1997 = vpop.f32.mrb[0].mxu0
    %v1998 = vadd.f32 0.0, %v1997
    %v1999 = vpop.f32.mrb[0].mxu0
    %v2000 = vadd.f32 0.0, %v1999
    %2001 = vdwg.mxu0
    %v2006 = vrot.slane %v1927, 3
    %v2007 = vrot.slane %v1929, 3
    %v2008 = vrot.slane %v1998, 3
    %v2009 = vrot.slane %v2000, 3
    %v2010 = vrot.slane %v1927, 4
    %v2011 = vrot.slane %v1929, 4
    %v2012 = vrot.slane %v1998, 4
    %v2013 = vrot.slane %v2000, 4
    %v2022 = vadd.f32 %v559, %v2006
    %v2023 = vadd.f32 %v561, %v2007
    %v2024 = vadd.f32 %v636, %v2008
    %v2025 = vadd.f32 %v638, %v2009
    %v2026 = vadd.f32 %v565, %v2010
    %v2027 = vadd.f32 %v567, %v2011
    %v2028 = vadd.f32 %v642, %v2012
    %v2029 = vadd.f32 %v644, %v2013
    %v2030 = vxor.u32 %v1849, 2147483648
    %v2031 = vxor.u32 %v1853, 2147483648
    %v2032 = vmul.f32 %v2030, 1.442695
    %v2033 = vpow.pop %v2032
    %v2034 = vmul.f32 %v2031, 1.442695
    %v2035 = vpow.pop %v2034
    %v2036 = vadd.f32 %v2033, 1.0
    %v2037 = vadd.f32 %v2035, 1.0
    %v2038 = vrcp.pop %v2036
    %v2039 = vmul.f32 1.0, %v2038
    %v2040 = vrcp.pop %v2037
    %v2041 = vmul.f32 1.0, %v2040
    %v2042 = vxor.u32 %v1850, 2147483648
    %v2043 = vxor.u32 %v1854, 2147483648
    %v2044 = vmul.f32 %v2042, 1.442695
    %v2045 = vpow.pop %v2044
    %v2046 = vmul.f32 %v2043, 1.442695
    %v2047 = vpow.pop %v2046
    %v2048 = vadd.f32 %v2045, 1.0
    %v2049 = vadd.f32 %v2047, 1.0
    %v2050 = vrcp.pop %v2048
    %v2051 = vmul.f32 1.0, %v2050
    %v2052 = vrcp.pop %v2049
    %v2053 = vmul.f32 1.0, %v2052
    %v2054 = vtanh.pop %v1851
    %v2055 = vtanh.pop %v1855
    %v2056 = vxor.u32 %v1852, 2147483648
    %v2057 = vxor.u32 %v1856, 2147483648
    %v2058 = vmul.f32 %v2056, 1.442695
    %v2059 = vpow.pop %v2058
    %v2060 = vmul.f32 %v2057, 1.442695
    %v2061 = vpow.pop %v2060
    %v2062 = vadd.f32 %v2059, 1.0
    %v2063 = vadd.f32 %v2061, 1.0
    %v2064 = vrcp.pop %v2062
    %v2065 = vmul.f32 1.0, %v2064
    %v2066 = vrcp.pop %v2063
    %v2067 = vmul.f32 1.0, %v2066
    %v2070 = vrot.slane %v1609, 7
    %v2071 = vrot.slane %v1610, 7
    %v2074 = vmul.f32 %v2051, %v2070
    %v2075 = vmul.f32 %v2053, %v2071
    %v2076 = vmul.f32 %v2039, %v2054
    %v2077 = vmul.f32 %v2041, %v2055
    %v2078 = vadd.f32 %v2074, %v2076
    %v2079 = vadd.f32 %v2075, %v2077
    %v2080 = vtanh.pop %v2078
    %v2081 = vtanh.pop %v2079
    %v2082 = vmul.f32 %v2065, %v2080
    %v2083 = vmul.f32 %v2067, %v2081
    %v2084 = vxor.u32 %v2022, 2147483648
    %v2085 = vxor.u32 %v2026, 2147483648
    %v2086 = vmul.f32 %v2084, 1.442695
    %v2087 = vpow.pop %v2086
    %v2088 = vmul.f32 %v2085, 1.442695
    %v2089 = vpow.pop %v2088
    %v2090 = vadd.f32 %v2087, 1.0
    %v2091 = vadd.f32 %v2089, 1.0
    %v2092 = vrcp.pop %v2090
    %v2093 = vmul.f32 1.0, %v2092
    %v2094 = vrcp.pop %v2091
    %v2095 = vmul.f32 1.0, %v2094
    %v2096 = vxor.u32 %v2023, 2147483648
    %v2097 = vxor.u32 %v2027, 2147483648
    %v2098 = vmul.f32 %v2096, 1.442695
    %v2099 = vpow.pop %v2098
    %v2100 = vmul.f32 %v2097, 1.442695
    %v2101 = vpow.pop %v2100
    %v2102 = vadd.f32 %v2099, 1.0
    %v2103 = vadd.f32 %v2101, 1.0
    %v2104 = vrcp.pop %v2102
    %v2105 = vmul.f32 1.0, %v2104
    %v2106 = vrcp.pop %v2103
    %v2107 = vmul.f32 1.0, %v2106
    %v2108 = vtanh.pop %v2024
    %v2109 = vtanh.pop %v2028
    %v2110 = vxor.u32 %v2025, 2147483648
    %v2111 = vxor.u32 %v2029, 2147483648
    %v2112 = vmul.f32 %v2110, 1.442695
    %v2113 = vpow.pop %v2112
    %v2114 = vmul.f32 %v2111, 1.442695
    %v2115 = vpow.pop %v2114
    %v2116 = vadd.f32 %v2113, 1.0
    %v2117 = vadd.f32 %v2115, 1.0
    %v2118 = vrcp.pop %v2116
    %v2119 = vmul.f32 1.0, %v2118
    %v2120 = vrcp.pop %v2117
    %v2121 = vmul.f32 1.0, %v2120
    %v2124 = vrot.slane %v1663, 1
    %v2125 = vrot.slane %v1664, 1
    %v2128 = vmul.f32 %v2105, %v2124
    %v2129 = vmul.f32 %v2107, %v2125
    %v2130 = vmul.f32 %v2093, %v2108
    %v2131 = vmul.f32 %v2095, %v2109
    %v2132 = vadd.f32 %v2128, %v2130
    %v2133 = vadd.f32 %v2129, %v2131
    %v2134 = vtanh.pop %v2132
    %v2135 = vtanh.pop %v2133
    %v2136 = vmul.f32 %v2119, %v2134
    %v2137 = vmul.f32 %v2121, %v2135
    %v2140 = vrot.slane %v2082, 2
    %v2141 = vrot.slane %v2083, 2
    %2144 = vst [vmem:[#allocation2 + $0x2] sm:$0x1] %v2140
    %2145 = vst [vmem:[#allocation2 + $0x12] sm:$0x1] %v2141
    %v2148 = vrot.slane %v2136, 5
    %v2149 = vrot.slane %v2137, 5
    %2152 = vst [vmem:[#allocation2 + $0xd] sm:$0x1] %v2148
    %2153 = vst [vmem:[#allocation2 + $0x1d] sm:$0x1] %v2149
    %v2154 = vrot.slane %v2083, 1
    %v2155 = vsel %vm1219, %v2154, %v2140
    %2157 = vmatprep.subr.mxu0 %v647
    %2158 = vmatpush1.msra.mxu0 %v646
    %2159 = vmatprep.subr.mxu0 %v651
    %2160 = vmatpush1.msra.mxu0 %v650
    %2161 = vmatprep.subr.mxu0 %v655
    %2162 = vmatpush1.msra.mxu0 %v654
    %2163 = vmatprep.subr.mxu0 %v659
    %2164 = vmatpush1.msra.mxu0 %v658
    %2165 = vmatprep.subr.mxu0 %v663
    %2166 = vmatpush1.msra.mxu0 %v662
    %2167 = vmatprep.subr.mxu0 %v667
    %2168 = vmatpush1.msra.mxu0 %v666
    %2169 = vmatprep.subr.mxu0 %v671
    %2170 = vmatpush1.msra.mxu0 %v670
    %2171 = vmatprep.subr.mxu0 %v675
    %2172 = vmatpush1.msra.mxu0 %v674
    %2173 = vmatprep.subr.mxu0 %v679
    %2174 = vmatpush1.msra.mxu0 %v678
    %2175 = vmatprep.subr.mxu0 %v683
    %2176 = vmatpush1.msra.mxu0 %v682
    %2177 = vmatprep.subr.mxu0 %v687
    %2178 = vmatpush1.msra.mxu0 %v686
    %2179 = vmatprep.subr.mxu0 %v691
    %2180 = vmatpush1.msra.mxu0 %v690
    %2181 = vmatprep.subr.mxu0 %v695
    %2182 = vmatpush1.msra.mxu0 %v694
    %2183 = vmatprep.subr.mxu0 %v699
    %2184 = vmatpush1.msra.mxu0 %v698
    %2185 = vmatprep.subr.mxu0 %v703
    %2186 = vmatpush1.msra.mxu0 %v702
    %2187 = vmatprep.subr.mxu0 %v707
    %2188 = vmatpush1.msra.mxu0 %v706
    %2189 = vmatprep.subr.mxu0 0.0
    %2190 = vmatpush1.msra.mxu0 0.0
    %2191 = vmatprep.subr.mxu0 0.0
    %2192 = vmatpush1.msra.mxu0 0.0
    %2193 = vmatprep.subr.mxu0 0.0
    %2194 = vmatpush1.msra.mxu0 0.0
    %2195 = vmatprep.subr.mxu0 0.0
    %2196 = vmatpush1.msra.mxu0 0.0
    %2197 = vmatprep.subr.mxu0 0.0
    %2198 = vmatpush1.msra.mxu0 0.0
    %2199 = vmatprep.subr.mxu0 0.0
    %2200 = vmatpush1.msra.mxu0 0.0
    %2201 = vmatprep.subr.mxu0 0.0
    %2202 = vmatpush1.msra.mxu0 0.0
    %2203 = vmatprep.subr.mxu0 0.0
    %2204 = vmatpush1.msra.mxu0 0.0
    %2205 = vmatprep.subr.mxu0 0.0
    %2206 = vmatpush1.msra.mxu0 0.0
    %2207 = vmatprep.subr.mxu0 0.0
    %2208 = vmatpush1.msra.mxu0 0.0
    %2209 = vmatprep.subr.mxu0 0.0
    %2210 = vmatpush1.msra.mxu0 0.0
    %2211 = vmatprep.subr.mxu0 0.0
    %2212 = vmatpush1.msra.mxu0 0.0
    %2213 = vmatprep.subr.mxu0 0.0
    %2214 = vmatpush1.msra.mxu0 0.0
    %2215 = vmatprep.subr.mxu0 0.0
    %2216 = vmatpush1.msra.mxu0 0.0
    %2217 = vmatprep.subr.mxu0 0.0
    %2218 = vmatpush1.msra.mxu0 0.0
    %2219 = vmatprep.subr.mxu0 0.0
    %2220 = vmatpush1.msra.mxu0 0.0
    %2221 = vmatprep.mubr.f32.mxu0 0.0
    %2222 = vmatmul.mubr.f32.gmra.mrb[0].mxu0 %v2155
    %v2223 = vpop.f32.mrb[0].mxu0
    %v2224 = vadd.f32 0.0, %v2223
    %v2225 = vpop.f32.mrb[0].mxu0
    %v2226 = vadd.f32 0.0, %v2225
    %2227 = vdwg.mxu0
    %2228 = vmatprep.subr.mxu0 %v649
    %2229 = vmatpush1.msra.mxu0 %v648
    %2230 = vmatprep.subr.mxu0 %v653
    %2231 = vmatpush1.msra.mxu0 %v652
    %2232 = vmatprep.subr.mxu0 %v657
    %2233 = vmatpush1.msra.mxu0 %v656
    %2234 = vmatprep.subr.mxu0 %v661
    %2235 = vmatpush1.msra.mxu0 %v660
    %2236 = vmatprep.subr.mxu0 %v665
    %2237 = vmatpush1.msra.mxu0 %v664
    %2238 = vmatprep.subr.mxu0 %v669
    %2239 = vmatpush1.msra.mxu0 %v668
    %2240 = vmatprep.subr.mxu0 %v673
    %2241 = vmatpush1.msra.mxu0 %v672
    %2242 = vmatprep.subr.mxu0 %v677
    %2243 = vmatpush1.msra.mxu0 %v676
    %2244 = vmatprep.subr.mxu0 %v681
    %2245 = vmatpush1.msra.mxu0 %v680
    %2246 = vmatprep.subr.mxu0 %v685
    %2247 = vmatpush1.msra.mxu0 %v684
    %2248 = vmatprep.subr.mxu0 %v689
    %2249 = vmatpush1.msra.mxu0 %v688
    %2250 = vmatprep.subr.mxu0 %v693
    %2251 = vmatpush1.msra.mxu0 %v692
    %2252 = vmatprep.subr.mxu0 %v697
    %2253 = vmatpush1.msra.mxu0 %v696
    %2254 = vmatprep.subr.mxu0 %v701
    %2255 = vmatpush1.msra.mxu0 %v700
    %2256 = vmatprep.subr.mxu0 %v705
    %2257 = vmatpush1.msra.mxu0 %v704
    %2258 = vmatprep.subr.mxu0 %v709
    %2259 = vmatpush1.msra.mxu0 %v708
    %2260 = vmatprep.subr.mxu0 0.0
    %2261 = vmatpush1.msra.mxu0 0.0
    %2262 = vmatprep.subr.mxu0 0.0
    %2263 = vmatpush1.msra.mxu0 0.0
    %2264 = vmatprep.subr.mxu0 0.0
    %2265 = vmatpush1.msra.mxu0 0.0
    %2266 = vmatprep.subr.mxu0 0.0
    %2267 = vmatpush1.msra.mxu0 0.0
    %2268 = vmatprep.subr.mxu0 0.0
    %2269 = vmatpush1.msra.mxu0 0.0
    %2270 = vmatprep.subr.mxu0 0.0
    %2271 = vmatpush1.msra.mxu0 0.0
    %2272 = vmatprep.subr.mxu0 0.0
    %2273 = vmatpush1.msra.mxu0 0.0
    %2274 = vmatprep.subr.mxu0 0.0
    %2275 = vmatpush1.msra.mxu0 0.0
    %2276 = vmatprep.subr.mxu0 0.0
    %2277 = vmatpush1.msra.mxu0 0.0
    %2278 = vmatprep.subr.mxu0 0.0
    %2279 = vmatpush1.msra.mxu0 0.0
    %2280 = vmatprep.subr.mxu0 0.0
    %2281 = vmatpush1.msra.mxu0 0.0
    %2282 = vmatprep.subr.mxu0 0.0
    %2283 = vmatpush1.msra.mxu0 0.0
    %2284 = vmatprep.subr.mxu0 0.0
    %2285 = vmatpush1.msra.mxu0 0.0
    %2286 = vmatprep.subr.mxu0 0.0
    %2287 = vmatpush1.msra.mxu0 0.0
    %2288 = vmatprep.subr.mxu0 0.0
    %2289 = vmatpush1.msra.mxu0 0.0
    %2290 = vmatprep.subr.mxu0 0.0
    %2291 = vmatpush1.msra.mxu0 0.0
    %2292 = vmatprep.mubr.f32.mxu0 0.0
    %2293 = vmatmul.mubr.f32.gmra.mrb[0].mxu0 %v2155
    %v2294 = vpop.f32.mrb[0].mxu0
    %v2295 = vadd.f32 0.0, %v2294
    %v2296 = vpop.f32.mrb[0].mxu0
    %v2297 = vadd.f32 0.0, %v2296
    %2298 = vdwg.mxu0
    %v2303 = vrot.slane %v2224, 5
    %v2304 = vrot.slane %v2226, 5
    %v2305 = vrot.slane %v2295, 5
    %v2306 = vrot.slane %v2297, 5
    %v2307 = vrot.slane %v2224, 6
    %v2308 = vrot.slane %v2226, 6
    %v2309 = vrot.slane %v2295, 6
    %v2310 = vrot.slane %v2297, 6
    %v2319 = vadd.f32 %v405, %v2303
    %v2320 = vadd.f32 %v407, %v2304
    %v2321 = vadd.f32 %v482, %v2305
    %v2322 = vadd.f32 %v484, %v2306
    %v2323 = vadd.f32 %v411, %v2307
    %v2324 = vadd.f32 %v413, %v2308
    %v2325 = vadd.f32 %v488, %v2309
    %v2326 = vadd.f32 %v490, %v2310
    %v2327 = vrot.slane %v2137, 4
    %v2328 = vsel %vm1219, %v2327, %v2148
    %2330 = vmatprep.subr.mxu0 %v711
    %2331 = vmatpush1.msra.mxu0 %v710
    %2332 = vmatprep.subr.mxu0 %v715
    %2333 = vmatpush1.msra.mxu0 %v714
    %2334 = vmatprep.subr.mxu0 %v719
    %2335 = vmatpush1.msra.mxu0 %v718
    %2336 = vmatprep.subr.mxu0 %v723
    %2337 = vmatpush1.msra.mxu0 %v722
    %2338 = vmatprep.subr.mxu0 %v727
    %2339 = vmatpush1.msra.mxu0 %v726
    %2340 = vmatprep.subr.mxu0 %v731
    %2341 = vmatpush1.msra.mxu0 %v730
    %2342 = vmatprep.subr.mxu0 %v735
    %2343 = vmatpush1.msra.mxu0 %v734
    %2344 = vmatprep.subr.mxu0 %v739
    %2345 = vmatpush1.msra.mxu0 %v738
    %2346 = vmatprep.subr.mxu0 %v743
    %2347 = vmatpush1.msra.mxu0 %v742
    %2348 = vmatprep.subr.mxu0 %v747
    %2349 = vmatpush1.msra.mxu0 %v746
    %2350 = vmatprep.subr.mxu0 %v751
    %2351 = vmatpush1.msra.mxu0 %v750
    %2352 = vmatprep.subr.mxu0 %v755
    %2353 = vmatpush1.msra.mxu0 %v754
    %2354 = vmatprep.subr.mxu0 %v759
    %2355 = vmatpush1.msra.mxu0 %v758
    %2356 = vmatprep.subr.mxu0 %v763
    %2357 = vmatpush1.msra.mxu0 %v762
    %2358 = vmatprep.subr.mxu0 %v767
    %2359 = vmatpush1.msra.mxu0 %v766
    %2360 = vmatprep.subr.mxu0 %v771
    %2361 = vmatpush1.msra.mxu0 %v770
    %2362 = vmatprep.subr.mxu0 0.0
    %2363 = vmatpush1.msra.mxu0 0.0
    %2364 = vmatprep.subr.mxu0 0.0
    %2365 = vmatpush1.msra.mxu0 0.0
    %2366 = vmatprep.subr.mxu0 0.0
    %2367 = vmatpush1.msra.mxu0 0.0
    %2368 = vmatprep.subr.mxu0 0.0
    %2369 = vmatpush1.msra.mxu0 0.0
    %2370 = vmatprep.subr.mxu0 0.0
    %2371 = vmatpush1.msra.mxu0 0.0
    %2372 = vmatprep.subr.mxu0 0.0
    %2373 = vmatpush1.msra.mxu0 0.0
    %2374 = vmatprep.subr.mxu0 0.0
    %2375 = vmatpush1.msra.mxu0 0.0
    %2376 = vmatprep.subr.mxu0 0.0
    %2377 = vmatpush1.msra.mxu0 0.0
    %2378 = vmatprep.subr.mxu0 0.0
    %2379 = vmatpush1.msra.mxu0 0.0
    %2380 = vmatprep.subr.mxu0 0.0
    %2381 = vmatpush1.msra.mxu0 0.0
    %2382 = vmatprep.subr.mxu0 0.0
    %2383 = vmatpush1.msra.mxu0 0.0
    %2384 = vmatprep.subr.mxu0 0.0
    %2385 = vmatpush1.msra.mxu0 0.0
    %2386 = vmatprep.subr.mxu0 0.0
    %2387 = vmatpush1.msra.mxu0 0.0
    %2388 = vmatprep.subr.mxu0 0.0
    %2389 = vmatpush1.msra.mxu0 0.0
    %2390 = vmatprep.subr.mxu0 0.0
    %2391 = vmatpush1.msra.mxu0 0.0
    %2392 = vmatprep.subr.mxu0 0.0
    %2393 = vmatpush1.msra.mxu0 0.0
    %2394 = vmatprep.mubr.f32.mxu0 0.0
    %2395 = vmatmul.mubr.f32.gmra.mrb[0].mxu0 %v2328
    %v2396 = vpop.f32.mrb[0].mxu0
    %v2397 = vadd.f32 0.0, %v2396
    %v2398 = vpop.f32.mrb[0].mxu0
    %v2399 = vadd.f32 0.0, %v2398
    %2400 = vdwg.mxu0
    %2401 = vmatprep.subr.mxu0 %v713
    %2402 = vmatpush1.msra.mxu0 %v712
    %2403 = vmatprep.subr.mxu0 %v717
    %2404 = vmatpush1.msra.mxu0 %v716
    %2405 = vmatprep.subr.mxu0 %v721
    %2406 = vmatpush1.msra.mxu0 %v720
    %2407 = vmatprep.subr.mxu0 %v725
    %2408 = vmatpush1.msra.mxu0 %v724
    %2409 = vmatprep.subr.mxu0 %v729
    %2410 = vmatpush1.msra.mxu0 %v728
    %2411 = vmatprep.subr.mxu0 %v733
    %2412 = vmatpush1.msra.mxu0 %v732
    %2413 = vmatprep.subr.mxu0 %v737
    %2414 = vmatpush1.msra.mxu0 %v736
    %2415 = vmatprep.subr.mxu0 %v741
    %2416 = vmatpush1.msra.mxu0 %v740
    %2417 = vmatprep.subr.mxu0 %v745
    %2418 = vmatpush1.msra.mxu0 %v744
    %2419 = vmatprep.subr.mxu0 %v749
    %2420 = vmatpush1.msra.mxu0 %v748
    %2421 = vmatprep.subr.mxu0 %v753
    %2422 = vmatpush1.msra.mxu0 %v752
    %2423 = vmatprep.subr.mxu0 %v757
    %2424 = vmatpush1.msra.mxu0 %v756
    %2425 = vmatprep.subr.mxu0 %v761
    %2426 = vmatpush1.msra.mxu0 %v760
    %2427 = vmatprep.subr.mxu0 %v765
    %2428 = vmatpush1.msra.mxu0 %v764
    %2429 = vmatprep.subr.mxu0 %v769
    %2430 = vmatpush1.msra.mxu0 %v768
    %2431 = vmatprep.subr.mxu0 %v773
    %2432 = vmatpush1.msra.mxu0 %v772
    %2433 = vmatprep.subr.mxu0 0.0
    %2434 = vmatpush1.msra.mxu0 0.0
    %2435 = vmatprep.subr.mxu0 0.0
    %2436 = vmatpush1.msra.mxu0 0.0
    %2437 = vmatprep.subr.mxu0 0.0
    %2438 = vmatpush1.msra.mxu0 0.0
    %2439 = vmatprep.subr.mxu0 0.0
    %2440 = vmatpush1.msra.mxu0 0.0
    %2441 = vmatprep.subr.mxu0 0.0
    %2442 = vmatpush1.msra.mxu0 0.0
    %2443 = vmatprep.subr.mxu0 0.0
    %2444 = vmatpush1.msra.mxu0 0.0
    %2445 = vmatprep.subr.mxu0 0.0
    %2446 = vmatpush1.msra.mxu0 0.0
    %2447 = vmatprep.subr.mxu0 0.0
    %2448 = vmatpush1.msra.mxu0 0.0
    %2449 = vmatprep.subr.mxu0 0.0
    %2450 = vmatpush1.msra.mxu0 0.0
    %2451 = vmatprep.subr.mxu0 0.0
    %2452 = vmatpush1.msra.mxu0 0.0
    %2453 = vmatprep.subr.mxu0 0.0
    %2454 = vmatpush1.msra.mxu0 0.0
    %2455 = vmatprep.subr.mxu0 0.0
    %2456 = vmatpush1.msra.mxu0 0.0
    %2457 = vmatprep.subr.mxu0 0.0
    %2458 = vmatpush1.msra.mxu0 0.0
    %2459 = vmatprep.subr.mxu0 0.0
    %2460 = vmatpush1.msra.mxu0 0.0
    %2461 = vmatprep.subr.mxu0 0.0
    %2462 = vmatpush1.msra.mxu0 0.0
    %2463 = vmatprep.subr.mxu0 0.0
    %2464 = vmatpush1.msra.mxu0 0.0
    %2465 = vmatprep.mubr.f32.mxu0 0.0
    %2466 = vmatmul.mubr.f32.gmra.mrb[0].mxu0 %v2328
    %v2467 = vpop.f32.mrb[0].mxu0
    %v2468 = vadd.f32 0.0, %v2467
    %v2469 = vpop.f32.mrb[0].mxu0
    %v2470 = vadd.f32 0.0, %v2469
    %2471 = vdwg.mxu0
    %v2476 = vrot.slane %v2397, 4
    %v2477 = vrot.slane %v2399, 4
    %v2478 = vrot.slane %v2468, 4
    %v2479 = vrot.slane %v2470, 4
    %v2480 = vrot.slane %v2397, 5
    %v2481 = vrot.slane %v2399, 5
    %v2482 = vrot.slane %v2468, 5
    %v2483 = vrot.slane %v2470, 5
    %v2492 = vadd.f32 %v559, %v2476
    %v2493 = vadd.f32 %v561, %v2477
    %v2494 = vadd.f32 %v636, %v2478
    %v2495 = vadd.f32 %v638, %v2479
    %v2496 = vadd.f32 %v565, %v2480
    %v2497 = vadd.f32 %v567, %v2481
    %v2498 = vadd.f32 %v642, %v2482
    %v2499 = vadd.f32 %v644, %v2483
    %v2500 = vxor.u32 %v2319, 2147483648
    %v2501 = vxor.u32 %v2323, 2147483648
    %v2502 = vmul.f32 %v2500, 1.442695
    %v2503 = vpow.pop %v2502
    %v2504 = vmul.f32 %v2501, 1.442695
    %v2505 = vpow.pop %v2504
    %v2506 = vadd.f32 %v2503, 1.0
    %v2507 = vadd.f32 %v2505, 1.0
    %v2508 = vrcp.pop %v2506
    %v2509 = vmul.f32 1.0, %v2508
    %v2510 = vrcp.pop %v2507
    %v2511 = vmul.f32 1.0, %v2510
    %v2512 = vxor.u32 %v2320, 2147483648
    %v2513 = vxor.u32 %v2324, 2147483648
    %v2514 = vmul.f32 %v2512, 1.442695
    %v2515 = vpow.pop %v2514
    %v2516 = vmul.f32 %v2513, 1.442695
    %v2517 = vpow.pop %v2516
    %v2518 = vadd.f32 %v2515, 1.0
    %v2519 = vadd.f32 %v2517, 1.0
    %v2520 = vrcp.pop %v2518
    %v2521 = vmul.f32 1.0, %v2520
    %v2522 = vrcp.pop %v2519
    %v2523 = vmul.f32 1.0, %v2522
    %v2524 = vtanh.pop %v2321
    %v2525 = vtanh.pop %v2325
    %v2526 = vxor.u32 %v2322, 2147483648
    %v2527 = vxor.u32 %v2326, 2147483648
    %v2528 = vmul.f32 %v2526, 1.442695
    %v2529 = vpow.pop %v2528
    %v2530 = vmul.f32 %v2527, 1.442695
    %v2531 = vpow.pop %v2530
    %v2532 = vadd.f32 %v2529, 1.0
    %v2533 = vadd.f32 %v2531, 1.0
    %v2534 = vrcp.pop %v2532
    %v2535 = vmul.f32 1.0, %v2534
    %v2536 = vrcp.pop %v2533
    %v2537 = vmul.f32 1.0, %v2536
    %v2540 = vrot.slane %v2078, 7
    %v2541 = vrot.slane %v2079, 7
    %v2544 = vmul.f32 %v2521, %v2540
    %v2545 = vmul.f32 %v2523, %v2541
    %v2546 = vmul.f32 %v2509, %v2524
    %v2547 = vmul.f32 %v2511, %v2525
    %v2548 = vadd.f32 %v2544, %v2546
    %v2549 = vadd.f32 %v2545, %v2547
    %v2550 = vtanh.pop %v2548
    %v2551 = vtanh.pop %v2549
    %v2552 = vmul.f32 %v2535, %v2550
    %v2553 = vmul.f32 %v2537, %v2551
    %v2554 = vxor.u32 %v2492, 2147483648
    %v2555 = vxor.u32 %v2496, 2147483648
    %v2556 = vmul.f32 %v2554, 1.442695
    %v2557 = vpow.pop %v2556
    %v2558 = vmul.f32 %v2555, 1.442695
    %v2559 = vpow.pop %v2558
    %v2560 = vadd.f32 %v2557, 1.0
    %v2561 = vadd.f32 %v2559, 1.0
    %v2562 = vrcp.pop %v2560
    %v2563 = vmul.f32 1.0, %v2562
    %v2564 = vrcp.pop %v2561
    %v2565 = vmul.f32 1.0, %v2564
    %v2566 = vxor.u32 %v2493, 2147483648
    %v2567 = vxor.u32 %v2497, 2147483648
    %v2568 = vmul.f32 %v2566, 1.442695
    %v2569 = vpow.pop %v2568
    %v2570 = vmul.f32 %v2567, 1.442695
    %v2571 = vpow.pop %v2570
    %v2572 = vadd.f32 %v2569, 1.0
    %v2573 = vadd.f32 %v2571, 1.0
    %v2574 = vrcp.pop %v2572
    %v2575 = vmul.f32 1.0, %v2574
    %v2576 = vrcp.pop %v2573
    %v2577 = vmul.f32 1.0, %v2576
    %v2578 = vtanh.pop %v2494
    %v2579 = vtanh.pop %v2498
    %v2580 = vxor.u32 %v2495, 2147483648
    %v2581 = vxor.u32 %v2499, 2147483648
    %v2582 = vmul.f32 %v2580, 1.442695
    %v2583 = vpow.pop %v2582
    %v2584 = vmul.f32 %v2581, 1.442695
    %v2585 = vpow.pop %v2584
    %v2586 = vadd.f32 %v2583, 1.0
    %v2587 = vadd.f32 %v2585, 1.0
    %v2588 = vrcp.pop %v2586
    %v2589 = vmul.f32 1.0, %v2588
    %v2590 = vrcp.pop %v2587
    %v2591 = vmul.f32 1.0, %v2590
    %v2594 = vrot.slane %v2132, 1
    %v2595 = vrot.slane %v2133, 1
    %v2598 = vmul.f32 %v2575, %v2594
    %v2599 = vmul.f32 %v2577, %v2595
    %v2600 = vmul.f32 %v2563, %v2578
    %v2601 = vmul.f32 %v2565, %v2579
    %v2602 = vadd.f32 %v2598, %v2600
    %v2603 = vadd.f32 %v2599, %v2601
    %v2604 = vtanh.pop %v2602
    %v2605 = vtanh.pop %v2603
    %v2606 = vmul.f32 %v2589, %v2604
    %v2607 = vmul.f32 %v2591, %v2605
    %v2610 = vrot.slane %v2552, 3
    %v2611 = vrot.slane %v2553, 3
    %2614 = vst [vmem:[#allocation2 + $0x3] sm:$0x1] %v2610
    %2615 = vst [vmem:[#allocation2 + $0x13] sm:$0x1] %v2611
    %v2618 = vrot.slane %v2606, 4
    %v2619 = vrot.slane %v2607, 4
    %2622 = vst [vmem:[#allocation2 + $0xc] sm:$0x1] %v2618
    %2623 = vst [vmem:[#allocation2 + $0x1c] sm:$0x1] %v2619
    %v2624 = vrot.slane %v2553, 2
    %v2625 = vsel %vm1219, %v2624, %v2610
    %2627 = vmatprep.subr.mxu0 %v647
    %2628 = vmatpush1.msra.mxu0 %v646
    %2629 = vmatprep.subr.mxu0 %v651
    %2630 = vmatpush1.msra.mxu0 %v650
    %2631 = vmatprep.subr.mxu0 %v655
    %2632 = vmatpush1.msra.mxu0 %v654
    %2633 = vmatprep.subr.mxu0 %v659
    %2634 = vmatpush1.msra.mxu0 %v658
    %2635 = vmatprep.subr.mxu0 %v663
    %2636 = vmatpush1.msra.mxu0 %v662
    %2637 = vmatprep.subr.mxu0 %v667
    %2638 = vmatpush1.msra.mxu0 %v666
    %2639 = vmatprep.subr.mxu0 %v671
    %2640 = vmatpush1.msra.mxu0 %v670
    %2641 = vmatprep.subr.mxu0 %v675
    %2642 = vmatpush1.msra.mxu0 %v674
    %2643 = vmatprep.subr.mxu0 %v679
    %2644 = vmatpush1.msra.mxu0 %v678
    %2645 = vmatprep.subr.mxu0 %v683
    %2646 = vmatpush1.msra.mxu0 %v682
    %2647 = vmatprep.subr.mxu0 %v687
    %2648 = vmatpush1.msra.mxu0 %v686
    %2649 = vmatprep.subr.mxu0 %v691
    %2650 = vmatpush1.msra.mxu0 %v690
    %2651 = vmatprep.subr.mxu0 %v695
    %2652 = vmatpush1.msra.mxu0 %v694
    %2653 = vmatprep.subr.mxu0 %v699
    %2654 = vmatpush1.msra.mxu0 %v698
    %2655 = vmatprep.subr.mxu0 %v703
    %2656 = vmatpush1.msra.mxu0 %v702
    %2657 = vmatprep.subr.mxu0 %v707
    %2658 = vmatpush1.msra.mxu0 %v706
    %2659 = vmatprep.subr.mxu0 0.0
    %2660 = vmatpush1.msra.mxu0 0.0
    %2661 = vmatprep.subr.mxu0 0.0
    %2662 = vmatpush1.msra.mxu0 0.0
    %2663 = vmatprep.subr.mxu0 0.0
    %2664 = vmatpush1.msra.mxu0 0.0
    %2665 = vmatprep.subr.mxu0 0.0
    %2666 = vmatpush1.msra.mxu0 0.0
    %2667 = vmatprep.subr.mxu0 0.0
    %2668 = vmatpush1.msra.mxu0 0.0
    %2669 = vmatprep.subr.mxu0 0.0
    %2670 = vmatpush1.msra.mxu0 0.0
    %2671 = vmatprep.subr.mxu0 0.0
    %2672 = vmatpush1.msra.mxu0 0.0
    %2673 = vmatprep.subr.mxu0 0.0
    %2674 = vmatpush1.msra.mxu0 0.0
    %2675 = vmatprep.subr.mxu0 0.0
    %2676 = vmatpush1.msra.mxu0 0.0
    %2677 = vmatprep.subr.mxu0 0.0
    %2678 = vmatpush1.msra.mxu0 0.0
    %2679 = vmatprep.subr.mxu0 0.0
    %2680 = vmatpush1.msra.mxu0 0.0
    %2681 = vmatprep.subr.mxu0 0.0
    %2682 = vmatpush1.msra.mxu0 0.0
    %2683 = vmatprep.subr.mxu0 0.0
    %2684 = vmatpush1.msra.mxu0 0.0
    %2685 = vmatprep.subr.mxu0 0.0
    %2686 = vmatpush1.msra.mxu0 0.0
    %2687 = vmatprep.subr.mxu0 0.0
    %2688 = vmatpush1.msra.mxu0 0.0
    %2689 = vmatprep.subr.mxu0 0.0
    %2690 = vmatpush1.msra.mxu0 0.0
    %2691 = vmatprep.mubr.f32.mxu0 0.0
    %2692 = vmatmul.mubr.f32.gmra.mrb[0].mxu0 %v2625
    %v2693 = vpop.f32.mrb[0].mxu0
    %v2694 = vadd.f32 0.0, %v2693
    %v2695 = vpop.f32.mrb[0].mxu0
    %v2696 = vadd.f32 0.0, %v2695
    %2697 = vdwg.mxu0
    %2698 = vmatprep.subr.mxu0 %v649
    %2699 = vmatpush1.msra.mxu0 %v648
    %2700 = vmatprep.subr.mxu0 %v653
    %2701 = vmatpush1.msra.mxu0 %v652
    %2702 = vmatprep.subr.mxu0 %v657
    %2703 = vmatpush1.msra.mxu0 %v656
    %2704 = vmatprep.subr.mxu0 %v661
    %2705 = vmatpush1.msra.mxu0 %v660
    %2706 = vmatprep.subr.mxu0 %v665
    %2707 = vmatpush1.msra.mxu0 %v664
    %2708 = vmatprep.subr.mxu0 %v669
    %2709 = vmatpush1.msra.mxu0 %v668
    %2710 = vmatprep.subr.mxu0 %v673
    %2711 = vmatpush1.msra.mxu0 %v672
    %2712 = vmatprep.subr.mxu0 %v677
    %2713 = vmatpush1.msra.mxu0 %v676
    %2714 = vmatprep.subr.mxu0 %v681
    %2715 = vmatpush1.msra.mxu0 %v680
    %2716 = vmatprep.subr.mxu0 %v685
    %2717 = vmatpush1.msra.mxu0 %v684
    %2718 = vmatprep.subr.mxu0 %v689
    %2719 = vmatpush1.msra.mxu0 %v688
    %2720 = vmatprep.subr.mxu0 %v693
    %2721 = vmatpush1.msra.mxu0 %v692
    %2722 = vmatprep.subr.mxu0 %v697
    %2723 = vmatpush1.msra.mxu0 %v696
    %2724 = vmatprep.subr.mxu0 %v701
    %2725 = vmatpush1.msra.mxu0 %v700
    %2726 = vmatprep.subr.mxu0 %v705
    %2727 = vmatpush1.msra.mxu0 %v704
    %2728 = vmatprep.subr.mxu0 %v709
    %2729 = vmatpush1.msra.mxu0 %v708
    %2730 = vmatprep.subr.mxu0 0.0
    %2731 = vmatpush1.msra.mxu0 0.0
    %2732 = vmatprep.subr.mxu0 0.0
    %2733 = vmatpush1.msra.mxu0 0.0
    %2734 = vmatprep.subr.mxu0 0.0
    %2735 = vmatpush1.msra.mxu0 0.0
    %2736 = vmatprep.subr.mxu0 0.0
    %2737 = vmatpush1.msra.mxu0 0.0
    %2738 = vmatprep.subr.mxu0 0.0
    %2739 = vmatpush1.msra.mxu0 0.0
    %2740 = vmatprep.subr.mxu0 0.0
    %2741 = vmatpush1.msra.mxu0 0.0
    %2742 = vmatprep.subr.mxu0 0.0
    %2743 = vmatpush1.msra.mxu0 0.0
    %2744 = vmatprep.subr.mxu0 0.0
    %2745 = vmatpush1.msra.mxu0 0.0
    %2746 = vmatprep.subr.mxu0 0.0
    %2747 = vmatpush1.msra.mxu0 0.0
    %2748 = vmatprep.subr.mxu0 0.0
    %2749 = vmatpush1.msra.mxu0 0.0
    %2750 = vmatprep.subr.mxu0 0.0
    %2751 = vmatpush1.msra.mxu0 0.0
    %2752 = vmatprep.subr.mxu0 0.0
    %2753 = vmatpush1.msra.mxu0 0.0
    %2754 = vmatprep.subr.mxu0 0.0
    %2755 = vmatpush1.msra.mxu0 0.0
    %2756 = vmatprep.subr.mxu0 0.0
    %2757 = vmatpush1.msra.mxu0 0.0
    %2758 = vmatprep.subr.mxu0 0.0
    %2759 = vmatpush1.msra.mxu0 0.0
    %2760 = vmatprep.subr.mxu0 0.0
    %2761 = vmatpush1.msra.mxu0 0.0
    %2762 = vmatprep.mubr.f32.mxu0 0.0
    %2763 = vmatmul.mubr.f32.gmra.mrb[0].mxu0 %v2625
    %v2764 = vpop.f32.mrb[0].mxu0
    %v2765 = vadd.f32 0.0, %v2764
    %v2766 = vpop.f32.mrb[0].mxu0
    %v2767 = vadd.f32 0.0, %v2766
    %2768 = vdwg.mxu0
    %v2773 = vrot.slane %v2694, 4
    %v2774 = vrot.slane %v2696, 4
    %v2775 = vrot.slane %v2765, 4
    %v2776 = vrot.slane %v2767, 4
    %v2777 = vrot.slane %v2694, 5
    %v2778 = vrot.slane %v2696, 5
    %v2779 = vrot.slane %v2765, 5
    %v2780 = vrot.slane %v2767, 5
    %v2789 = vadd.f32 %v405, %v2773
    %v2790 = vadd.f32 %v407, %v2774
    %v2791 = vadd.f32 %v482, %v2775
    %v2792 = vadd.f32 %v484, %v2776
    %v2793 = vadd.f32 %v411, %v2777
    %v2794 = vadd.f32 %v413, %v2778
    %v2795 = vadd.f32 %v488, %v2779
    %v2796 = vadd.f32 %v490, %v2780
    %v2797 = vrot.slane %v2607, 3
    %v2798 = vsel %vm1219, %v2797, %v2618
    %2800 = vmatprep.subr.mxu0 %v711
    %2801 = vmatpush1.msra.mxu0 %v710
    %2802 = vmatprep.subr.mxu0 %v715
    %2803 = vmatpush1.msra.mxu0 %v714
    %2804 = vmatprep.subr.mxu0 %v719
    %2805 = vmatpush1.msra.mxu0 %v718
    %2806 = vmatprep.subr.mxu0 %v723
    %2807 = vmatpush1.msra.mxu0 %v722
    %2808 = vmatprep.subr.mxu0 %v727
    %2809 = vmatpush1.msra.mxu0 %v726
    %2810 = vmatprep.subr.mxu0 %v731
    %2811 = vmatpush1.msra.mxu0 %v730
    %2812 = vmatprep.subr.mxu0 %v735
    %2813 = vmatpush1.msra.mxu0 %v734
    %2814 = vmatprep.subr.mxu0 %v739
    %2815 = vmatpush1.msra.mxu0 %v738
    %2816 = vmatprep.subr.mxu0 %v743
    %2817 = vmatpush1.msra.mxu0 %v742
    %2818 = vmatprep.subr.mxu0 %v747
    %2819 = vmatpush1.msra.mxu0 %v746
    %2820 = vmatprep.subr.mxu0 %v751
    %2821 = vmatpush1.msra.mxu0 %v750
    %2822 = vmatprep.subr.mxu0 %v755
    %2823 = vmatpush1.msra.mxu0 %v754
    %2824 = vmatprep.subr.mxu0 %v759
    %2825 = vmatpush1.msra.mxu0 %v758
    %2826 = vmatprep.subr.mxu0 %v763
    %2827 = vmatpush1.msra.mxu0 %v762
    %2828 = vmatprep.subr.mxu0 %v767
    %2829 = vmatpush1.msra.mxu0 %v766
    %2830 = vmatprep.subr.mxu0 %v771
    %2831 = vmatpush1.msra.mxu0 %v770
    %2832 = vmatprep.subr.mxu0 0.0
    %2833 = vmatpush1.msra.mxu0 0.0
    %2834 = vmatprep.subr.mxu0 0.0
    %2835 = vmatpush1.msra.mxu0 0.0
    %2836 = vmatprep.subr.mxu0 0.0
    %2837 = vmatpush1.msra.mxu0 0.0
    %2838 = vmatprep.subr.mxu0 0.0
    %2839 = vmatpush1.msra.mxu0 0.0
    %2840 = vmatprep.subr.mxu0 0.0
    %2841 = vmatpush1.msra.mxu0 0.0
    %2842 = vmatprep.subr.mxu0 0.0
    %2843 = vmatpush1.msra.mxu0 0.0
    %2844 = vmatprep.subr.mxu0 0.0
    %2845 = vmatpush1.msra.mxu0 0.0
    %2846 = vmatprep.subr.mxu0 0.0
    %2847 = vmatpush1.msra.mxu0 0.0
    %2848 = vmatprep.subr.mxu0 0.0
    %2849 = vmatpush1.msra.mxu0 0.0
    %2850 = vmatprep.subr.mxu0 0.0
    %2851 = vmatpush1.msra.mxu0 0.0
    %2852 = vmatprep.subr.mxu0 0.0
    %2853 = vmatpush1.msra.mxu0 0.0
    %2854 = vmatprep.subr.mxu0 0.0
    %2855 = vmatpush1.msra.mxu0 0.0
    %2856 = vmatprep.subr.mxu0 0.0
    %2857 = vmatpush1.msra.mxu0 0.0
    %2858 = vmatprep.subr.mxu0 0.0
    %2859 = vmatpush1.msra.mxu0 0.0
    %2860 = vmatprep.subr.mxu0 0.0
    %2861 = vmatpush1.msra.mxu0 0.0
    %2862 = vmatprep.subr.mxu0 0.0
    %2863 = vmatpush1.msra.mxu0 0.0
    %2864 = vmatprep.mubr.f32.mxu0 0.0
    %2865 = vmatmul.mubr.f32.gmra.mrb[0].mxu0 %v2798
    %v2866 = vpop.f32.mrb[0].mxu0
    %v2867 = vadd.f32 0.0, %v2866
    %v2868 = vpop.f32.mrb[0].mxu0
    %v2869 = vadd.f32 0.0, %v2868
    %2870 = vdwg.mxu0
    %2871 = vmatprep.subr.mxu0 %v713
    %2872 = vmatpush1.msra.mxu0 %v712
    %2873 = vmatprep.subr.mxu0 %v717
    %2874 = vmatpush1.msra.mxu0 %v716
    %2875 = vmatprep.subr.mxu0 %v721
    %2876 = vmatpush1.msra.mxu0 %v720
    %2877 = vmatprep.subr.mxu0 %v725
    %2878 = vmatpush1.msra.mxu0 %v724
    %2879 = vmatprep.subr.mxu0 %v729
    %2880 = vmatpush1.msra.mxu0 %v728
    %2881 = vmatprep.subr.mxu0 %v733
    %2882 = vmatpush1.msra.mxu0 %v732
    %2883 = vmatprep.subr.mxu0 %v737
    %2884 = vmatpush1.msra.mxu0 %v736
    %2885 = vmatprep.subr.mxu0 %v741
    %2886 = vmatpush1.msra.mxu0 %v740
    %2887 = vmatprep.subr.mxu0 %v745
    %2888 = vmatpush1.msra.mxu0 %v744
    %2889 = vmatprep.subr.mxu0 %v749
    %2890 = vmatpush1.msra.mxu0 %v748
    %2891 = vmatprep.subr.mxu0 %v753
    %2892 = vmatpush1.msra.mxu0 %v752
    %2893 = vmatprep.subr.mxu0 %v757
    %2894 = vmatpush1.msra.mxu0 %v756
    %2895 = vmatprep.subr.mxu0 %v761
    %2896 = vmatpush1.msra.mxu0 %v760
    %2897 = vmatprep.subr.mxu0 %v765
    %2898 = vmatpush1.msra.mxu0 %v764
    %2899 = vmatprep.subr.mxu0 %v769
    %2900 = vmatpush1.msra.mxu0 %v768
    %2901 = vmatprep.subr.mxu0 %v773
    %2902 = vmatpush1.msra.mxu0 %v772
    %2903 = vmatprep.subr.mxu0 0.0
    %2904 = vmatpush1.msra.mxu0 0.0
    %2905 = vmatprep.subr.mxu0 0.0
    %2906 = vmatpush1.msra.mxu0 0.0
    %2907 = vmatprep.subr.mxu0 0.0
    %2908 = vmatpush1.msra.mxu0 0.0
    %2909 = vmatprep.subr.mxu0 0.0
    %2910 = vmatpush1.msra.mxu0 0.0
    %2911 = vmatprep.subr.mxu0 0.0
    %2912 = vmatpush1.msra.mxu0 0.0
    %2913 = vmatprep.subr.mxu0 0.0
    %2914 = vmatpush1.msra.mxu0 0.0
    %2915 = vmatprep.subr.mxu0 0.0
    %2916 = vmatpush1.msra.mxu0 0.0
    %2917 = vmatprep.subr.mxu0 0.0
    %2918 = vmatpush1.msra.mxu0 0.0
    %2919 = vmatprep.subr.mxu0 0.0
    %2920 = vmatpush1.msra.mxu0 0.0
    %2921 = vmatprep.subr.mxu0 0.0
    %2922 = vmatpush1.msra.mxu0 0.0
    %2923 = vmatprep.subr.mxu0 0.0
    %2924 = vmatpush1.msra.mxu0 0.0
    %2925 = vmatprep.subr.mxu0 0.0
    %2926 = vmatpush1.msra.mxu0 0.0
    %2927 = vmatprep.subr.mxu0 0.0
    %2928 = vmatpush1.msra.mxu0 0.0
    %2929 = vmatprep.subr.mxu0 0.0
    %2930 = vmatpush1.msra.mxu0 0.0
    %2931 = vmatprep.subr.mxu0 0.0
    %2932 = vmatpush1.msra.mxu0 0.0
    %2933 = vmatprep.subr.mxu0 0.0
    %2934 = vmatpush1.msra.mxu0 0.0
    %2935 = vmatprep.mubr.f32.mxu0 0.0
    %2936 = vmatmul.mubr.f32.gmra.mrb[0].mxu0 %v2798
    %v2937 = vpop.f32.mrb[0].mxu0
    %v2938 = vadd.f32 0.0, %v2937
    %v2939 = vpop.f32.mrb[0].mxu0
    %v2940 = vadd.f32 0.0, %v2939
    %2941 = vdwg.mxu0
    %v2946 = vrot.slane %v2867, 5
    %v2947 = vrot.slane %v2869, 5
    %v2948 = vrot.slane %v2938, 5
    %v2949 = vrot.slane %v2940, 5
    %v2950 = vrot.slane %v2867, 6
    %v2951 = vrot.slane %v2869, 6
    %v2952 = vrot.slane %v2938, 6
    %v2953 = vrot.slane %v2940, 6
    %v2962 = vadd.f32 %v559, %v2946
    %v2963 = vadd.f32 %v561, %v2947
    %v2964 = vadd.f32 %v636, %v2948
    %v2965 = vadd.f32 %v638, %v2949
    %v2966 = vadd.f32 %v565, %v2950
    %v2967 = vadd.f32 %v567, %v2951
    %v2968 = vadd.f32 %v642, %v2952
    %v2969 = vadd.f32 %v644, %v2953
    %v2970 = vxor.u32 %v2789, 2147483648
    %v2971 = vxor.u32 %v2793, 2147483648
    %v2972 = vmul.f32 %v2970, 1.442695
    %v2973 = vpow.pop %v2972
    %v2974 = vmul.f32 %v2971, 1.442695
    %v2975 = vpow.pop %v2974
    %v2976 = vadd.f32 %v2973, 1.0
    %v2977 = vadd.f32 %v2975, 1.0
    %v2978 = vrcp.pop %v2976
    %v2979 = vmul.f32 1.0, %v2978
    %v2980 = vrcp.pop %v2977
    %v2981 = vmul.f32 1.0, %v2980
    %v2982 = vxor.u32 %v2790, 2147483648
    %v2983 = vxor.u32 %v2794, 2147483648
    %v2984 = vmul.f32 %v2982, 1.442695
    %v2985 = vpow.pop %v2984
    %v2986 = vmul.f32 %v2983, 1.442695
    %v2987 = vpow.pop %v2986
    %v2988 = vadd.f32 %v2985, 1.0
    %v2989 = vadd.f32 %v2987, 1.0
    %v2990 = vrcp.pop %v2988
    %v2991 = vmul.f32 1.0, %v2990
    %v2992 = vrcp.pop %v2989
    %v2993 = vmul.f32 1.0, %v2992
    %v2994 = vtanh.pop %v2791
    %v2995 = vtanh.pop %v2795
    %v2996 = vxor.u32 %v2792, 2147483648
    %v2997 = vxor.u32 %v2796, 2147483648
    %v2998 = vmul.f32 %v2996, 1.442695
    %v2999 = vpow.pop %v2998
    %v3000 = vmul.f32 %v2997, 1.442695
    %v3001 = vpow.pop %v3000
    %v3002 = vadd.f32 %v2999, 1.0
    %v3003 = vadd.f32 %v3001, 1.0
    %v3004 = vrcp.pop %v3002
    %v3005 = vmul.f32 1.0, %v3004
    %v3006 = vrcp.pop %v3003
    %v3007 = vmul.f32 1.0, %v3006
    %v3010 = vrot.slane %v2548, 7
    %v3011 = vrot.slane %v2549, 7
    %v3014 = vmul.f32 %v2991, %v3010
    %v3015 = vmul.f32 %v2993, %v3011
    %v3016 = vmul.f32 %v2979, %v2994
    %v3017 = vmul.f32 %v2981, %v2995
    %v3018 = vadd.f32 %v3014, %v3016
    %v3019 = vadd.f32 %v3015, %v3017
    %v3020 = vtanh.pop %v3018
    %v3021 = vtanh.pop %v3019
    %v3022 = vmul.f32 %v3005, %v3020
    %v3023 = vmul.f32 %v3007, %v3021
    %v3024 = vxor.u32 %v2962, 2147483648
    %v3025 = vxor.u32 %v2966, 2147483648
    %v3026 = vmul.f32 %v3024, 1.442695
    %v3027 = vpow.pop %v3026
    %v3028 = vmul.f32 %v3025, 1.442695
    %v3029 = vpow.pop %v3028
    %v3030 = vadd.f32 %v3027, 1.0
    %v3031 = vadd.f32 %v3029, 1.0
    %v3032 = vrcp.pop %v3030
    %v3033 = vmul.f32 1.0, %v3032
    %v3034 = vrcp.pop %v3031
    %v3035 = vmul.f32 1.0, %v3034
    %v3036 = vxor.u32 %v2963, 2147483648
    %v3037 = vxor.u32 %v2967, 2147483648
    %v3038 = vmul.f32 %v3036, 1.442695
    %v3039 = vpow.pop %v3038
    %v3040 = vmul.f32 %v3037, 1.442695
    %v3041 = vpow.pop %v3040
    %v3042 = vadd.f32 %v3039, 1.0
    %v3043 = vadd.f32 %v3041, 1.0
    %v3044 = vrcp.pop %v3042
    %v3045 = vmul.f32 1.0, %v3044
    %v3046 = vrcp.pop %v3043
    %v3047 = vmul.f32 1.0, %v3046
    %v3048 = vtanh.pop %v2964
    %v3049 = vtanh.pop %v2968
    %v3050 = vxor.u32 %v2965, 2147483648
    %v3051 = vxor.u32 %v2969, 2147483648
    %v3052 = vmul.f32 %v3050, 1.442695
    %v3053 = vpow.pop %v3052
    %v3054 = vmul.f32 %v3051, 1.442695
    %v3055 = vpow.pop %v3054
    %v3056 = vadd.f32 %v3053, 1.0
    %v3057 = vadd.f32 %v3055, 1.0
    %v3058 = vrcp.pop %v3056
    %v3059 = vmul.f32 1.0, %v3058
    %v3060 = vrcp.pop %v3057
    %v3061 = vmul.f32 1.0, %v3060
    %v3064 = vrot.slane %v2602, 1
    %v3065 = vrot.slane %v2603, 1
    %v3068 = vmul.f32 %v3045, %v3064
    %v3069 = vmul.f32 %v3047, %v3065
    %v3070 = vmul.f32 %v3033, %v3048
    %v3071 = vmul.f32 %v3035, %v3049
    %v3072 = vadd.f32 %v3068, %v3070
    %v3073 = vadd.f32 %v3069, %v3071
    %v3074 = vtanh.pop %v3072
    %v3075 = vtanh.pop %v3073
    %v3076 = vmul.f32 %v3059, %v3074
    %v3077 = vmul.f32 %v3061, %v3075
    %v3080 = vrot.slane %v3022, 4
    %v3081 = vrot.slane %v3023, 4
    %3084 = vst [vmem:[#allocation2 + $0x4] sm:$0x1] %v3080
    %3085 = vst [vmem:[#allocation2 + $0x14] sm:$0x1] %v3081
    %v3088 = vrot.slane %v3076, 3
    %v3089 = vrot.slane %v3077, 3
    %3092 = vst [vmem:[#allocation2 + $0xb] sm:$0x1] %v3088
    %3093 = vst [vmem:[#allocation2 + $0x1b] sm:$0x1] %v3089
    %v3094 = vrot.slane %v3023, 3
    %v3095 = vsel %vm1219, %v3094, %v3080
    %3097 = vmatprep.subr.mxu0 %v647
    %3098 = vmatpush1.msra.mxu0 %v646
    %3099 = vmatprep.subr.mxu0 %v651
    %3100 = vmatpush1.msra.mxu0 %v650
    %3101 = vmatprep.subr.mxu0 %v655
    %3102 = vmatpush1.msra.mxu0 %v654
    %3103 = vmatprep.subr.mxu0 %v659
    %3104 = vmatpush1.msra.mxu0 %v658
    %3105 = vmatprep.subr.mxu0 %v663
    %3106 = vmatpush1.msra.mxu0 %v662
    %3107 = vmatprep.subr.mxu0 %v667
    %3108 = vmatpush1.msra.mxu0 %v666
    %3109 = vmatprep.subr.mxu0 %v671
    %3110 = vmatpush1.msra.mxu0 %v670
    %3111 = vmatprep.subr.mxu0 %v675
    %3112 = vmatpush1.msra.mxu0 %v674
    %3113 = vmatprep.subr.mxu0 %v679
    %3114 = vmatpush1.msra.mxu0 %v678
    %3115 = vmatprep.subr.mxu0 %v683
    %3116 = vmatpush1.msra.mxu0 %v682
    %3117 = vmatprep.subr.mxu0 %v687
    %3118 = vmatpush1.msra.mxu0 %v686
    %3119 = vmatprep.subr.mxu0 %v691
    %3120 = vmatpush1.msra.mxu0 %v690
    %3121 = vmatprep.subr.mxu0 %v695
    %3122 = vmatpush1.msra.mxu0 %v694
    %3123 = vmatprep.subr.mxu0 %v699
    %3124 = vmatpush1.msra.mxu0 %v698
    %3125 = vmatprep.subr.mxu0 %v703
    %3126 = vmatpush1.msra.mxu0 %v702
    %3127 = vmatprep.subr.mxu0 %v707
    %3128 = vmatpush1.msra.mxu0 %v706
    %3129 = vmatprep.subr.mxu0 0.0
    %3130 = vmatpush1.msra.mxu0 0.0
    %3131 = vmatprep.subr.mxu0 0.0
    %3132 = vmatpush1.msra.mxu0 0.0
    %3133 = vmatprep.subr.mxu0 0.0
    %3134 = vmatpush1.msra.mxu0 0.0
    %3135 = vmatprep.subr.mxu0 0.0
    %3136 = vmatpush1.msra.mxu0 0.0
    %3137 = vmatprep.subr.mxu0 0.0
    %3138 = vmatpush1.msra.mxu0 0.0
    %3139 = vmatprep.subr.mxu0 0.0
    %3140 = vmatpush1.msra.mxu0 0.0
    %3141 = vmatprep.subr.mxu0 0.0
    %3142 = vmatpush1.msra.mxu0 0.0
    %3143 = vmatprep.subr.mxu0 0.0
    %3144 = vmatpush1.msra.mxu0 0.0
    %3145 = vmatprep.subr.mxu0 0.0
    %3146 = vmatpush1.msra.mxu0 0.0
    %3147 = vmatprep.subr.mxu0 0.0
    %3148 = vmatpush1.msra.mxu0 0.0
    %3149 = vmatprep.subr.mxu0 0.0
    %3150 = vmatpush1.msra.mxu0 0.0
    %3151 = vmatprep.subr.mxu0 0.0
    %3152 = vmatpush1.msra.mxu0 0.0
    %3153 = vmatprep.subr.mxu0 0.0
    %3154 = vmatpush1.msra.mxu0 0.0
    %3155 = vmatprep.subr.mxu0 0.0
    %3156 = vmatpush1.msra.mxu0 0.0
    %3157 = vmatprep.subr.mxu0 0.0
    %3158 = vmatpush1.msra.mxu0 0.0
    %3159 = vmatprep.subr.mxu0 0.0
    %3160 = vmatpush1.msra.mxu0 0.0
    %3161 = vmatprep.mubr.f32.mxu0 0.0
    %3162 = vmatmul.mubr.f32.gmra.mrb[0].mxu0 %v3095
    %v3163 = vpop.f32.mrb[0].mxu0
    %v3164 = vadd.f32 0.0, %v3163
    %v3165 = vpop.f32.mrb[0].mxu0
    %v3166 = vadd.f32 0.0, %v3165
    %3167 = vdwg.mxu0
    %3168 = vmatprep.subr.mxu0 %v649
    %3169 = vmatpush1.msra.mxu0 %v648
    %3170 = vmatprep.subr.mxu0 %v653
    %3171 = vmatpush1.msra.mxu0 %v652
    %3172 = vmatprep.subr.mxu0 %v657
    %3173 = vmatpush1.msra.mxu0 %v656
    %3174 = vmatprep.subr.mxu0 %v661
    %3175 = vmatpush1.msra.mxu0 %v660
    %3176 = vmatprep.subr.mxu0 %v665
    %3177 = vmatpush1.msra.mxu0 %v664
    %3178 = vmatprep.subr.mxu0 %v669
    %3179 = vmatpush1.msra.mxu0 %v668
    %3180 = vmatprep.subr.mxu0 %v673
    %3181 = vmatpush1.msra.mxu0 %v672
    %3182 = vmatprep.subr.mxu0 %v677
    %3183 = vmatpush1.msra.mxu0 %v676
    %3184 = vmatprep.subr.mxu0 %v681
    %3185 = vmatpush1.msra.mxu0 %v680
    %3186 = vmatprep.subr.mxu0 %v685
    %3187 = vmatpush1.msra.mxu0 %v684
    %3188 = vmatprep.subr.mxu0 %v689
    %3189 = vmatpush1.msra.mxu0 %v688
    %3190 = vmatprep.subr.mxu0 %v693
    %3191 = vmatpush1.msra.mxu0 %v692
    %3192 = vmatprep.subr.mxu0 %v697
    %3193 = vmatpush1.msra.mxu0 %v696
    %3194 = vmatprep.subr.mxu0 %v701
    %3195 = vmatpush1.msra.mxu0 %v700
    %3196 = vmatprep.subr.mxu0 %v705
    %3197 = vmatpush1.msra.mxu0 %v704
    %3198 = vmatprep.subr.mxu0 %v709
    %3199 = vmatpush1.msra.mxu0 %v708
    %3200 = vmatprep.subr.mxu0 0.0
    %3201 = vmatpush1.msra.mxu0 0.0
    %3202 = vmatprep.subr.mxu0 0.0
    %3203 = vmatpush1.msra.mxu0 0.0
    %3204 = vmatprep.subr.mxu0 0.0
    %3205 = vmatpush1.msra.mxu0 0.0
    %3206 = vmatprep.subr.mxu0 0.0
    %3207 = vmatpush1.msra.mxu0 0.0
    %3208 = vmatprep.subr.mxu0 0.0
    %3209 = vmatpush1.msra.mxu0 0.0
    %3210 = vmatprep.subr.mxu0 0.0
    %3211 = vmatpush1.msra.mxu0 0.0
    %3212 = vmatprep.subr.mxu0 0.0
    %3213 = vmatpush1.msra.mxu0 0.0
    %3214 = vmatprep.subr.mxu0 0.0
    %3215 = vmatpush1.msra.mxu0 0.0
    %3216 = vmatprep.subr.mxu0 0.0
    %3217 = vmatpush1.msra.mxu0 0.0
    %3218 = vmatprep.subr.mxu0 0.0
    %3219 = vmatpush1.msra.mxu0 0.0
    %3220 = vmatprep.subr.mxu0 0.0
    %3221 = vmatpush1.msra.mxu0 0.0
    %3222 = vmatprep.subr.mxu0 0.0
    %3223 = vmatpush1.msra.mxu0 0.0
    %3224 = vmatprep.subr.mxu0 0.0
    %3225 = vmatpush1.msra.mxu0 0.0
    %3226 = vmatprep.subr.mxu0 0.0
    %3227 = vmatpush1.msra.mxu0 0.0
    %3228 = vmatprep.subr.mxu0 0.0
    %3229 = vmatpush1.msra.mxu0 0.0
    %3230 = vmatprep.subr.mxu0 0.0
    %3231 = vmatpush1.msra.mxu0 0.0
    %3232 = vmatprep.mubr.f32.mxu0 0.0
    %3233 = vmatmul.mubr.f32.gmra.mrb[0].mxu0 %v3095
    %v3234 = vpop.f32.mrb[0].mxu0
    %v3235 = vadd.f32 0.0, %v3234
    %v3236 = vpop.f32.mrb[0].mxu0
    %v3237 = vadd.f32 0.0, %v3236
    %3238 = vdwg.mxu0
    %v3243 = vrot.slane %v3164, 3
    %v3244 = vrot.slane %v3166, 3
    %v3245 = vrot.slane %v3235, 3
    %v3246 = vrot.slane %v3237, 3
    %v3247 = vrot.slane %v3164, 4
    %v3248 = vrot.slane %v3166, 4
    %v3249 = vrot.slane %v3235, 4
    %v3250 = vrot.slane %v3237, 4
    %v3259 = vadd.f32 %v405, %v3243
    %v3260 = vadd.f32 %v407, %v3244
    %v3261 = vadd.f32 %v482, %v3245
    %v3262 = vadd.f32 %v484, %v3246
    %v3263 = vadd.f32 %v411, %v3247
    %v3264 = vadd.f32 %v413, %v3248
    %v3265 = vadd.f32 %v488, %v3249
    %v3266 = vadd.f32 %v490, %v3250
    %v3267 = vrot.slane %v3077, 2
    %v3268 = vsel %vm1219, %v3267, %v3088
    %3270 = vmatprep.subr.mxu0 %v711
    %3271 = vmatpush1.msra.mxu0 %v710
    %3272 = vmatprep.subr.mxu0 %v715
    %3273 = vmatpush1.msra.mxu0 %v714
    %3274 = vmatprep.subr.mxu0 %v719
    %3275 = vmatpush1.msra.mxu0 %v718
    %3276 = vmatprep.subr.mxu0 %v723
    %3277 = vmatpush1.msra.mxu0 %v722
    %3278 = vmatprep.subr.mxu0 %v727
    %3279 = vmatpush1.msra.mxu0 %v726
    %3280 = vmatprep.subr.mxu0 %v731
    %3281 = vmatpush1.msra.mxu0 %v730
    %3282 = vmatprep.subr.mxu0 %v735
    %3283 = vmatpush1.msra.mxu0 %v734
    %3284 = vmatprep.subr.mxu0 %v739
    %3285 = vmatpush1.msra.mxu0 %v738
    %3286 = vmatprep.subr.mxu0 %v743
    %3287 = vmatpush1.msra.mxu0 %v742
    %3288 = vmatprep.subr.mxu0 %v747
    %3289 = vmatpush1.msra.mxu0 %v746
    %3290 = vmatprep.subr.mxu0 %v751
    %3291 = vmatpush1.msra.mxu0 %v750
    %3292 = vmatprep.subr.mxu0 %v755
    %3293 = vmatpush1.msra.mxu0 %v754
    %3294 = vmatprep.subr.mxu0 %v759
    %3295 = vmatpush1.msra.mxu0 %v758
    %3296 = vmatprep.subr.mxu0 %v763
    %3297 = vmatpush1.msra.mxu0 %v762
    %3298 = vmatprep.subr.mxu0 %v767
    %3299 = vmatpush1.msra.mxu0 %v766
    %3300 = vmatprep.subr.mxu0 %v771
    %3301 = vmatpush1.msra.mxu0 %v770
    %3302 = vmatprep.subr.mxu0 0.0
    %3303 = vmatpush1.msra.mxu0 0.0
    %3304 = vmatprep.subr.mxu0 0.0
    %3305 = vmatpush1.msra.mxu0 0.0
    %3306 = vmatprep.subr.mxu0 0.0
    %3307 = vmatpush1.msra.mxu0 0.0
    %3308 = vmatprep.subr.mxu0 0.0
    %3309 = vmatpush1.msra.mxu0 0.0
    %3310 = vmatprep.subr.mxu0 0.0
    %3311 = vmatpush1.msra.mxu0 0.0
    %3312 = vmatprep.subr.mxu0 0.0
    %3313 = vmatpush1.msra.mxu0 0.0
    %3314 = vmatprep.subr.mxu0 0.0
    %3315 = vmatpush1.msra.mxu0 0.0
    %3316 = vmatprep.subr.mxu0 0.0
    %3317 = vmatpush1.msra.mxu0 0.0
    %3318 = vmatprep.subr.mxu0 0.0
    %3319 = vmatpush1.msra.mxu0 0.0
    %3320 = vmatprep.subr.mxu0 0.0
    %3321 = vmatpush1.msra.mxu0 0.0
    %3322 = vmatprep.subr.mxu0 0.0
    %3323 = vmatpush1.msra.mxu0 0.0
    %3324 = vmatprep.subr.mxu0 0.0
    %3325 = vmatpush1.msra.mxu0 0.0
    %3326 = vmatprep.subr.mxu0 0.0
    %3327 = vmatpush1.msra.mxu0 0.0
    %3328 = vmatprep.subr.mxu0 0.0
    %3329 = vmatpush1.msra.mxu0 0.0
    %3330 = vmatprep.subr.mxu0 0.0
    %3331 = vmatpush1.msra.mxu0 0.0
    %3332 = vmatprep.subr.mxu0 0.0
    %3333 = vmatpush1.msra.mxu0 0.0
    %3334 = vmatprep.mubr.f32.mxu0 0.0
    %3335 = vmatmul.mubr.f32.gmra.mrb[0].mxu0 %v3268
    %v3336 = vpop.f32.mrb[0].mxu0
    %v3337 = vadd.f32 0.0, %v3336
    %v3338 = vpop.f32.mrb[0].mxu0
    %v3339 = vadd.f32 0.0, %v3338
    %3340 = vdwg.mxu0
    %3341 = vmatprep.subr.mxu0 %v713
    %3342 = vmatpush1.msra.mxu0 %v712
    %3343 = vmatprep.subr.mxu0 %v717
    %3344 = vmatpush1.msra.mxu0 %v716
    %3345 = vmatprep.subr.mxu0 %v721
    %3346 = vmatpush1.msra.mxu0 %v720
    %3347 = vmatprep.subr.mxu0 %v725
    %3348 = vmatpush1.msra.mxu0 %v724
    %3349 = vmatprep.subr.mxu0 %v729
    %3350 = vmatpush1.msra.mxu0 %v728
    %3351 = vmatprep.subr.mxu0 %v733
    %3352 = vmatpush1.msra.mxu0 %v732
    %3353 = vmatprep.subr.mxu0 %v737
    %3354 = vmatpush1.msra.mxu0 %v736
    %3355 = vmatprep.subr.mxu0 %v741
    %3356 = vmatpush1.msra.mxu0 %v740
    %3357 = vmatprep.subr.mxu0 %v745
    %3358 = vmatpush1.msra.mxu0 %v744
    %3359 = vmatprep.subr.mxu0 %v749
    %3360 = vmatpush1.msra.mxu0 %v748
    %3361 = vmatprep.subr.mxu0 %v753
    %3362 = vmatpush1.msra.mxu0 %v752
    %3363 = vmatprep.subr.mxu0 %v757
    %3364 = vmatpush1.msra.mxu0 %v756
    %3365 = vmatprep.subr.mxu0 %v761
    %3366 = vmatpush1.msra.mxu0 %v760
    %3367 = vmatprep.subr.mxu0 %v765
    %3368 = vmatpush1.msra.mxu0 %v764
    %3369 = vmatprep.subr.mxu0 %v769
    %3370 = vmatpush1.msra.mxu0 %v768
    %3371 = vmatprep.subr.mxu0 %v773
    %3372 = vmatpush1.msra.mxu0 %v772
    %3373 = vmatprep.subr.mxu0 0.0
    %3374 = vmatpush1.msra.mxu0 0.0
    %3375 = vmatprep.subr.mxu0 0.0
    %3376 = vmatpush1.msra.mxu0 0.0
    %3377 = vmatprep.subr.mxu0 0.0
    %3378 = vmatpush1.msra.mxu0 0.0
    %3379 = vmatprep.subr.mxu0 0.0
    %3380 = vmatpush1.msra.mxu0 0.0
    %3381 = vmatprep.subr.mxu0 0.0
    %3382 = vmatpush1.msra.mxu0 0.0
    %3383 = vmatprep.subr.mxu0 0.0
    %3384 = vmatpush1.msra.mxu0 0.0
    %3385 = vmatprep.subr.mxu0 0.0
    %3386 = vmatpush1.msra.mxu0 0.0
    %3387 = vmatprep.subr.mxu0 0.0
    %3388 = vmatpush1.msra.mxu0 0.0
    %3389 = vmatprep.subr.mxu0 0.0
    %3390 = vmatpush1.msra.mxu0 0.0
    %3391 = vmatprep.subr.mxu0 0.0
    %3392 = vmatpush1.msra.mxu0 0.0
    %3393 = vmatprep.subr.mxu0 0.0
    %3394 = vmatpush1.msra.mxu0 0.0
    %3395 = vmatprep.subr.mxu0 0.0
    %3396 = vmatpush1.msra.mxu0 0.0
    %3397 = vmatprep.subr.mxu0 0.0
    %3398 = vmatpush1.msra.mxu0 0.0
    %3399 = vmatprep.subr.mxu0 0.0
    %3400 = vmatpush1.msra.mxu0 0.0
    %3401 = vmatprep.subr.mxu0 0.0
    %3402 = vmatpush1.msra.mxu0 0.0
    %3403 = vmatprep.subr.mxu0 0.0
    %3404 = vmatpush1.msra.mxu0 0.0
    %3405 = vmatprep.mubr.f32.mxu0 0.0
    %3406 = vmatmul.mubr.f32.gmra.mrb[0].mxu0 %v3268
    %v3407 = vpop.f32.mrb[0].mxu0
    %v3408 = vadd.f32 0.0, %v3407
    %v3409 = vpop.f32.mrb[0].mxu0
    %v3410 = vadd.f32 0.0, %v3409
    %3411 = vdwg.mxu0
    %v3416 = vrot.slane %v3337, 6
    %v3417 = vrot.slane %v3339, 6
    %v3418 = vrot.slane %v3408, 6
    %v3419 = vrot.slane %v3410, 6
    %v3420 = vrot.slane %v3337, 7
    %v3421 = vrot.slane %v3339, 7
    %v3422 = vrot.slane %v3408, 7
    %v3423 = vrot.slane %v3410, 7
    %v3432 = vadd.f32 %v559, %v3416
    %v3433 = vadd.f32 %v561, %v3417
    %v3434 = vadd.f32 %v636, %v3418
    %v3435 = vadd.f32 %v638, %v3419
    %v3436 = vadd.f32 %v565, %v3420
    %v3437 = vadd.f32 %v567, %v3421
    %v3438 = vadd.f32 %v642, %v3422
    %v3439 = vadd.f32 %v644, %v3423
    %v3440 = vxor.u32 %v3259, 2147483648
    %v3441 = vxor.u32 %v3263, 2147483648
    %v3442 = vmul.f32 %v3440, 1.442695
    %v3443 = vpow.pop %v3442
    %v3444 = vmul.f32 %v3441, 1.442695
    %v3445 = vpow.pop %v3444
    %v3446 = vadd.f32 %v3443, 1.0
    %v3447 = vadd.f32 %v3445, 1.0
    %v3448 = vrcp.pop %v3446
    %v3449 = vmul.f32 1.0, %v3448
    %v3450 = vrcp.pop %v3447
    %v3451 = vmul.f32 1.0, %v3450
    %v3452 = vxor.u32 %v3260, 2147483648
    %v3453 = vxor.u32 %v3264, 2147483648
    %v3454 = vmul.f32 %v3452, 1.442695
    %v3455 = vpow.pop %v3454
    %v3456 = vmul.f32 %v3453, 1.442695
    %v3457 = vpow.pop %v3456
    %v3458 = vadd.f32 %v3455, 1.0
    %v3459 = vadd.f32 %v3457, 1.0
    %v3460 = vrcp.pop %v3458
    %v3461 = vmul.f32 1.0, %v3460
    %v3462 = vrcp.pop %v3459
    %v3463 = vmul.f32 1.0, %v3462
    %v3464 = vtanh.pop %v3261
    %v3465 = vtanh.pop %v3265
    %v3466 = vxor.u32 %v3262, 2147483648
    %v3467 = vxor.u32 %v3266, 2147483648
    %v3468 = vmul.f32 %v3466, 1.442695
    %v3469 = vpow.pop %v3468
    %v3470 = vmul.f32 %v3467, 1.442695
    %v3471 = vpow.pop %v3470
    %v3472 = vadd.f32 %v3469, 1.0
    %v3473 = vadd.f32 %v3471, 1.0
    %v3474 = vrcp.pop %v3472
    %v3475 = vmul.f32 1.0, %v3474
    %v3476 = vrcp.pop %v3473
    %v3477 = vmul.f32 1.0, %v3476
    %v3480 = vrot.slane %v3018, 7
    %v3481 = vrot.slane %v3019, 7
    %v3484 = vmul.f32 %v3461, %v3480
    %v3485 = vmul.f32 %v3463, %v3481
    %v3486 = vmul.f32 %v3449, %v3464
    %v3487 = vmul.f32 %v3451, %v3465
    %v3488 = vadd.f32 %v3484, %v3486
    %v3489 = vadd.f32 %v3485, %v3487
    %v3490 = vtanh.pop %v3488
    %v3491 = vtanh.pop %v3489
    %v3492 = vmul.f32 %v3475, %v3490
    %v3493 = vmul.f32 %v3477, %v3491
    %v3494 = vxor.u32 %v3432, 2147483648
    %v3495 = vxor.u32 %v3436, 2147483648
    %v3496 = vmul.f32 %v3494, 1.442695
    %v3497 = vpow.pop %v3496
    %v3498 = vmul.f32 %v3495, 1.442695
    %v3499 = vpow.pop %v3498
    %v3500 = vadd.f32 %v3497, 1.0
    %v3501 = vadd.f32 %v3499, 1.0
    %v3502 = vrcp.pop %v3500
    %v3503 = vmul.f32 1.0, %v3502
    %v3504 = vrcp.pop %v3501
    %v3505 = vmul.f32 1.0, %v3504
    %v3506 = vxor.u32 %v3433, 2147483648
    %v3507 = vxor.u32 %v3437, 2147483648
    %v3508 = vmul.f32 %v3506, 1.442695
    %v3509 = vpow.pop %v3508
    %v3510 = vmul.f32 %v3507, 1.442695
    %v3511 = vpow.pop %v3510
    %v3512 = vadd.f32 %v3509, 1.0
    %v3513 = vadd.f32 %v3511, 1.0
    %v3514 = vrcp.pop %v3512
    %v3515 = vmul.f32 1.0, %v3514
    %v3516 = vrcp.pop %v3513
    %v3517 = vmul.f32 1.0, %v3516
    %v3518 = vtanh.pop %v3434
    %v3519 = vtanh.pop %v3438
    %v3520 = vxor.u32 %v3435, 2147483648
    %v3521 = vxor.u32 %v3439, 2147483648
    %v3522 = vmul.f32 %v3520, 1.442695
    %v3523 = vpow.pop %v3522
    %v3524 = vmul.f32 %v3521, 1.442695
    %v3525 = vpow.pop %v3524
    %v3526 = vadd.f32 %v3523, 1.0
    %v3527 = vadd.f32 %v3525, 1.0
    %v3528 = vrcp.pop %v3526
    %v3529 = vmul.f32 1.0, %v3528
    %v3530 = vrcp.pop %v3527
    %v3531 = vmul.f32 1.0, %v3530
    %v3534 = vrot.slane %v3072, 1
    %v3535 = vrot.slane %v3073, 1
    %v3538 = vmul.f32 %v3515, %v3534
    %v3539 = vmul.f32 %v3517, %v3535
    %v3540 = vmul.f32 %v3503, %v3518
    %v3541 = vmul.f32 %v3505, %v3519
    %v3542 = vadd.f32 %v3538, %v3540
    %v3543 = vadd.f32 %v3539, %v3541
    %v3544 = vtanh.pop %v3542
    %v3545 = vtanh.pop %v3543
    %v3546 = vmul.f32 %v3529, %v3544
    %v3547 = vmul.f32 %v3531, %v3545
    %v3550 = vrot.slane %v3492, 5
    %v3551 = vrot.slane %v3493, 5
    %3554 = vst [vmem:[#allocation2 + $0x5] sm:$0x1] %v3550
    %3555 = vst [vmem:[#allocation2 + $0x15] sm:$0x1] %v3551
    %v3558 = vrot.slane %v3546, 2
    %v3559 = vrot.slane %v3547, 2
    %3562 = vst [vmem:[#allocation2 + $0xa] sm:$0x1] %v3558
    %3563 = vst [vmem:[#allocation2 + $0x1a] sm:$0x1] %v3559
    %v3564 = vrot.slane %v3493, 4
    %v3565 = vsel %vm1219, %v3564, %v3550
    %3567 = vmatprep.subr.mxu0 %v647
    %3568 = vmatpush1.msra.mxu0 %v646
    %3569 = vmatprep.subr.mxu0 %v651
    %3570 = vmatpush1.msra.mxu0 %v650
    %3571 = vmatprep.subr.mxu0 %v655
    %3572 = vmatpush1.msra.mxu0 %v654
    %3573 = vmatprep.subr.mxu0 %v659
    %3574 = vmatpush1.msra.mxu0 %v658
    %3575 = vmatprep.subr.mxu0 %v663
    %3576 = vmatpush1.msra.mxu0 %v662
    %3577 = vmatprep.subr.mxu0 %v667
    %3578 = vmatpush1.msra.mxu0 %v666
    %3579 = vmatprep.subr.mxu0 %v671
    %3580 = vmatpush1.msra.mxu0 %v670
    %3581 = vmatprep.subr.mxu0 %v675
    %3582 = vmatpush1.msra.mxu0 %v674
    %3583 = vmatprep.subr.mxu0 %v679
    %3584 = vmatpush1.msra.mxu0 %v678
    %3585 = vmatprep.subr.mxu0 %v683
    %3586 = vmatpush1.msra.mxu0 %v682
    %3587 = vmatprep.subr.mxu0 %v687
    %3588 = vmatpush1.msra.mxu0 %v686
    %3589 = vmatprep.subr.mxu0 %v691
    %3590 = vmatpush1.msra.mxu0 %v690
    %3591 = vmatprep.subr.mxu0 %v695
    %3592 = vmatpush1.msra.mxu0 %v694
    %3593 = vmatprep.subr.mxu0 %v699
    %3594 = vmatpush1.msra.mxu0 %v698
    %3595 = vmatprep.subr.mxu0 %v703
    %3596 = vmatpush1.msra.mxu0 %v702
    %3597 = vmatprep.subr.mxu0 %v707
    %3598 = vmatpush1.msra.mxu0 %v706
    %3599 = vmatprep.subr.mxu0 0.0
    %3600 = vmatpush1.msra.mxu0 0.0
    %3601 = vmatprep.subr.mxu0 0.0
    %3602 = vmatpush1.msra.mxu0 0.0
    %3603 = vmatprep.subr.mxu0 0.0
    %3604 = vmatpush1.msra.mxu0 0.0
    %3605 = vmatprep.subr.mxu0 0.0
    %3606 = vmatpush1.msra.mxu0 0.0
    %3607 = vmatprep.subr.mxu0 0.0
    %3608 = vmatpush1.msra.mxu0 0.0
    %3609 = vmatprep.subr.mxu0 0.0
    %3610 = vmatpush1.msra.mxu0 0.0
    %3611 = vmatprep.subr.mxu0 0.0
    %3612 = vmatpush1.msra.mxu0 0.0
    %3613 = vmatprep.subr.mxu0 0.0
    %3614 = vmatpush1.msra.mxu0 0.0
    %3615 = vmatprep.subr.mxu0 0.0
    %3616 = vmatpush1.msra.mxu0 0.0
    %3617 = vmatprep.subr.mxu0 0.0
    %3618 = vmatpush1.msra.mxu0 0.0
    %3619 = vmatprep.subr.mxu0 0.0
    %3620 = vmatpush1.msra.mxu0 0.0
    %3621 = vmatprep.subr.mxu0 0.0
    %3622 = vmatpush1.msra.mxu0 0.0
    %3623 = vmatprep.subr.mxu0 0.0
    %3624 = vmatpush1.msra.mxu0 0.0
    %3625 = vmatprep.subr.mxu0 0.0
    %3626 = vmatpush1.msra.mxu0 0.0
    %3627 = vmatprep.subr.mxu0 0.0
    %3628 = vmatpush1.msra.mxu0 0.0
    %3629 = vmatprep.subr.mxu0 0.0
    %3630 = vmatpush1.msra.mxu0 0.0
    %3631 = vmatprep.mubr.f32.mxu0 0.0
    %3632 = vmatmul.mubr.f32.gmra.mrb[0].mxu0 %v3565
    %v3633 = vpop.f32.mrb[0].mxu0
    %v3634 = vadd.f32 0.0, %v3633
    %v3635 = vpop.f32.mrb[0].mxu0
    %v3636 = vadd.f32 0.0, %v3635
    %3637 = vdwg.mxu0
    %3638 = vmatprep.subr.mxu0 %v649
    %3639 = vmatpush1.msra.mxu0 %v648
    %3640 = vmatprep.subr.mxu0 %v653
    %3641 = vmatpush1.msra.mxu0 %v652
    %3642 = vmatprep.subr.mxu0 %v657
    %3643 = vmatpush1.msra.mxu0 %v656
    %3644 = vmatprep.subr.mxu0 %v661
    %3645 = vmatpush1.msra.mxu0 %v660
    %3646 = vmatprep.subr.mxu0 %v665
    %3647 = vmatpush1.msra.mxu0 %v664
    %3648 = vmatprep.subr.mxu0 %v669
    %3649 = vmatpush1.msra.mxu0 %v668
    %3650 = vmatprep.subr.mxu0 %v673
    %3651 = vmatpush1.msra.mxu0 %v672
    %3652 = vmatprep.subr.mxu0 %v677
    %3653 = vmatpush1.msra.mxu0 %v676
    %3654 = vmatprep.subr.mxu0 %v681
    %3655 = vmatpush1.msra.mxu0 %v680
    %3656 = vmatprep.subr.mxu0 %v685
    %3657 = vmatpush1.msra.mxu0 %v684
    %3658 = vmatprep.subr.mxu0 %v689
    %3659 = vmatpush1.msra.mxu0 %v688
    %3660 = vmatprep.subr.mxu0 %v693
    %3661 = vmatpush1.msra.mxu0 %v692
    %3662 = vmatprep.subr.mxu0 %v697
    %3663 = vmatpush1.msra.mxu0 %v696
    %3664 = vmatprep.subr.mxu0 %v701
    %3665 = vmatpush1.msra.mxu0 %v700
    %3666 = vmatprep.subr.mxu0 %v705
    %3667 = vmatpush1.msra.mxu0 %v704
    %3668 = vmatprep.subr.mxu0 %v709
    %3669 = vmatpush1.msra.mxu0 %v708
    %3670 = vmatprep.subr.mxu0 0.0
    %3671 = vmatpush1.msra.mxu0 0.0
    %3672 = vmatprep.subr.mxu0 0.0
    %3673 = vmatpush1.msra.mxu0 0.0
    %3674 = vmatprep.subr.mxu0 0.0
    %3675 = vmatpush1.msra.mxu0 0.0
    %3676 = vmatprep.subr.mxu0 0.0
    %3677 = vmatpush1.msra.mxu0 0.0
    %3678 = vmatprep.subr.mxu0 0.0
    %3679 = vmatpush1.msra.mxu0 0.0
    %3680 = vmatprep.subr.mxu0 0.0
    %3681 = vmatpush1.msra.mxu0 0.0
    %3682 = vmatprep.subr.mxu0 0.0
    %3683 = vmatpush1.msra.mxu0 0.0
    %3684 = vmatprep.subr.mxu0 0.0
    %3685 = vmatpush1.msra.mxu0 0.0
    %3686 = vmatprep.subr.mxu0 0.0
    %3687 = vmatpush1.msra.mxu0 0.0
    %3688 = vmatprep.subr.mxu0 0.0
    %3689 = vmatpush1.msra.mxu0 0.0
    %3690 = vmatprep.subr.mxu0 0.0
    %3691 = vmatpush1.msra.mxu0 0.0
    %3692 = vmatprep.subr.mxu0 0.0
    %3693 = vmatpush1.msra.mxu0 0.0
    %3694 = vmatprep.subr.mxu0 0.0
    %3695 = vmatpush1.msra.mxu0 0.0
    %3696 = vmatprep.subr.mxu0 0.0
    %3697 = vmatpush1.msra.mxu0 0.0
    %3698 = vmatprep.subr.mxu0 0.0
    %3699 = vmatpush1.msra.mxu0 0.0
    %3700 = vmatprep.subr.mxu0 0.0
    %3701 = vmatpush1.msra.mxu0 0.0
    %3702 = vmatprep.mubr.f32.mxu0 0.0
    %3703 = vmatmul.mubr.f32.gmra.mrb[0].mxu0 %v3565
    %v3704 = vpop.f32.mrb[0].mxu0
    %v3705 = vadd.f32 0.0, %v3704
    %v3706 = vpop.f32.mrb[0].mxu0
    %v3707 = vadd.f32 0.0, %v3706
    %3708 = vdwg.mxu0
    %v3713 = vrot.slane %v3634, 2
    %v3714 = vrot.slane %v3636, 2
    %v3715 = vrot.slane %v3705, 2
    %v3716 = vrot.slane %v3707, 2
    %v3717 = vrot.slane %v3634, 3
    %v3718 = vrot.slane %v3636, 3
    %v3719 = vrot.slane %v3705, 3
    %v3720 = vrot.slane %v3707, 3
    %v3729 = vadd.f32 %v405, %v3713
    %v3730 = vadd.f32 %v407, %v3714
    %v3731 = vadd.f32 %v482, %v3715
    %v3732 = vadd.f32 %v484, %v3716
    %v3733 = vadd.f32 %v411, %v3717
    %v3734 = vadd.f32 %v413, %v3718
    %v3735 = vadd.f32 %v488, %v3719
    %v3736 = vadd.f32 %v490, %v3720
    %v3737 = vrot.slane %v3547, 1
    %v3738 = vsel %vm1219, %v3737, %v3558
    %3740 = vmatprep.subr.mxu0 %v711
    %3741 = vmatpush1.msra.mxu0 %v710
    %3742 = vmatprep.subr.mxu0 %v715
    %3743 = vmatpush1.msra.mxu0 %v714
    %3744 = vmatprep.subr.mxu0 %v719
    %3745 = vmatpush1.msra.mxu0 %v718
    %3746 = vmatprep.subr.mxu0 %v723
    %3747 = vmatpush1.msra.mxu0 %v722
    %3748 = vmatprep.subr.mxu0 %v727
    %3749 = vmatpush1.msra.mxu0 %v726
    %3750 = vmatprep.subr.mxu0 %v731
    %3751 = vmatpush1.msra.mxu0 %v730
    %3752 = vmatprep.subr.mxu0 %v735
    %3753 = vmatpush1.msra.mxu0 %v734
    %3754 = vmatprep.subr.mxu0 %v739
    %3755 = vmatpush1.msra.mxu0 %v738
    %3756 = vmatprep.subr.mxu0 %v743
    %3757 = vmatpush1.msra.mxu0 %v742
    %3758 = vmatprep.subr.mxu0 %v747
    %3759 = vmatpush1.msra.mxu0 %v746
    %3760 = vmatprep.subr.mxu0 %v751
    %3761 = vmatpush1.msra.mxu0 %v750
    %3762 = vmatprep.subr.mxu0 %v755
    %3763 = vmatpush1.msra.mxu0 %v754
    %3764 = vmatprep.subr.mxu0 %v759
    %3765 = vmatpush1.msra.mxu0 %v758
    %3766 = vmatprep.subr.mxu0 %v763
    %3767 = vmatpush1.msra.mxu0 %v762
    %3768 = vmatprep.subr.mxu0 %v767
    %3769 = vmatpush1.msra.mxu0 %v766
    %3770 = vmatprep.subr.mxu0 %v771
    %3771 = vmatpush1.msra.mxu0 %v770
    %3772 = vmatprep.subr.mxu0 0.0
    %3773 = vmatpush1.msra.mxu0 0.0
    %3774 = vmatprep.subr.mxu0 0.0
    %3775 = vmatpush1.msra.mxu0 0.0
    %3776 = vmatprep.subr.mxu0 0.0
    %3777 = vmatpush1.msra.mxu0 0.0
    %3778 = vmatprep.subr.mxu0 0.0
    %3779 = vmatpush1.msra.mxu0 0.0
    %3780 = vmatprep.subr.mxu0 0.0
    %3781 = vmatpush1.msra.mxu0 0.0
    %3782 = vmatprep.subr.mxu0 0.0
    %3783 = vmatpush1.msra.mxu0 0.0
    %3784 = vmatprep.subr.mxu0 0.0
    %3785 = vmatpush1.msra.mxu0 0.0
    %3786 = vmatprep.subr.mxu0 0.0
    %3787 = vmatpush1.msra.mxu0 0.0
    %3788 = vmatprep.subr.mxu0 0.0
    %3789 = vmatpush1.msra.mxu0 0.0
    %3790 = vmatprep.subr.mxu0 0.0
    %3791 = vmatpush1.msra.mxu0 0.0
    %3792 = vmatprep.subr.mxu0 0.0
    %3793 = vmatpush1.msra.mxu0 0.0
    %3794 = vmatprep.subr.mxu0 0.0
    %3795 = vmatpush1.msra.mxu0 0.0
    %3796 = vmatprep.subr.mxu0 0.0
    %3797 = vmatpush1.msra.mxu0 0.0
    %3798 = vmatprep.subr.mxu0 0.0
    %3799 = vmatpush1.msra.mxu0 0.0
    %3800 = vmatprep.subr.mxu0 0.0
    %3801 = vmatpush1.msra.mxu0 0.0
    %3802 = vmatprep.subr.mxu0 0.0
    %3803 = vmatpush1.msra.mxu0 0.0
    %3804 = vmatprep.mubr.f32.mxu0 0.0
    %3805 = vmatmul.mubr.f32.gmra.mrb[0].mxu0 %v3738
    %v3806 = vpop.f32.mrb[0].mxu0
    %v3807 = vadd.f32 0.0, %v3806
    %v3808 = vpop.f32.mrb[0].mxu0
    %v3809 = vadd.f32 0.0, %v3808
    %3810 = vdwg.mxu0
    %3811 = vmatprep.subr.mxu0 %v713
    %3812 = vmatpush1.msra.mxu0 %v712
    %3813 = vmatprep.subr.mxu0 %v717
    %3814 = vmatpush1.msra.mxu0 %v716
    %3815 = vmatprep.subr.mxu0 %v721
    %3816 = vmatpush1.msra.mxu0 %v720
    %3817 = vmatprep.subr.mxu0 %v725
    %3818 = vmatpush1.msra.mxu0 %v724
    %3819 = vmatprep.subr.mxu0 %v729
    %3820 = vmatpush1.msra.mxu0 %v728
    %3821 = vmatprep.subr.mxu0 %v733
    %3822 = vmatpush1.msra.mxu0 %v732
    %3823 = vmatprep.subr.mxu0 %v737
    %3824 = vmatpush1.msra.mxu0 %v736
    %3825 = vmatprep.subr.mxu0 %v741
    %3826 = vmatpush1.msra.mxu0 %v740
    %3827 = vmatprep.subr.mxu0 %v745
    %3828 = vmatpush1.msra.mxu0 %v744
    %3829 = vmatprep.subr.mxu0 %v749
    %3830 = vmatpush1.msra.mxu0 %v748
    %3831 = vmatprep.subr.mxu0 %v753
    %3832 = vmatpush1.msra.mxu0 %v752
    %3833 = vmatprep.subr.mxu0 %v757
    %3834 = vmatpush1.msra.mxu0 %v756
    %3835 = vmatprep.subr.mxu0 %v761
    %3836 = vmatpush1.msra.mxu0 %v760
    %3837 = vmatprep.subr.mxu0 %v765
    %3838 = vmatpush1.msra.mxu0 %v764
    %3839 = vmatprep.subr.mxu0 %v769
    %3840 = vmatpush1.msra.mxu0 %v768
    %3841 = vmatprep.subr.mxu0 %v773
    %3842 = vmatpush1.msra.mxu0 %v772
    %3843 = vmatprep.subr.mxu0 0.0
    %3844 = vmatpush1.msra.mxu0 0.0
    %3845 = vmatprep.subr.mxu0 0.0
    %3846 = vmatpush1.msra.mxu0 0.0
    %3847 = vmatprep.subr.mxu0 0.0
    %3848 = vmatpush1.msra.mxu0 0.0
    %3849 = vmatprep.subr.mxu0 0.0
    %3850 = vmatpush1.msra.mxu0 0.0
    %3851 = vmatprep.subr.mxu0 0.0
    %3852 = vmatpush1.msra.mxu0 0.0
    %3853 = vmatprep.subr.mxu0 0.0
    %3854 = vmatpush1.msra.mxu0 0.0
    %3855 = vmatprep.subr.mxu0 0.0
    %3856 = vmatpush1.msra.mxu0 0.0
    %3857 = vmatprep.subr.mxu0 0.0
    %3858 = vmatpush1.msra.mxu0 0.0
    %3859 = vmatprep.subr.mxu0 0.0
    %3860 = vmatpush1.msra.mxu0 0.0
    %3861 = vmatprep.subr.mxu0 0.0
    %3862 = vmatpush1.msra.mxu0 0.0
    %3863 = vmatprep.subr.mxu0 0.0
    %3864 = vmatpush1.msra.mxu0 0.0
    %3865 = vmatprep.subr.mxu0 0.0
    %3866 = vmatpush1.msra.mxu0 0.0
    %3867 = vmatprep.subr.mxu0 0.0
    %3868 = vmatpush1.msra.mxu0 0.0
    %3869 = vmatprep.subr.mxu0 0.0
    %3870 = vmatpush1.msra.mxu0 0.0
    %3871 = vmatprep.subr.mxu0 0.0
    %3872 = vmatpush1.msra.mxu0 0.0
    %3873 = vmatprep.subr.mxu0 0.0
    %3874 = vmatpush1.msra.mxu0 0.0
    %3875 = vmatprep.mubr.f32.mxu0 0.0
    %3876 = vmatmul.mubr.f32.gmra.mrb[0].mxu0 %v3738
    %v3877 = vpop.f32.mrb[0].mxu0
    %v3878 = vadd.f32 0.0, %v3877
    %v3879 = vpop.f32.mrb[0].mxu0
    %v3880 = vadd.f32 0.0, %v3879
    %3881 = vdwg.mxu0
    %v3886 = vrot.slane %v3807, 7
    %v3887 = vrot.slane %v3809, 7
    %v3888 = vrot.slane %v3878, 7
    %v3889 = vrot.slane %v3880, 7
    %v3898 = vadd.f32 %v559, %v3886
    %v3899 = vadd.f32 %v561, %v3887
    %v3900 = vadd.f32 %v636, %v3888
    %v3901 = vadd.f32 %v638, %v3889
    %v3902 = vadd.f32 %v565, %v3807
    %v3903 = vadd.f32 %v567, %v3809
    %v3904 = vadd.f32 %v642, %v3878
    %v3905 = vadd.f32 %v644, %v3880
    %v3906 = vxor.u32 %v3729, 2147483648
    %v3907 = vxor.u32 %v3733, 2147483648
    %v3908 = vmul.f32 %v3906, 1.442695
    %v3909 = vpow.pop %v3908
    %v3910 = vmul.f32 %v3907, 1.442695
    %v3911 = vpow.pop %v3910
    %v3912 = vadd.f32 %v3909, 1.0
    %v3913 = vadd.f32 %v3911, 1.0
    %v3914 = vrcp.pop %v3912
    %v3915 = vmul.f32 1.0, %v3914
    %v3916 = vrcp.pop %v3913
    %v3917 = vmul.f32 1.0, %v3916
    %v3918 = vxor.u32 %v3730, 2147483648
    %v3919 = vxor.u32 %v3734, 2147483648
    %v3920 = vmul.f32 %v3918, 1.442695
    %v3921 = vpow.pop %v3920
    %v3922 = vmul.f32 %v3919, 1.442695
    %v3923 = vpow.pop %v3922
    %v3924 = vadd.f32 %v3921, 1.0
    %v3925 = vadd.f32 %v3923, 1.0
    %v3926 = vrcp.pop %v3924
    %v3927 = vmul.f32 1.0, %v3926
    %v3928 = vrcp.pop %v3925
    %v3929 = vmul.f32 1.0, %v3928
    %v3930 = vtanh.pop %v3731
    %v3931 = vtanh.pop %v3735
    %v3932 = vxor.u32 %v3732, 2147483648
    %v3933 = vxor.u32 %v3736, 2147483648
    %v3934 = vmul.f32 %v3932, 1.442695
    %v3935 = vpow.pop %v3934
    %v3936 = vmul.f32 %v3933, 1.442695
    %v3937 = vpow.pop %v3936
    %v3938 = vadd.f32 %v3935, 1.0
    %v3939 = vadd.f32 %v3937, 1.0
    %v3940 = vrcp.pop %v3938
    %v3941 = vmul.f32 1.0, %v3940
    %v3942 = vrcp.pop %v3939
    %v3943 = vmul.f32 1.0, %v3942
    %v3946 = vrot.slane %v3488, 7
    %v3947 = vrot.slane %v3489, 7
    %v3950 = vmul.f32 %v3927, %v3946
    %v3951 = vmul.f32 %v3929, %v3947
    %v3952 = vmul.f32 %v3915, %v3930
    %v3953 = vmul.f32 %v3917, %v3931
    %v3954 = vadd.f32 %v3950, %v3952
    %v3955 = vadd.f32 %v3951, %v3953
    %v3956 = vtanh.pop %v3954
    %v3957 = vtanh.pop %v3955
    %v3958 = vmul.f32 %v3941, %v3956
    %v3959 = vmul.f32 %v3943, %v3957
    %v3960 = vxor.u32 %v3898, 2147483648
    %v3961 = vxor.u32 %v3902, 2147483648
    %v3962 = vmul.f32 %v3960, 1.442695
    %v3963 = vpow.pop %v3962
    %v3964 = vmul.f32 %v3961, 1.442695
    %v3965 = vpow.pop %v3964
    %v3966 = vadd.f32 %v3963, 1.0
    %v3967 = vadd.f32 %v3965, 1.0
    %v3968 = vrcp.pop %v3966
    %v3969 = vmul.f32 1.0, %v3968
    %v3970 = vrcp.pop %v3967
    %v3971 = vmul.f32 1.0, %v3970
    %v3972 = vxor.u32 %v3899, 2147483648
    %v3973 = vxor.u32 %v3903, 2147483648
    %v3974 = vmul.f32 %v3972, 1.442695
    %v3975 = vpow.pop %v3974
    %v3976 = vmul.f32 %v3973, 1.442695
    %v3977 = vpow.pop %v3976
    %v3978 = vadd.f32 %v3975, 1.0
    %v3979 = vadd.f32 %v3977, 1.0
    %v3980 = vrcp.pop %v3978
    %v3981 = vmul.f32 1.0, %v3980
    %v3982 = vrcp.pop %v3979
    %v3983 = vmul.f32 1.0, %v3982
    %v3984 = vtanh.pop %v3900
    %v3985 = vtanh.pop %v3904
    %v3986 = vxor.u32 %v3901, 2147483648
    %v3987 = vxor.u32 %v3905, 2147483648
    %v3988 = vmul.f32 %v3986, 1.442695
    %v3989 = vpow.pop %v3988
    %v3990 = vmul.f32 %v3987, 1.442695
    %v3991 = vpow.pop %v3990
    %v3992 = vadd.f32 %v3989, 1.0
    %v3993 = vadd.f32 %v3991, 1.0
    %v3994 = vrcp.pop %v3992
    %v3995 = vmul.f32 1.0, %v3994
    %v3996 = vrcp.pop %v3993
    %v3997 = vmul.f32 1.0, %v3996
    %v4000 = vrot.slane %v3542, 1
    %v4001 = vrot.slane %v3543, 1
    %v4004 = vmul.f32 %v3981, %v4000
    %v4005 = vmul.f32 %v3983, %v4001
    %v4006 = vmul.f32 %v3969, %v3984
    %v4007 = vmul.f32 %v3971, %v3985
    %v4008 = vadd.f32 %v4004, %v4006
    %v4009 = vadd.f32 %v4005, %v4007
    %v4010 = vtanh.pop %v4008
    %v4011 = vtanh.pop %v4009
    %v4012 = vmul.f32 %v3995, %v4010
    %v4013 = vmul.f32 %v3997, %v4011
    %v4016 = vrot.slane %v3958, 6
    %v4017 = vrot.slane %v3959, 6
    %4020 = vst [vmem:[#allocation2 + $0x6] sm:$0x1] %v4016
    %4021 = vst [vmem:[#allocation2 + $0x16] sm:$0x1] %v4017
    %v4024 = vrot.slane %v4012, 1
    %v4025 = vrot.slane %v4013, 1
    %4028 = vst [vmem:[#allocation2 + $0x9] sm:$0x1] %v4024
    %4029 = vst [vmem:[#allocation2 + $0x19] sm:$0x1] %v4025
    %v4030 = vrot.slane %v3959, 5
    %v4031 = vsel %vm1219, %v4030, %v4016
    %4033 = vmatprep.subr.mxu0 %v647
    %4034 = vmatpush1.msra.mxu0 %v646
    %4035 = vmatprep.subr.mxu0 %v651
    %4036 = vmatpush1.msra.mxu0 %v650
    %4037 = vmatprep.subr.mxu0 %v655
    %4038 = vmatpush1.msra.mxu0 %v654
    %4039 = vmatprep.subr.mxu0 %v659
    %4040 = vmatpush1.msra.mxu0 %v658
    %4041 = vmatprep.subr.mxu0 %v663
    %4042 = vmatpush1.msra.mxu0 %v662
    %4043 = vmatprep.subr.mxu0 %v667
    %4044 = vmatpush1.msra.mxu0 %v666
    %4045 = vmatprep.subr.mxu0 %v671
    %4046 = vmatpush1.msra.mxu0 %v670
    %4047 = vmatprep.subr.mxu0 %v675
    %4048 = vmatpush1.msra.mxu0 %v674
    %4049 = vmatprep.subr.mxu0 %v679
    %4050 = vmatpush1.msra.mxu0 %v678
    %4051 = vmatprep.subr.mxu0 %v683
    %4052 = vmatpush1.msra.mxu0 %v682
    %4053 = vmatprep.subr.mxu0 %v687
    %4054 = vmatpush1.msra.mxu0 %v686
    %4055 = vmatprep.subr.mxu0 %v691
    %4056 = vmatpush1.msra.mxu0 %v690
    %4057 = vmatprep.subr.mxu0 %v695
    %4058 = vmatpush1.msra.mxu0 %v694
    %4059 = vmatprep.subr.mxu0 %v699
    %4060 = vmatpush1.msra.mxu0 %v698
    %4061 = vmatprep.subr.mxu0 %v703
    %4062 = vmatpush1.msra.mxu0 %v702
    %4063 = vmatprep.subr.mxu0 %v707
    %4064 = vmatpush1.msra.mxu0 %v706
    %4065 = vmatprep.subr.mxu0 0.0
    %4066 = vmatpush1.msra.mxu0 0.0
    %4067 = vmatprep.subr.mxu0 0.0
    %4068 = vmatpush1.msra.mxu0 0.0
    %4069 = vmatprep.subr.mxu0 0.0
    %4070 = vmatpush1.msra.mxu0 0.0
    %4071 = vmatprep.subr.mxu0 0.0
    %4072 = vmatpush1.msra.mxu0 0.0
    %4073 = vmatprep.subr.mxu0 0.0
    %4074 = vmatpush1.msra.mxu0 0.0
    %4075 = vmatprep.subr.mxu0 0.0
    %4076 = vmatpush1.msra.mxu0 0.0
    %4077 = vmatprep.subr.mxu0 0.0
    %4078 = vmatpush1.msra.mxu0 0.0
    %4079 = vmatprep.subr.mxu0 0.0
    %4080 = vmatpush1.msra.mxu0 0.0
    %4081 = vmatprep.subr.mxu0 0.0
    %4082 = vmatpush1.msra.mxu0 0.0
    %4083 = vmatprep.subr.mxu0 0.0
    %4084 = vmatpush1.msra.mxu0 0.0
    %4085 = vmatprep.subr.mxu0 0.0
    %4086 = vmatpush1.msra.mxu0 0.0
    %4087 = vmatprep.subr.mxu0 0.0
    %4088 = vmatpush1.msra.mxu0 0.0
    %4089 = vmatprep.subr.mxu0 0.0
    %4090 = vmatpush1.msra.mxu0 0.0
    %4091 = vmatprep.subr.mxu0 0.0
    %4092 = vmatpush1.msra.mxu0 0.0
    %4093 = vmatprep.subr.mxu0 0.0
    %4094 = vmatpush1.msra.mxu0 0.0
    %4095 = vmatprep.subr.mxu0 0.0
    %4096 = vmatpush1.msra.mxu0 0.0
    %4097 = vmatprep.mubr.f32.mxu0 0.0
    %4098 = vmatmul.mubr.f32.gmra.mrb[0].mxu0 %v4031
    %v4099 = vpop.f32.mrb[0].mxu0
    %v4100 = vadd.f32 0.0, %v4099
    %v4101 = vpop.f32.mrb[0].mxu0
    %v4102 = vadd.f32 0.0, %v4101
    %4103 = vdwg.mxu0
    %4104 = vmatprep.subr.mxu0 %v649
    %4105 = vmatpush1.msra.mxu0 %v648
    %4106 = vmatprep.subr.mxu0 %v653
    %4107 = vmatpush1.msra.mxu0 %v652
    %4108 = vmatprep.subr.mxu0 %v657
    %4109 = vmatpush1.msra.mxu0 %v656
    %4110 = vmatprep.subr.mxu0 %v661
    %4111 = vmatpush1.msra.mxu0 %v660
    %4112 = vmatprep.subr.mxu0 %v665
    %4113 = vmatpush1.msra.mxu0 %v664
    %4114 = vmatprep.subr.mxu0 %v669
    %4115 = vmatpush1.msra.mxu0 %v668
    %4116 = vmatprep.subr.mxu0 %v673
    %4117 = vmatpush1.msra.mxu0 %v672
    %4118 = vmatprep.subr.mxu0 %v677
    %4119 = vmatpush1.msra.mxu0 %v676
    %4120 = vmatprep.subr.mxu0 %v681
    %4121 = vmatpush1.msra.mxu0 %v680
    %4122 = vmatprep.subr.mxu0 %v685
    %4123 = vmatpush1.msra.mxu0 %v684
    %4124 = vmatprep.subr.mxu0 %v689
    %4125 = vmatpush1.msra.mxu0 %v688
    %4126 = vmatprep.subr.mxu0 %v693
    %4127 = vmatpush1.msra.mxu0 %v692
    %4128 = vmatprep.subr.mxu0 %v697
    %4129 = vmatpush1.msra.mxu0 %v696
    %4130 = vmatprep.subr.mxu0 %v701
    %4131 = vmatpush1.msra.mxu0 %v700
    %4132 = vmatprep.subr.mxu0 %v705
    %4133 = vmatpush1.msra.mxu0 %v704
    %4134 = vmatprep.subr.mxu0 %v709
    %4135 = vmatpush1.msra.mxu0 %v708
    %4136 = vmatprep.subr.mxu0 0.0
    %4137 = vmatpush1.msra.mxu0 0.0
    %4138 = vmatprep.subr.mxu0 0.0
    %4139 = vmatpush1.msra.mxu0 0.0
    %4140 = vmatprep.subr.mxu0 0.0
    %4141 = vmatpush1.msra.mxu0 0.0
    %4142 = vmatprep.subr.mxu0 0.0
    %4143 = vmatpush1.msra.mxu0 0.0
    %4144 = vmatprep.subr.mxu0 0.0
    %4145 = vmatpush1.msra.mxu0 0.0
    %4146 = vmatprep.subr.mxu0 0.0
    %4147 = vmatpush1.msra.mxu0 0.0
    %4148 = vmatprep.subr.mxu0 0.0
    %4149 = vmatpush1.msra.mxu0 0.0
    %4150 = vmatprep.subr.mxu0 0.0
    %4151 = vmatpush1.msra.mxu0 0.0
    %4152 = vmatprep.subr.mxu0 0.0
    %4153 = vmatpush1.msra.mxu0 0.0
    %4154 = vmatprep.subr.mxu0 0.0
    %4155 = vmatpush1.msra.mxu0 0.0
    %4156 = vmatprep.subr.mxu0 0.0
    %4157 = vmatpush1.msra.mxu0 0.0
    %4158 = vmatprep.subr.mxu0 0.0
    %4159 = vmatpush1.msra.mxu0 0.0
    %4160 = vmatprep.subr.mxu0 0.0
    %4161 = vmatpush1.msra.mxu0 0.0
    %4162 = vmatprep.subr.mxu0 0.0
    %4163 = vmatpush1.msra.mxu0 0.0
    %4164 = vmatprep.subr.mxu0 0.0
    %4165 = vmatpush1.msra.mxu0 0.0
    %4166 = vmatprep.subr.mxu0 0.0
    %4167 = vmatpush1.msra.mxu0 0.0
    %4168 = vmatprep.mubr.f32.mxu0 0.0
    %4169 = vmatmul.mubr.f32.gmra.mrb[0].mxu0 %v4031
    %v4170 = vpop.f32.mrb[0].mxu0
    %v4171 = vadd.f32 0.0, %v4170
    %v4172 = vpop.f32.mrb[0].mxu0
    %v4173 = vadd.f32 0.0, %v4172
    %4174 = vdwg.mxu0
    %v4179 = vrot.slane %v4100, 1
    %v4180 = vrot.slane %v4102, 1
    %v4181 = vrot.slane %v4171, 1
    %v4182 = vrot.slane %v4173, 1
    %v4183 = vrot.slane %v4100, 2
    %v4184 = vrot.slane %v4102, 2
    %v4185 = vrot.slane %v4171, 2
    %v4186 = vrot.slane %v4173, 2
    %v4195 = vadd.f32 %v405, %v4179
    %v4196 = vadd.f32 %v407, %v4180
    %v4197 = vadd.f32 %v482, %v4181
    %v4198 = vadd.f32 %v484, %v4182
    %v4199 = vadd.f32 %v411, %v4183
    %v4200 = vadd.f32 %v413, %v4184
    %v4201 = vadd.f32 %v488, %v4185
    %v4202 = vadd.f32 %v490, %v4186
    %v4203 = vsel %vm1219, %v4013, %v4024
    %4205 = vmatprep.subr.mxu0 %v711
    %4206 = vmatpush1.msra.mxu0 %v710
    %4207 = vmatprep.subr.mxu0 %v715
    %4208 = vmatpush1.msra.mxu0 %v714
    %4209 = vmatprep.subr.mxu0 %v719
    %4210 = vmatpush1.msra.mxu0 %v718
    %4211 = vmatprep.subr.mxu0 %v723
    %4212 = vmatpush1.msra.mxu0 %v722
    %4213 = vmatprep.subr.mxu0 %v727
    %4214 = vmatpush1.msra.mxu0 %v726
    %4215 = vmatprep.subr.mxu0 %v731
    %4216 = vmatpush1.msra.mxu0 %v730
    %4217 = vmatprep.subr.mxu0 %v735
    %4218 = vmatpush1.msra.mxu0 %v734
    %4219 = vmatprep.subr.mxu0 %v739
    %4220 = vmatpush1.msra.mxu0 %v738
    %4221 = vmatprep.subr.mxu0 %v743
    %4222 = vmatpush1.msra.mxu0 %v742
    %4223 = vmatprep.subr.mxu0 %v747
    %4224 = vmatpush1.msra.mxu0 %v746
    %4225 = vmatprep.subr.mxu0 %v751
    %4226 = vmatpush1.msra.mxu0 %v750
    %4227 = vmatprep.subr.mxu0 %v755
    %4228 = vmatpush1.msra.mxu0 %v754
    %4229 = vmatprep.subr.mxu0 %v759
    %4230 = vmatpush1.msra.mxu0 %v758
    %4231 = vmatprep.subr.mxu0 %v763
    %4232 = vmatpush1.msra.mxu0 %v762
    %4233 = vmatprep.subr.mxu0 %v767
    %4234 = vmatpush1.msra.mxu0 %v766
    %4235 = vmatprep.subr.mxu0 %v771
    %4236 = vmatpush1.msra.mxu0 %v770
    %4237 = vmatprep.subr.mxu0 0.0
    %4238 = vmatpush1.msra.mxu0 0.0
    %4239 = vmatprep.subr.mxu0 0.0
    %4240 = vmatpush1.msra.mxu0 0.0
    %4241 = vmatprep.subr.mxu0 0.0
    %4242 = vmatpush1.msra.mxu0 0.0
    %4243 = vmatprep.subr.mxu0 0.0
    %4244 = vmatpush1.msra.mxu0 0.0
    %4245 = vmatprep.subr.mxu0 0.0
    %4246 = vmatpush1.msra.mxu0 0.0
    %4247 = vmatprep.subr.mxu0 0.0
    %4248 = vmatpush1.msra.mxu0 0.0
    %4249 = vmatprep.subr.mxu0 0.0
    %4250 = vmatpush1.msra.mxu0 0.0
    %4251 = vmatprep.subr.mxu0 0.0
    %4252 = vmatpush1.msra.mxu0 0.0
    %4253 = vmatprep.subr.mxu0 0.0
    %4254 = vmatpush1.msra.mxu0 0.0
    %4255 = vmatprep.subr.mxu0 0.0
    %4256 = vmatpush1.msra.mxu0 0.0
    %4257 = vmatprep.subr.mxu0 0.0
    %4258 = vmatpush1.msra.mxu0 0.0
    %4259 = vmatprep.subr.mxu0 0.0
    %4260 = vmatpush1.msra.mxu0 0.0
    %4261 = vmatprep.subr.mxu0 0.0
    %4262 = vmatpush1.msra.mxu0 0.0
    %4263 = vmatprep.subr.mxu0 0.0
    %4264 = vmatpush1.msra.mxu0 0.0
    %4265 = vmatprep.subr.mxu0 0.0
    %4266 = vmatpush1.msra.mxu0 0.0
    %4267 = vmatprep.subr.mxu0 0.0
    %4268 = vmatpush1.msra.mxu0 0.0
    %4269 = vmatprep.mubr.f32.mxu0 0.0
    %4270 = vmatmul.mubr.f32.gmra.mrb[0].mxu0 %v4203
    %v4271 = vpop.f32.mrb[0].mxu0
    %v4272 = vadd.f32 0.0, %v4271
    %v4273 = vpop.f32.mrb[0].mxu0
    %v4274 = vadd.f32 0.0, %v4273
    %4275 = vdwg.mxu0
    %4276 = vmatprep.subr.mxu0 %v713
    %4277 = vmatpush1.msra.mxu0 %v712
    %4278 = vmatprep.subr.mxu0 %v717
    %4279 = vmatpush1.msra.mxu0 %v716
    %4280 = vmatprep.subr.mxu0 %v721
    %4281 = vmatpush1.msra.mxu0 %v720
    %4282 = vmatprep.subr.mxu0 %v725
    %4283 = vmatpush1.msra.mxu0 %v724
    %4284 = vmatprep.subr.mxu0 %v729
    %4285 = vmatpush1.msra.mxu0 %v728
    %4286 = vmatprep.subr.mxu0 %v733
    %4287 = vmatpush1.msra.mxu0 %v732
    %4288 = vmatprep.subr.mxu0 %v737
    %4289 = vmatpush1.msra.mxu0 %v736
    %4290 = vmatprep.subr.mxu0 %v741
    %4291 = vmatpush1.msra.mxu0 %v740
    %4292 = vmatprep.subr.mxu0 %v745
    %4293 = vmatpush1.msra.mxu0 %v744
    %4294 = vmatprep.subr.mxu0 %v749
    %4295 = vmatpush1.msra.mxu0 %v748
    %4296 = vmatprep.subr.mxu0 %v753
    %4297 = vmatpush1.msra.mxu0 %v752
    %4298 = vmatprep.subr.mxu0 %v757
    %4299 = vmatpush1.msra.mxu0 %v756
    %4300 = vmatprep.subr.mxu0 %v761
    %4301 = vmatpush1.msra.mxu0 %v760
    %4302 = vmatprep.subr.mxu0 %v765
    %4303 = vmatpush1.msra.mxu0 %v764
    %4304 = vmatprep.subr.mxu0 %v769
    %4305 = vmatpush1.msra.mxu0 %v768
    %4306 = vmatprep.subr.mxu0 %v773
    %4307 = vmatpush1.msra.mxu0 %v772
    %4308 = vmatprep.subr.mxu0 0.0
    %4309 = vmatpush1.msra.mxu0 0.0
    %4310 = vmatprep.subr.mxu0 0.0
    %4311 = vmatpush1.msra.mxu0 0.0
    %4312 = vmatprep.subr.mxu0 0.0
    %4313 = vmatpush1.msra.mxu0 0.0
    %4314 = vmatprep.subr.mxu0 0.0
    %4315 = vmatpush1.msra.mxu0 0.0
    %4316 = vmatprep.subr.mxu0 0.0
    %4317 = vmatpush1.msra.mxu0 0.0
    %4318 = vmatprep.subr.mxu0 0.0
    %4319 = vmatpush1.msra.mxu0 0.0
    %4320 = vmatprep.subr.mxu0 0.0
    %4321 = vmatpush1.msra.mxu0 0.0
    %4322 = vmatprep.subr.mxu0 0.0
    %4323 = vmatpush1.msra.mxu0 0.0
    %4324 = vmatprep.subr.mxu0 0.0
    %4325 = vmatpush1.msra.mxu0 0.0
    %4326 = vmatprep.subr.mxu0 0.0
    %4327 = vmatpush1.msra.mxu0 0.0
    %4328 = vmatprep.subr.mxu0 0.0
    %4329 = vmatpush1.msra.mxu0 0.0
    %4330 = vmatprep.subr.mxu0 0.0
    %4331 = vmatpush1.msra.mxu0 0.0
    %4332 = vmatprep.subr.mxu0 0.0
    %4333 = vmatpush1.msra.mxu0 0.0
    %4334 = vmatprep.subr.mxu0 0.0
    %4335 = vmatpush1.msra.mxu0 0.0
    %4336 = vmatprep.subr.mxu0 0.0
    %4337 = vmatpush1.msra.mxu0 0.0
    %4338 = vmatprep.subr.mxu0 0.0
    %4339 = vmatpush1.msra.mxu0 0.0
    %4340 = vmatprep.mubr.f32.mxu0 0.0
    %4341 = vmatmul.mubr.f32.gmra.mrb[0].mxu0 %v4203
    %v4342 = vpop.f32.mrb[0].mxu0
    %v4343 = vadd.f32 0.0, %v4342
    %v4344 = vpop.f32.mrb[0].mxu0
    %v4345 = vadd.f32 0.0, %v4344
    %4346 = vdwg.mxu0
    %v4351 = vrot.slane %v4272, 1
    %v4352 = vrot.slane %v4274, 1
    %v4353 = vrot.slane %v4343, 1
    %v4354 = vrot.slane %v4345, 1
    %v4363 = vadd.f32 %v559, %v4272
    %v4364 = vadd.f32 %v561, %v4274
    %v4365 = vadd.f32 %v636, %v4343
    %v4366 = vadd.f32 %v638, %v4345
    %v4367 = vadd.f32 %v565, %v4351
    %v4368 = vadd.f32 %v567, %v4352
    %v4369 = vadd.f32 %v642, %v4353
    %v4370 = vadd.f32 %v644, %v4354
    %v4371 = vxor.u32 %v4195, 2147483648
    %v4372 = vxor.u32 %v4199, 2147483648
    %v4373 = vmul.f32 %v4371, 1.442695
    %v4374 = vpow.pop %v4373
    %v4375 = vmul.f32 %v4372, 1.442695
    %v4376 = vpow.pop %v4375
    %v4377 = vadd.f32 %v4374, 1.0
    %v4378 = vadd.f32 %v4376, 1.0
    %v4379 = vrcp.pop %v4377
    %v4380 = vmul.f32 1.0, %v4379
    %v4381 = vrcp.pop %v4378
    %v4382 = vmul.f32 1.0, %v4381
    %v4383 = vxor.u32 %v4196, 2147483648
    %v4384 = vxor.u32 %v4200, 2147483648
    %v4385 = vmul.f32 %v4383, 1.442695
    %v4386 = vpow.pop %v4385
    %v4387 = vmul.f32 %v4384, 1.442695
    %v4388 = vpow.pop %v4387
    %v4389 = vadd.f32 %v4386, 1.0
    %v4390 = vadd.f32 %v4388, 1.0
    %v4391 = vrcp.pop %v4389
    %v4392 = vmul.f32 1.0, %v4391
    %v4393 = vrcp.pop %v4390
    %v4394 = vmul.f32 1.0, %v4393
    %v4395 = vtanh.pop %v4197
    %v4396 = vtanh.pop %v4201
    %v4397 = vxor.u32 %v4198, 2147483648
    %v4398 = vxor.u32 %v4202, 2147483648
    %v4399 = vmul.f32 %v4397, 1.442695
    %v4400 = vpow.pop %v4399
    %v4401 = vmul.f32 %v4398, 1.442695
    %v4402 = vpow.pop %v4401
    %v4403 = vadd.f32 %v4400, 1.0
    %v4404 = vadd.f32 %v4402, 1.0
    %v4405 = vrcp.pop %v4403
    %v4406 = vmul.f32 1.0, %v4405
    %v4407 = vrcp.pop %v4404
    %v4408 = vmul.f32 1.0, %v4407
    %v4411 = vrot.slane %v3954, 7
    %v4412 = vrot.slane %v3955, 7
    %v4415 = vmul.f32 %v4392, %v4411
    %v4416 = vmul.f32 %v4394, %v4412
    %v4417 = vmul.f32 %v4380, %v4395
    %v4418 = vmul.f32 %v4382, %v4396
    %v4419 = vadd.f32 %v4415, %v4417
    %v4420 = vadd.f32 %v4416, %v4418
    %v4421 = vtanh.pop %v4419
    %v4422 = vtanh.pop %v4420
    %v4423 = vmul.f32 %v4406, %v4421
    %v4424 = vmul.f32 %v4408, %v4422
    %v4425 = vxor.u32 %v4363, 2147483648
    %v4426 = vxor.u32 %v4367, 2147483648
    %v4427 = vmul.f32 %v4425, 1.442695
    %v4428 = vpow.pop %v4427
    %v4429 = vmul.f32 %v4426, 1.442695
    %v4430 = vpow.pop %v4429
    %v4431 = vadd.f32 %v4428, 1.0
    %v4432 = vadd.f32 %v4430, 1.0
    %v4433 = vrcp.pop %v4431
    %v4434 = vmul.f32 1.0, %v4433
    %v4435 = vrcp.pop %v4432
    %v4436 = vmul.f32 1.0, %v4435
    %v4437 = vxor.u32 %v4364, 2147483648
    %v4438 = vxor.u32 %v4368, 2147483648
    %v4439 = vmul.f32 %v4437, 1.442695
    %v4440 = vpow.pop %v4439
    %v4441 = vmul.f32 %v4438, 1.442695
    %v4442 = vpow.pop %v4441
    %v4443 = vadd.f32 %v4440, 1.0
    %v4444 = vadd.f32 %v4442, 1.0
    %v4445 = vrcp.pop %v4443
    %v4446 = vmul.f32 1.0, %v4445
    %v4447 = vrcp.pop %v4444
    %v4448 = vmul.f32 1.0, %v4447
    %v4449 = vtanh.pop %v4365
    %v4450 = vtanh.pop %v4369
    %v4451 = vxor.u32 %v4366, 2147483648
    %v4452 = vxor.u32 %v4370, 2147483648
    %v4453 = vmul.f32 %v4451, 1.442695
    %v4454 = vpow.pop %v4453
    %v4455 = vmul.f32 %v4452, 1.442695
    %v4456 = vpow.pop %v4455
    %v4457 = vadd.f32 %v4454, 1.0
    %v4458 = vadd.f32 %v4456, 1.0
    %v4459 = vrcp.pop %v4457
    %v4460 = vmul.f32 1.0, %v4459
    %v4461 = vrcp.pop %v4458
    %v4462 = vmul.f32 1.0, %v4461
    %v4465 = vrot.slane %v4008, 1
    %v4466 = vrot.slane %v4009, 1
    %v4469 = vmul.f32 %v4446, %v4465
    %v4470 = vmul.f32 %v4448, %v4466
    %v4471 = vmul.f32 %v4434, %v4449
    %v4472 = vmul.f32 %v4436, %v4450
    %v4473 = vadd.f32 %v4469, %v4471
    %v4474 = vadd.f32 %v4470, %v4472
    %v4475 = vtanh.pop %v4473
    %v4476 = vtanh.pop %v4474
    %v4477 = vmul.f32 %v4460, %v4475
    %v4478 = vmul.f32 %v4462, %v4476
    %v4481 = vrot.slane %v4423, 7
    %v4482 = vrot.slane %v4424, 7
    %4485 = vst [vmem:[#allocation2 + $0x7] sm:$0x1] %v4481
    %4486 = vst [vmem:[#allocation2 + $0x17] sm:$0x1] %v4482
    %4487 = vst [vmem:[#allocation2 + $0x8] sm:$0x1] %v4477
    %4488 = vst [vmem:[#allocation2 + $0x18] sm:$0x1] %v4478
    %v4489 = vld [vmem:[#allocation2] sm:$0xff]
    %v4490 = vld [vmem:[#allocation2 + $0x8] sm:$0xff]
    %v4491 = vld [vmem:[#allocation2 + $0x10] sm:$0xff]
    %v4492 = vld [vmem:[#allocation2 + $0x18] sm:$0xff]
    %vm4493 = vcmask 64512
    %v4495 = vsel %vm4493, %v253, 0
    %4497 = vmatprep.subr.mxu0 %v4490
    %4498 = vmatpush1.msra.mxu0 %v4489
    %4499 = vmatprep.subr.mxu0 0.0
    %4500 = vmatpush1.msra.mxu0 0.0
    %4501 = vmatprep.subr.mxu0 0.0
    %4502 = vmatpush1.msra.mxu0 0.0
    %4503 = vmatprep.subr.mxu0 0.0
    %4504 = vmatpush1.msra.mxu0 0.0
    %4505 = vmatprep.subr.mxu0 0.0
    %4506 = vmatpush1.msra.mxu0 0.0
    %4507 = vmatprep.subr.mxu0 0.0
    %4508 = vmatpush1.msra.mxu0 0.0
    %4509 = vmatprep.subr.mxu0 0.0
    %4510 = vmatpush1.msra.mxu0 0.0
    %4511 = vmatprep.subr.mxu0 0.0
    %4512 = vmatpush1.msra.mxu0 0.0
    %4513 = vmatprep.subr.mxu0 0.0
    %4514 = vmatpush1.msra.mxu0 0.0
    %4515 = vmatprep.subr.mxu0 0.0
    %4516 = vmatpush1.msra.mxu0 0.0
    %4517 = vmatprep.subr.mxu0 0.0
    %4518 = vmatpush1.msra.mxu0 0.0
    %4519 = vmatprep.subr.mxu0 0.0
    %4520 = vmatpush1.msra.mxu0 0.0
    %4521 = vmatprep.subr.mxu0 0.0
    %4522 = vmatpush1.msra.mxu0 0.0
    %4523 = vmatprep.subr.mxu0 0.0
    %4524 = vmatpush1.msra.mxu0 0.0
    %4525 = vmatprep.subr.mxu0 0.0
    %4526 = vmatpush1.msra.mxu0 0.0
    %4527 = vmatprep.subr.mxu0 0.0
    %4528 = vmatpush1.msra.mxu0 0.0
    %4529 = vmatprep.subr.mxu0 0.0
    %4530 = vmatpush1.msra.mxu0 0.0
    %4531 = vmatprep.subr.mxu0 0.0
    %4532 = vmatpush1.msra.mxu0 0.0
    %4533 = vmatprep.subr.mxu0 0.0
    %4534 = vmatpush1.msra.mxu0 0.0
    %4535 = vmatprep.subr.mxu0 0.0
    %4536 = vmatpush1.msra.mxu0 0.0
    %4537 = vmatprep.subr.mxu0 0.0
    %4538 = vmatpush1.msra.mxu0 0.0
    %4539 = vmatprep.subr.mxu0 0.0
    %4540 = vmatpush1.msra.mxu0 0.0
    %4541 = vmatprep.subr.mxu0 0.0
    %4542 = vmatpush1.msra.mxu0 0.0
    %4543 = vmatprep.subr.mxu0 0.0
    %4544 = vmatpush1.msra.mxu0 0.0
    %4545 = vmatprep.subr.mxu0 0.0
    %4546 = vmatpush1.msra.mxu0 0.0
    %4547 = vmatprep.subr.mxu0 0.0
    %4548 = vmatpush1.msra.mxu0 0.0
    %4549 = vmatprep.subr.mxu0 0.0
    %4550 = vmatpush1.msra.mxu0 0.0
    %4551 = vmatprep.subr.mxu0 0.0
    %4552 = vmatpush1.msra.mxu0 0.0
    %4553 = vmatprep.subr.mxu0 0.0
    %4554 = vmatpush1.msra.mxu0 0.0
    %4555 = vmatprep.subr.mxu0 0.0
    %4556 = vmatpush1.msra.mxu0 0.0
    %4557 = vmatprep.subr.mxu0 0.0
    %4558 = vmatpush1.msra.mxu0 0.0
    %4559 = vmatprep.subr.mxu0 0.0
    %4560 = vmatpush1.msra.mxu0 0.0
    %4561 = vmatprep.mubr.f32.mxu0 0.0
    %4562 = vmatmul.mubr.f32.gmra.mrb[0].mxu0 %v4495
    %v4563 = vpop.f32.mrb[0].mxu0
    %v4564 = vadd.f32 0.0, %v4563
    %v4565 = vpop.f32.mrb[0].mxu0
    %v4566 = vadd.f32 0.0, %v4565
    %4567 = vdwg.mxu0
    %v4569 = vsel %vm4493, %v254, 0
    %4571 = vmatprep.subr.mxu0 %v4492
    %4572 = vmatpush1.msra.mxu0 %v4491
    %4573 = vmatprep.subr.mxu0 0.0
    %4574 = vmatpush1.msra.mxu0 0.0
    %4575 = vmatprep.subr.mxu0 0.0
    %4576 = vmatpush1.msra.mxu0 0.0
    %4577 = vmatprep.subr.mxu0 0.0
    %4578 = vmatpush1.msra.mxu0 0.0
    %4579 = vmatprep.subr.mxu0 0.0
    %4580 = vmatpush1.msra.mxu0 0.0
    %4581 = vmatprep.subr.mxu0 0.0
    %4582 = vmatpush1.msra.mxu0 0.0
    %4583 = vmatprep.subr.mxu0 0.0
    %4584 = vmatpush1.msra.mxu0 0.0
    %4585 = vmatprep.subr.mxu0 0.0
    %4586 = vmatpush1.msra.mxu0 0.0
    %4587 = vmatprep.subr.mxu0 0.0
    %4588 = vmatpush1.msra.mxu0 0.0
    %4589 = vmatprep.subr.mxu0 0.0
    %4590 = vmatpush1.msra.mxu0 0.0
    %4591 = vmatprep.subr.mxu0 0.0
    %4592 = vmatpush1.msra.mxu0 0.0
    %4593 = vmatprep.subr.mxu0 0.0
    %4594 = vmatpush1.msra.mxu0 0.0
    %4595 = vmatprep.subr.mxu0 0.0
    %4596 = vmatpush1.msra.mxu0 0.0
    %4597 = vmatprep.subr.mxu0 0.0
    %4598 = vmatpush1.msra.mxu0 0.0
    %4599 = vmatprep.subr.mxu0 0.0
    %4600 = vmatpush1.msra.mxu0 0.0
    %4601 = vmatprep.subr.mxu0 0.0
    %4602 = vmatpush1.msra.mxu0 0.0
    %4603 = vmatprep.subr.mxu0 0.0
    %4604 = vmatpush1.msra.mxu0 0.0
    %4605 = vmatprep.subr.mxu0 0.0
    %4606 = vmatpush1.msra.mxu0 0.0
    %4607 = vmatprep.subr.mxu0 0.0
    %4608 = vmatpush1.msra.mxu0 0.0
    %4609 = vmatprep.subr.mxu0 0.0
    %4610 = vmatpush1.msra.mxu0 0.0
    %4611 = vmatprep.subr.mxu0 0.0
    %4612 = vmatpush1.msra.mxu0 0.0
    %4613 = vmatprep.subr.mxu0 0.0
    %4614 = vmatpush1.msra.mxu0 0.0
    %4615 = vmatprep.subr.mxu0 0.0
    %4616 = vmatpush1.msra.mxu0 0.0
    %4617 = vmatprep.subr.mxu0 0.0
    %4618 = vmatpush1.msra.mxu0 0.0
    %4619 = vmatprep.subr.mxu0 0.0
    %4620 = vmatpush1.msra.mxu0 0.0
    %4621 = vmatprep.subr.mxu0 0.0
    %4622 = vmatpush1.msra.mxu0 0.0
    %4623 = vmatprep.subr.mxu0 0.0
    %4624 = vmatpush1.msra.mxu0 0.0
    %4625 = vmatprep.subr.mxu0 0.0
    %4626 = vmatpush1.msra.mxu0 0.0
    %4627 = vmatprep.subr.mxu0 0.0
    %4628 = vmatpush1.msra.mxu0 0.0
    %4629 = vmatprep.subr.mxu0 0.0
    %4630 = vmatpush1.msra.mxu0 0.0
    %4631 = vmatprep.subr.mxu0 0.0
    %4632 = vmatpush1.msra.mxu0 0.0
    %4633 = vmatprep.subr.mxu0 0.0
    %4634 = vmatpush1.msra.mxu0 0.0
    %4635 = vmatprep.mubr.f32.mxu0 0.0
    %4636 = vmatmul.mubr.f32.gmra.mrb[0].mxu0 %v4569
    %v4637 = vpop.f32.mrb[0].mxu0
    %v4638 = vadd.f32 0.0, %v4637
    %v4639 = vpop.f32.mrb[0].mxu0
    %v4640 = vadd.f32 0.0, %v4639
    %4641 = vdwg.mxu0
    %v4642 = vld [vmem:[#allocation14] sm:$0xff]
    %v4643 = vld [vmem:[#allocation14 + $0x8] sm:$0xff]
    %v4644 = vld [vmem:[#allocation14 + $0x10] sm:$0xff]
    %v4645 = vld [vmem:[#allocation14 + $0x18] sm:$0xff]
    %v4646 = vld [vmem:[#allocation14 + $0x20] sm:$0xff]
    %v4647 = vld [vmem:[#allocation14 + $0x28] sm:$0xff]
    %v4648 = vld [vmem:[#allocation14 + $0x30] sm:$0xff]
    %v4649 = vld [vmem:[#allocation14 + $0x38] sm:$0xff]
    %v4650 = vld [vmem:[#allocation14 + $0x40] sm:$0xff]
    %v4651 = vld [vmem:[#allocation14 + $0x48] sm:$0xff]
    %v4652 = vld [vmem:[#allocation14 + $0x50] sm:$0xff]
    %v4653 = vld [vmem:[#allocation14 + $0x58] sm:$0xff]
    %v4654 = vld [vmem:[#allocation14 + $0x60] sm:$0xff]
    %v4655 = vld [vmem:[#allocation14 + $0x68] sm:$0xff]
    %v4656 = vld [vmem:[#allocation14 + $0x70] sm:$0xff]
    %v4657 = vld [vmem:[#allocation14 + $0x78] sm:$0xff]
    %v4658 = vld [vmem:[#allocation14 + $0x80] sm:$0xff]
    %v4659 = vld [vmem:[#allocation14 + $0x88] sm:$0xff]
    %v4660 = vld [vmem:[#allocation14 + $0x90] sm:$0xff]
    %v4661 = vld [vmem:[#allocation14 + $0x98] sm:$0xff]
    %v4662 = vld [vmem:[#allocation14 + $0xa0] sm:$0xff]
    %v4663 = vld [vmem:[#allocation14 + $0xa8] sm:$0xff]
    %v4664 = vld [vmem:[#allocation14 + $0xb0] sm:$0xff]
    %v4665 = vld [vmem:[#allocation14 + $0xb8] sm:$0xff]
    %v4666 = vld [vmem:[#allocation14 + $0xc0] sm:$0xff]
    %v4667 = vld [vmem:[#allocation14 + $0xc8] sm:$0xff]
    %v4668 = vld [vmem:[#allocation14 + $0xd0] sm:$0xff]
    %v4669 = vld [vmem:[#allocation14 + $0xd8] sm:$0xff]
    %v4670 = vld [vmem:[#allocation14 + $0xe0] sm:$0xff]
    %v4671 = vld [vmem:[#allocation14 + $0xe8] sm:$0xff]
    %v4672 = vld [vmem:[#allocation14 + $0xf0] sm:$0xff]
    %v4673 = vld [vmem:[#allocation14 + $0xf8] sm:$0xff]
    %v4674 = vld [vmem:[#allocation14 + $0x100] sm:$0xff]
    %v4675 = vld [vmem:[#allocation14 + $0x108] sm:$0xff]
    %v4676 = vld [vmem:[#allocation14 + $0x110] sm:$0xff]
    %v4677 = vld [vmem:[#allocation14 + $0x118] sm:$0xff]
    %v4678 = vld [vmem:[#allocation14 + $0x120] sm:$0xff]
    %v4679 = vld [vmem:[#allocation14 + $0x128] sm:$0xff]
    %v4680 = vld [vmem:[#allocation14 + $0x130] sm:$0xff]
    %v4681 = vld [vmem:[#allocation14 + $0x138] sm:$0xff]
    %v4682 = vld [vmem:[#allocation14 + $0x140] sm:$0xff]
    %v4683 = vld [vmem:[#allocation14 + $0x148] sm:$0xff]
    %v4684 = vld [vmem:[#allocation14 + $0x150] sm:$0xff]
    %v4685 = vld [vmem:[#allocation14 + $0x158] sm:$0xff]
    %v4686 = vld [vmem:[#allocation14 + $0x160] sm:$0xff]
    %v4687 = vld [vmem:[#allocation14 + $0x168] sm:$0xff]
    %v4688 = vld [vmem:[#allocation14 + $0x170] sm:$0xff]
    %v4689 = vld [vmem:[#allocation14 + $0x178] sm:$0xff]
    %v4690 = vld [vmem:[#allocation14 + $0x180] sm:$0xff]
    %v4691 = vld [vmem:[#allocation14 + $0x188] sm:$0xff]
    %v4692 = vld [vmem:[#allocation14 + $0x190] sm:$0xff]
    %v4693 = vld [vmem:[#allocation14 + $0x198] sm:$0xff]
    %v4694 = vld [vmem:[#allocation14 + $0x1a0] sm:$0xff]
    %v4695 = vld [vmem:[#allocation14 + $0x1a8] sm:$0xff]
    %v4696 = vld [vmem:[#allocation14 + $0x1b0] sm:$0xff]
    %v4697 = vld [vmem:[#allocation14 + $0x1b8] sm:$0xff]
    %v4698 = vld [vmem:[#allocation14 + $0x1c0] sm:$0xff]
    %v4699 = vld [vmem:[#allocation14 + $0x1c8] sm:$0xff]
    %v4700 = vld [vmem:[#allocation14 + $0x1d0] sm:$0xff]
    %v4701 = vld [vmem:[#allocation14 + $0x1d8] sm:$0xff]
    %v4702 = vld [vmem:[#allocation14 + $0x1e0] sm:$0xff]
    %v4703 = vld [vmem:[#allocation14 + $0x1e8] sm:$0xff]
    %v4704 = vld [vmem:[#allocation14 + $0x1f0] sm:$0xff]
    %v4705 = vld [vmem:[#allocation14 + $0x1f8] sm:$0xff]
    %v4706 = vld [vmem:[%s9] sm:$0x1]
    %v4708 = vlaneseq
    %v4709 = vshrl.u32 %v4708, 7
    %v4710 = vsub.s32 0, %v4709
    %v4711 = vrot.slane %v4706, %v4710
    %4713 = vmatprep.subr.mxu0 0.0
    %4714 = vmatpush1.msra.mxu0 %v4642
    %4715 = vmatprep.subr.mxu0 0.0
    %4716 = vmatpush1.msra.mxu0 %v4643
    %4717 = vmatprep.subr.mxu0 0.0
    %4718 = vmatpush1.msra.mxu0 %v4644
    %4719 = vmatprep.subr.mxu0 0.0
    %4720 = vmatpush1.msra.mxu0 %v4645
    %4721 = vmatprep.subr.mxu0 0.0
    %4722 = vmatpush1.msra.mxu0 %v4646
    %4723 = vmatprep.subr.mxu0 0.0
    %4724 = vmatpush1.msra.mxu0 %v4647
    %4725 = vmatprep.subr.mxu0 0.0
    %4726 = vmatpush1.msra.mxu0 %v4648
    %4727 = vmatprep.subr.mxu0 0.0
    %4728 = vmatpush1.msra.mxu0 %v4649
    %4729 = vmatprep.subr.mxu0 0.0
    %4730 = vmatpush1.msra.mxu0 %v4650
    %4731 = vmatprep.subr.mxu0 0.0
    %4732 = vmatpush1.msra.mxu0 %v4651
    %4733 = vmatprep.subr.mxu0 0.0
    %4734 = vmatpush1.msra.mxu0 %v4652
    %4735 = vmatprep.subr.mxu0 0.0
    %4736 = vmatpush1.msra.mxu0 %v4653
    %4737 = vmatprep.subr.mxu0 0.0
    %4738 = vmatpush1.msra.mxu0 %v4654
    %4739 = vmatprep.subr.mxu0 0.0
    %4740 = vmatpush1.msra.mxu0 %v4655
    %4741 = vmatprep.subr.mxu0 0.0
    %4742 = vmatpush1.msra.mxu0 %v4656
    %4743 = vmatprep.subr.mxu0 0.0
    %4744 = vmatpush1.msra.mxu0 %v4657
    %4745 = vmatprep.subr.mxu0 0.0
    %4746 = vmatpush1.msra.mxu0 %v4658
    %4747 = vmatprep.subr.mxu0 0.0
    %4748 = vmatpush1.msra.mxu0 %v4659
    %4749 = vmatprep.subr.mxu0 0.0
    %4750 = vmatpush1.msra.mxu0 %v4660
    %4751 = vmatprep.subr.mxu0 0.0
    %4752 = vmatpush1.msra.mxu0 %v4661
    %4753 = vmatprep.subr.mxu0 0.0
    %4754 = vmatpush1.msra.mxu0 %v4662
    %4755 = vmatprep.subr.mxu0 0.0
    %4756 = vmatpush1.msra.mxu0 %v4663
    %4757 = vmatprep.subr.mxu0 0.0
    %4758 = vmatpush1.msra.mxu0 %v4664
    %4759 = vmatprep.subr.mxu0 0.0
    %4760 = vmatpush1.msra.mxu0 %v4665
    %4761 = vmatprep.subr.mxu0 0.0
    %4762 = vmatpush1.msra.mxu0 %v4666
    %4763 = vmatprep.subr.mxu0 0.0
    %4764 = vmatpush1.msra.mxu0 %v4667
    %4765 = vmatprep.subr.mxu0 0.0
    %4766 = vmatpush1.msra.mxu0 %v4668
    %4767 = vmatprep.subr.mxu0 0.0
    %4768 = vmatpush1.msra.mxu0 %v4669
    %4769 = vmatprep.subr.mxu0 0.0
    %4770 = vmatpush1.msra.mxu0 %v4670
    %4771 = vmatprep.subr.mxu0 0.0
    %4772 = vmatpush1.msra.mxu0 %v4671
    %4773 = vmatprep.subr.mxu0 0.0
    %4774 = vmatpush1.msra.mxu0 %v4672
    %4775 = vmatprep.subr.mxu0 0.0
    %4776 = vmatpush1.msra.mxu0 %v4673
    %4777 = vmatprep.mubr.f32.mxu0 %v4566
    %4778 = vmatmul.mubr.f32.gmra.mrb[0].mxu0 %v4564
    %v4779 = vpop.f32.mrb[0].mxu0
    %v4780 = vadd.f32 %v4711, %v4779
    %v4781 = vpop.f32.mrb[0].mxu0
    %4782 = vmatprep.mubr.f32.mxu0 %v4640
    %4783 = vmatmul.mubr.f32.gmra.mrb[0].mxu0 %v4638
    %v4784 = vpop.f32.mrb[0].mxu0
    %v4785 = vadd.f32 %v4711, %v4784
    %v4786 = vpop.f32.mrb[0].mxu0
    %4787 = vdwg.mxu0
    %4788 = vmatprep.subr.mxu0 0.0
    %4789 = vmatpush1.msra.mxu0 %v4674
    %4790 = vmatprep.subr.mxu0 0.0
    %4791 = vmatpush1.msra.mxu0 %v4675
    %4792 = vmatprep.subr.mxu0 0.0
    %4793 = vmatpush1.msra.mxu0 %v4676
    %4794 = vmatprep.subr.mxu0 0.0
    %4795 = vmatpush1.msra.mxu0 %v4677
    %4796 = vmatprep.subr.mxu0 0.0
    %4797 = vmatpush1.msra.mxu0 %v4678
    %4798 = vmatprep.subr.mxu0 0.0
    %4799 = vmatpush1.msra.mxu0 %v4679
    %4800 = vmatprep.subr.mxu0 0.0
    %4801 = vmatpush1.msra.mxu0 %v4680
    %4802 = vmatprep.subr.mxu0 0.0
    %4803 = vmatpush1.msra.mxu0 %v4681
    %4804 = vmatprep.subr.mxu0 0.0
    %4805 = vmatpush1.msra.mxu0 %v4682
    %4806 = vmatprep.subr.mxu0 0.0
    %4807 = vmatpush1.msra.mxu0 %v4683
    %4808 = vmatprep.subr.mxu0 0.0
    %4809 = vmatpush1.msra.mxu0 %v4684
    %4810 = vmatprep.subr.mxu0 0.0
    %4811 = vmatpush1.msra.mxu0 %v4685
    %4812 = vmatprep.subr.mxu0 0.0
    %4813 = vmatpush1.msra.mxu0 %v4686
    %4814 = vmatprep.subr.mxu0 0.0
    %4815 = vmatpush1.msra.mxu0 %v4687
    %4816 = vmatprep.subr.mxu0 0.0
    %4817 = vmatpush1.msra.mxu0 %v4688
    %4818 = vmatprep.subr.mxu0 0.0
    %4819 = vmatpush1.msra.mxu0 %v4689
    %4820 = vmatprep.subr.mxu0 0.0
    %4821 = vmatpush1.msra.mxu0 %v4690
    %4822 = vmatprep.subr.mxu0 0.0
    %4823 = vmatpush1.msra.mxu0 %v4691
    %4824 = vmatprep.subr.mxu0 0.0
    %4825 = vmatpush1.msra.mxu0 %v4692
    %4826 = vmatprep.subr.mxu0 0.0
    %4827 = vmatpush1.msra.mxu0 %v4693
    %4828 = vmatprep.subr.mxu0 0.0
    %4829 = vmatpush1.msra.mxu0 %v4694
    %4830 = vmatprep.subr.mxu0 0.0
    %4831 = vmatpush1.msra.mxu0 %v4695
    %4832 = vmatprep.subr.mxu0 0.0
    %4833 = vmatpush1.msra.mxu0 %v4696
    %4834 = vmatprep.subr.mxu0 0.0
    %4835 = vmatpush1.msra.mxu0 %v4697
    %4836 = vmatprep.subr.mxu0 0.0
    %4837 = vmatpush1.msra.mxu0 %v4698
    %4838 = vmatprep.subr.mxu0 0.0
    %4839 = vmatpush1.msra.mxu0 %v4699
    %4840 = vmatprep.subr.mxu0 0.0
    %4841 = vmatpush1.msra.mxu0 %v4700
    %4842 = vmatprep.subr.mxu0 0.0
    %4843 = vmatpush1.msra.mxu0 %v4701
    %4844 = vmatprep.subr.mxu0 0.0
    %4845 = vmatpush1.msra.mxu0 %v4702
    %4846 = vmatprep.subr.mxu0 0.0
    %4847 = vmatpush1.msra.mxu0 %v4703
    %4848 = vmatprep.subr.mxu0 0.0
    %4849 = vmatpush1.msra.mxu0 %v4704
    %4850 = vmatprep.subr.mxu0 0.0
    %4851 = vmatpush1.msra.mxu0 %v4705
    %4852 = vmatprep.mubr.f32.mxu0 %v4490
    %4853 = vmatmul.mubr.f32.gmra.mrb[0].mxu0 %v4489
    %v4854 = vpop.f32.mrb[0].mxu0
    %v4855 = vadd.f32 %v4780, %v4854
    %v4856 = vpop.f32.mrb[0].mxu0
    %4857 = vmatprep.mubr.f32.mxu0 %v4492
    %4858 = vmatmul.mubr.f32.gmra.mrb[0].mxu0 %v4491
    %v4859 = vpop.f32.mrb[0].mxu0
    %v4860 = vadd.f32 %v4785, %v4859
    %v4861 = vpop.f32.mrb[0].mxu0
    %4862 = vdwg.mxu0
    %4863 = vst [vmem:[#allocation15] sm:$0xff] %v4855
    %4864 = vst [vmem:[#allocation15 + $0x8] sm:$0xff] %v4860
    // Predicated region
    $region70: #{tpu_custom_call.1} parent=1 // pred_check
      _
    $region71: #{tpu_custom_call.1} parent=1 // pred_check_branch
      %4866 = sbr.rel (0) target = $region73
    $region72: #{tpu_custom_call.1} parent=1 // pred_region
      %s4868 = ssub.s32 256, 256
      %4869 = vsyncadd [#allocation5], %s4868
      %s4870 = sshll.u32 [#allocation15], 4
      %s4871 = int_to_ptr.vmem [resolvable:$true] %s4870
      %4876 = dma.vmem_to_hbm [thread:$0]  %s4871, 256, %s10, [#allocation5], 128, 128, 8
    $region73: #{tpu_custom_call.1} parent=1 // pred_fallthru
      _
    // Predicated region
    $region74: #{tpu_custom_call.1} parent=1 // pred_check
      _
    $region75: #{tpu_custom_call.1} parent=1 // pred_check_branch
      %4878 = sbr.rel (0) target = $region77
    $region76: #{tpu_custom_call.1} parent=1 // pred_region
      %4879 = dma.done [#allocation5], 256
    $region77: #{tpu_custom_call.1} parent=1 // pred_fallthru
      _
    %4880 = vsyncpa [#allocation4], 1
    %4881 = vsyncpa [#allocation7], 1
    %4882 = vsyncpa [#allocation10], 1
    %4883 = vsyncpa [#allocation13], 1
    %4884 = vsyncpa [#allocation5], 1

</llo_original>
